<compile_context>
chip_gen: v7x
topology: tpu7x:2x2x1
jax: 0.10.0
libtpu: 0.0.40
codegen_flags: <defaults>
</compile_context>

<pallas_src>
import functools

import jax
import jax.numpy as jnp
from jax.experimental import pallas as pl
from jax.experimental.pallas import tpu as pltpu


# -----------------------------------------------------------------------------
# Fused Pallas kernel: all flows (pre -> WN -> post -> +/- , swap halves)
# -----------------------------------------------------------------------------
def _fused_flow_kernel_factory(ch, ci, K, dilation_rate, n_layers, n_flows, T,
                               left_halo, hp_len, reverse):
    """Kernel processing one batch element per grid step, all flows fused."""

    def kernel(x_ref, bias_ref, pre_w_ref, pre_b_ref, in_w_ref, rs_w_ref,
               rs_b_ref, post_w_ref, post_b_ref, out_ref, hp_ref, im_ref):
        # Zero the haloed conv scratch once per grid step; the center region is
        # fully overwritten every layer, the halos stay zero.
        hp_ref[...] = jnp.zeros((ci, hp_len), jnp.float32)

        u = x_ref[0, :ch, :].astype(jnp.float32)   # "active" half
        v = x_ref[0, ch:, :].astype(jnp.float32)   # "passive" half

        def flow_half_update(u, f):
            # pre 1x1 conv: (ci, ch) @ (ch, T)
            h = jnp.dot(pre_w_ref[f], u,
                        preferred_element_type=jnp.float32) + pre_b_ref[f]
            out = None
            for i in range(n_layers):
                d = dilation_rate ** i
                pad = d * (K - 1) // 2
                li = f * n_layers + i
                # write h into the zero-haloed scratch (lane-aligned offset)
                hp_ref[:, left_halo:left_halo + T] = h
                # im2col: stack K lane-shifted views along the channel axis
                for k in range(K):
                    off = left_halo - pad + k * d
                    im_ref[k * ci:(k + 1) * ci, :] = hp_ref[:, off:off + T]
                # dilated conv as a single matmul; bias already folds in the
                # speaker conditioning and the conv bias.
                z = jnp.dot(in_w_ref[li], im_ref[...],
                            preferred_element_type=jnp.float32) \
                    + bias_ref[0, li * 2 * ci:(li + 1) * 2 * ci, :]
                acts = jnp.tanh(z[:ci]) * jax.nn.sigmoid(z[ci:])
                rs = jnp.dot(rs_w_ref[li], acts,
                             preferred_element_type=jnp.float32) + rs_b_ref[li]
                out = rs[ci:] if i == 0 else out + rs[ci:]
                if i < n_layers - 1:
                    h = h + rs[:ci]
            # post 1x1 conv: (ch, ci) @ (ci, T)
            return jnp.dot(post_w_ref[f], out,
                           preferred_element_type=jnp.float32) + post_b_ref[f]

        for f in range(n_flows):
            if reverse:
                u, v = v, u                        # Flip (channel reversal is
                v = v - flow_half_update(u, f)     # folded into the weights)
            else:
                h_post = flow_half_update(u, f)
                u, v = v + h_post, u               # coupling then Flip (swap)

        out_ref[0, :ch, :] = u.astype(out_ref.dtype)
        out_ref[0, ch:, :] = v.astype(out_ref.dtype)

    return kernel


def _full_spec(a):
    nd = a.ndim
    return pl.BlockSpec(a.shape, lambda b, _nd=nd: (0,) * _nd)


# -----------------------------------------------------------------------------
# Flow forward: all flows fused in one pallas_call
# -----------------------------------------------------------------------------
def flow_forward(x, speaker, flow_params, *, kernel_size, dilation_rate,
                 reverse=False):
    B, C, T = x.shape
    ch = C // 2
    nf = len(flow_params)
    ci = flow_params[0]["pre_w"].shape[0]
    n_layers = len(flow_params[0]["in_w"])
    K = kernel_size

    # Processing order of the flows and the channel-reversal exponent (0/1)
    # that must be absorbed into each flow's pre/post weights.
    if not reverse:
        order = list(range(nf))
        exps = [l % 2 for l in order]
    else:
        order = list(range(nf - 1, -1, -1))
        exps = [(nf - l) % 2 for l in order]

    pre_w, pre_b, post_w, post_b = [], [], [], []
    in_w, rs_w, rs_b, bias = [], [], [], []
    for l, e in zip(order, exps):
        p = flow_params[l]
        pre_w.append(p["pre_w"][:, ::-1] if e else p["pre_w"])
        pre_b.append(p["pre_b"])
        post_w.append(p["post_w"][::-1, :] if e else p["post_w"])
        post_b.append(p["post_b"][::-1, :] if e else p["post_b"])
        # Speaker conditioning hoisted out of the kernel (N=1 matmul) and
        # folded with each layer's conv bias into a per-batch (2*ci, 1) bias.
        cond = jnp.einsum("oc,bcs->bos", p["cond_w"], speaker) + p["cond_b"][None]
        cond = cond.reshape(B, n_layers, 2 * ci, 1)
        for i in range(n_layers):
            # im2col weight: (2ci, ci, K) -> (2ci, K*ci), column k*ci + c = w[:, c, k]
            in_w.append(jnp.transpose(p["in_w"][i], (0, 2, 1)).reshape(2 * ci, K * ci))
            w, b = p["rs_w"][i], p["rs_b"][i]
            if w.shape[0] == ci:   # last WN layer: pad residual rows with zeros
                w = jnp.concatenate([jnp.zeros((ci, ci), w.dtype), w], axis=0)
                b = jnp.concatenate([jnp.zeros((ci, 1), b.dtype), b], axis=0)
            rs_w.append(w)
            rs_b.append(b)
            bias.append(cond[:, i] + p["in_b"][i][None])   # (B, 2ci, 1)

    pre_w_all = jnp.stack(pre_w)             # (nf, ci, ch)
    pre_b_all = jnp.stack(pre_b)             # (nf, ci, 1)
    post_w_all = jnp.stack(post_w)           # (nf, ch, ci)
    post_b_all = jnp.stack(post_b)           # (nf, ch, 1)
    in_w_all = jnp.stack(in_w)               # (nf*n_layers, 2ci, K*ci)
    rs_w_all = jnp.stack(rs_w)               # (nf*n_layers, 2ci, ci)
    rs_b_all = jnp.stack(rs_b)               # (nf*n_layers, 2ci, 1)
    bias_all = jnp.concatenate(bias, axis=1)  # (B, nf*n_layers*2ci, 1)

    max_pad = dilation_rate ** (n_layers - 1) * (K - 1) // 2
    left_halo = ((max_pad + 127) // 128) * 128 if max_pad > 0 else 0
    hp_len = left_halo + T + max_pad

    kernel = _fused_flow_kernel_factory(ch, ci, K, dilation_rate, n_layers, nf,
                                        T, left_halo, hp_len, reverse)

    weights = [pre_w_all, pre_b_all, in_w_all, rs_w_all, rs_b_all,
               post_w_all, post_b_all]

    out = pl.pallas_call(
        kernel,
        out_shape=jax.ShapeDtypeStruct((B, C, T), jnp.float32),
        grid=(B,),
        in_specs=[pl.BlockSpec((1, C, T), lambda b: (b, 0, 0)),
                  pl.BlockSpec((1, nf * n_layers * 2 * ci, 1),
                               lambda b: (b, 0, 0))]
                 + [_full_spec(w) for w in weights],
        out_specs=pl.BlockSpec((1, C, T), lambda b: (b, 0, 0)),
        scratch_shapes=[pltpu.VMEM((ci, hp_len), jnp.float32),
                        pltpu.VMEM((K * ci, T), jnp.float32)],
        compiler_params=pltpu.CompilerParams(
            dimension_semantics=("parallel",)),
    )(x, bias_all, *weights)

    # Residual channel reversal only when the number of flows is odd.
    if nf % 2 == 1:
        out = jnp.concatenate([out[:, :ch][:, ::-1], out[:, ch:][:, ::-1]],
                              axis=1)
    return out


# -----------------------------------------------------------------------------
# Pure-JAX reference (for correctness checking only)
# -----------------------------------------------------------------------------
def coupling_layer_ref(x, speaker, p, *, kernel_size, dilation_rate,
                       reverse=False):
    B, C, T = x.shape
    ch = C // 2
    ci = p["pre_w"].shape[0]
    n_layers = len(p["in_w"])
    x0, x1 = x[:, :ch, :], x[:, ch:, :]

    h = jnp.einsum("oc,bct->bot", p["pre_w"], x0) + p["pre_b"][None]
    cond = jnp.einsum("oc,bcs->bos", p["cond_w"], speaker) + p["cond_b"][None]

    output = jnp.zeros((B, ci, T), jnp.float32)
    for i in range(n_layers):
        d = dilation_rate ** i
        pad = (kernel_size * d - d) // 2
        hp = jnp.pad(h, ((0, 0), (0, 0), (pad, pad)))
        x_in = jnp.zeros((B, 2 * ci, T), jnp.float32)
        for k in range(kernel_size):
            x_in = x_in + jnp.einsum("oc,bct->bot", p["in_w"][i][:, :, k],
                                     hp[:, :, k * d:k * d + T])
        x_in = x_in + p["in_b"][i][None]
        g_l = cond[:, 2 * ci * i:2 * ci * (i + 1), :]
        z = x_in + g_l
        acts = jnp.tanh(z[:, :ci]) * jax.nn.sigmoid(z[:, ci:])
        rs = jnp.einsum("oc,bct->bot", p["rs_w"][i], acts) + p["rs_b"][i][None]
        if i < n_layers - 1:
            h = h + rs[:, :ci]
            output = output + rs[:, ci:]
        else:
            output = output + rs

    h_post = jnp.einsum("oc,bct->bot", p["post_w"], output) + p["post_b"][None]
    x1 = x1 - h_post if reverse else x1 + h_post
    return jnp.concatenate([x0, x1], axis=1)


def flow_forward_ref(x, speaker, flow_params, *, kernel_size, dilation_rate,
                     reverse=False):
    if not reverse:
        for p in flow_params:
            x = coupling_layer_ref(x, speaker, p, kernel_size=kernel_size,
                                   dilation_rate=dilation_rate, reverse=False)
            x = jnp.flip(x, axis=1)
    else:
        for p in reversed(flow_params):
            x = jnp.flip(x, axis=1)
            x = coupling_layer_ref(x, speaker, p, kernel_size=kernel_size,
                                   dilation_rate=dilation_rate, reverse=True)
    return x


# -----------------------------------------------------------------------------
# Deterministic parameter init (synthetic; matches module shapes)
# -----------------------------------------------------------------------------
def _u(key, shape, fan_in):
    lim = 1.0 / jnp.sqrt(jnp.float32(fan_in))
    return jax.random.uniform(key, shape, jnp.float32, -lim, lim)


def init_flow_params(key, *, input_channels, internal_channels,
                     speaker_channels, kernel_size, num_flows, num_wn_block,
                     zero_post=True):
    ch = input_channels // 2
    ci = internal_channels
    cs = speaker_channels
    K = kernel_size
    n = num_wn_block
    params = []
    for _ in range(num_flows):
        key, k_pre, k_preb, k_cw, k_cb, k_pw, k_pb = jax.random.split(key, 7)
        p = {
            "pre_w": _u(k_pre, (ci, ch), ch),
            "pre_b": _u(k_preb, (ci, 1), ch),
            "cond_w": _u(k_cw, (2 * ci * n, cs), cs),
            "cond_b": _u(k_cb, (2 * ci * n, 1), cs),
            "in_w": [], "in_b": [], "rs_w": [], "rs_b": [],
        }
        for i in range(n):
            key, k1, k2, k3, k4 = jax.random.split(key, 5)
            rs_out = 2 * ci if i < n - 1 else ci
            p["in_w"].append(_u(k1, (2 * ci, ci, K), ci * K))
            p["in_b"].append(_u(k2, (2 * ci, 1), ci * K))
            p["rs_w"].append(_u(k3, (rs_out, ci), ci))
            p["rs_b"].append(_u(k4, (rs_out, 1), ci))
        if zero_post:
            # self.post.weight.data.zero_(); self.post.bias.data.zero_()
            p["post_w"] = jnp.zeros((ch, ci), jnp.float32)
            p["post_b"] = jnp.zeros((ch, 1), jnp.float32)
        else:
            p["post_w"] = _u(k_pw, (ch, ci), ci)
            p["post_b"] = _u(k_pb, (ch, 1), ci)
        params.append(p)
    return params


# -----------------------------------------------------------------------------
if __name__ == "__main__":
    B, T = 2, 256
    input_channels = 16
    internal_channels = 32
    speaker_channels = 32
    kernel_size = 5
    dilation_rate = 1
    num_flows = 2
    num_wn_block = 2

    key = jax.random.PRNGKey(0)
    kx, kg, kp = jax.random.split(key, 3)
    x = jax.random.normal(kx, (B, input_channels, T), jnp.float32)
    speaker = jax.random.normal(kg, (B, speaker_channels, 1), jnp.float32)

    run_fwd = functools.partial(flow_forward, kernel_size=kernel_size,
                                dilation_rate=dilation_rate, reverse=False)
    run_rev = functools.partial(flow_forward, kernel_size=kernel_size,
                                dilation_rate=dilation_rate, reverse=True)
    ref_fwd = functools.partial(flow_forward_ref, kernel_size=kernel_size,
                                dilation_rate=dilation_rate, reverse=False)
    ref_rev = functools.partial(flow_forward_ref, kernel_size=kernel_size,
                                dilation_rate=dilation_rate, reverse=True)

    # Exact module semantics: post conv zero-initialized.
    params = init_flow_params(kp, input_channels=input_channels,
                              internal_channels=internal_channels,
                              speaker_channels=speaker_channels,
                              kernel_size=kernel_size, num_flows=num_flows,
                              num_wn_block=num_wn_block, zero_post=True)
    out = jax.block_until_ready(run_fwd(x, speaker, params))
    assert out.shape == x.shape
    assert jnp.allclose(out, ref_fwd(x, speaker, params), atol=1e-4, rtol=1e-4)

    # Non-zero post weights so the whole WN path affects the output.
    params_nz = init_flow_params(kp, input_channels=input_channels,
                                 internal_channels=internal_channels,
                                 speaker_channels=speaker_channels,
                                 kernel_size=kernel_size, num_flows=num_flows,
                                 num_wn_block=num_wn_block, zero_post=False)
    out_f = jax.block_until_ready(run_fwd(x, speaker, params_nz))
    assert jnp.allclose(out_f, ref_fwd(x, speaker, params_nz),
                        atol=1e-4, rtol=1e-4)

    # Reverse path vs reference, plus invertibility round-trip.
    out_r = jax.block_until_ready(run_rev(out_f, speaker, params_nz))
    assert jnp.allclose(out_r, ref_rev(out_f, speaker, params_nz),
                        atol=1e-4, rtol=1e-4)
    assert jnp.allclose(out_r, x, atol=1e-3, rtol=1e-3)

    print("KERNEL_OK")
</pallas_src>

<mosaic_0001>
module attributes {stable_mosaic.version = 11 : i64} {
  func.func @kernel(%arg0: i32, %arg1: memref<1x16x256xf32, #tpu.memory_space<vmem>>, %arg2: memref<1x256x1xf32, #tpu.memory_space<vmem>>, %arg3: memref<2x32x8xf32, #tpu.memory_space<vmem>>, %arg4: memref<2x32x1xf32, #tpu.memory_space<vmem>>, %arg5: memref<4x64x160xf32, #tpu.memory_space<vmem>>, %arg6: memref<4x64x32xf32, #tpu.memory_space<vmem>>, %arg7: memref<4x64x1xf32, #tpu.memory_space<vmem>>, %arg8: memref<2x8x32xf32, #tpu.memory_space<vmem>>, %arg9: memref<2x8x1xf32, #tpu.memory_space<vmem>>, %arg10: memref<1x16x256xf32, #tpu.memory_space<vmem>>, %arg11: memref<32x386xf32, #tpu.memory_space<vmem>>, %arg12: memref<160x256xf32, #tpu.memory_space<vmem>>) attributes {dimension_semantics = [#tpu.dimension_semantics<parallel>], iteration_bounds = array<i64: 2>, scalar_prefetch = 0 : i64, scratch_operands = 2 : i64, tpu.core_type = #tpu.core_type<tc>, window_params = [{transform_indices = @transform_0, window_bounds = array<i64: 1, 16, 256>}, {transform_indices = @transform_1, window_bounds = array<i64: 1, 256, 1>}, {pipeline_mode = #tpu.pipeline_mode<synchronous>, transform_indices = @transform_2, window_bounds = array<i64: 2, 32, 8>}, {pipeline_mode = #tpu.pipeline_mode<synchronous>, transform_indices = @transform_3, window_bounds = array<i64: 2, 32, 1>}, {pipeline_mode = #tpu.pipeline_mode<synchronous>, transform_indices = @transform_4, window_bounds = array<i64: 4, 64, 160>}, {pipeline_mode = #tpu.pipeline_mode<synchronous>, transform_indices = @transform_5, window_bounds = array<i64: 4, 64, 32>}, {pipeline_mode = #tpu.pipeline_mode<synchronous>, transform_indices = @transform_6, window_bounds = array<i64: 4, 64, 1>}, {pipeline_mode = #tpu.pipeline_mode<synchronous>, transform_indices = @transform_7, window_bounds = array<i64: 2, 8, 32>}, {pipeline_mode = #tpu.pipeline_mode<synchronous>, transform_indices = @transform_8, window_bounds = array<i64: 2, 8, 1>}, {transform_indices = @transform_9, window_bounds = array<i64: 1, 16, 256>}]} {
    %cst = arith.constant 0.000000e+00 : f32
    %0 = vector.broadcast %cst : f32 to vector<32x386xf32>
    %c0 = arith.constant 0 : index
    %c0_0 = arith.constant 0 : index
    %1 = vector.load %arg11[%c0, %c0_0] : memref<32x386xf32, #tpu.memory_space<vmem>>, vector<32x386xf32>
    tpu.vector_store %arg11[%c0, %c0_0], %0 {strides = array<i32>} : memref<32x386xf32, #tpu.memory_space<vmem>>, vector<32x386xf32>,
    %c0_1 = arith.constant 0 : index
    %c0_2 = arith.constant 0 : index
    %c0_3 = arith.constant 0 : index
    %2 = vector.load %arg1[%c0_1, %c0_2, %c0_3] : memref<1x16x256xf32, #tpu.memory_space<vmem>>, vector<1x8x256xf32>
    %3 = vector.shape_cast %2 : vector<1x8x256xf32> to vector<8x256xf32>
    %c0_4 = arith.constant 0 : index
    %c8 = arith.constant 8 : index
    %c0_5 = arith.constant 0 : index
    %4 = vector.load %arg1[%c0_4, %c8, %c0_5] : memref<1x16x256xf32, #tpu.memory_space<vmem>>, vector<1x8x256xf32>
    %5 = vector.shape_cast %4 : vector<1x8x256xf32> to vector<8x256xf32>
    %c0_6 = arith.constant 0 : index
    %c0_7 = arith.constant 0 : index
    %c0_8 = arith.constant 0 : index
    %6 = vector.load %arg3[%c0_6, %c0_7, %c0_8] : memref<2x32x8xf32, #tpu.memory_space<vmem>>, vector<1x32x8xf32>
    %7 = vector.shape_cast %6 : vector<1x32x8xf32> to vector<32x8xf32>
    %cst_9 = arith.constant dense<0.000000e+00> : vector<32x256xf32>
    %8 = tpu.matmul %7, %3, %cst_9 {dimension_numbers = #tpu.dot_dimension_numbers<[1], [0], [0], [1], [0, 0, 1, 1], [], []>} : vector<32x8xf32>, vector<8x256xf32>, vector<32x256xf32> -> vector<32x256xf32>
    %c0_10 = arith.constant 0 : index
    %c0_11 = arith.constant 0 : index
    %c0_12 = arith.constant 0 : index
    %9 = vector.load %arg4[%c0_10, %c0_11, %c0_12] : memref<2x32x1xf32, #tpu.memory_space<vmem>>, vector<1x32x1xf32>
    %10 = vector.shape_cast %9 : vector<1x32x1xf32> to vector<32x1xf32>
    %11 = vector.broadcast %10 : vector<32x1xf32> to vector<32x256xf32>
    %12 = arith.addf %8, %11 : vector<32x256xf32>
    %c0_13 = arith.constant 0 : index
    %c128 = arith.constant 128 : index
    %13 = vector.load %arg11[%c0_13, %c128] : memref<32x386xf32, #tpu.memory_space<vmem>>, vector<32x256xf32>
    tpu.vector_store %arg11[%c0_13, %c128], %12 {strides = array<i32>} : memref<32x386xf32, #tpu.memory_space<vmem>>, vector<32x256xf32>,
    %c0_14 = arith.constant 0 : index
    %c126 = arith.constant 126 : index
    %14 = vector.load %arg11[%c0_14, %c126] : memref<32x386xf32, #tpu.memory_space<vmem>>, vector<32x256xf32>
    %c0_15 = arith.constant 0 : index
    %c0_16 = arith.constant 0 : index
    %15 = vector.load %arg12[%c0_15, %c0_16] : memref<160x256xf32, #tpu.memory_space<vmem>>, vector<32x256xf32>
    tpu.vector_store %arg12[%c0_15, %c0_16], %14 {strides = array<i32>} : memref<160x256xf32, #tpu.memory_space<vmem>>, vector<32x256xf32>,
    %c0_17 = arith.constant 0 : index
    %c127 = arith.constant 127 : index
    %16 = vector.load %arg11[%c0_17, %c127] : memref<32x386xf32, #tpu.memory_space<vmem>>, vector<32x256xf32>
    %c32 = arith.constant 32 : index
    %c0_18 = arith.constant 0 : index
    %17 = vector.load %arg12[%c32, %c0_18] : memref<160x256xf32, #tpu.memory_space<vmem>>, vector<32x256xf32>
    tpu.vector_store %arg12[%c32, %c0_18], %16 {strides = array<i32>} : memref<160x256xf32, #tpu.memory_space<vmem>>, vector<32x256xf32>,
    %c0_19 = arith.constant 0 : index
    %c128_20 = arith.constant 128 : index
    %18 = vector.load %arg11[%c0_19, %c128_20] : memref<32x386xf32, #tpu.memory_space<vmem>>, vector<32x256xf32>
    %c64 = arith.constant 64 : index
    %c0_21 = arith.constant 0 : index
    %19 = vector.load %arg12[%c64, %c0_21] : memref<160x256xf32, #tpu.memory_space<vmem>>, vector<32x256xf32>
    tpu.vector_store %arg12[%c64, %c0_21], %18 {strides = array<i32>} : memref<160x256xf32, #tpu.memory_space<vmem>>, vector<32x256xf32>,
    %c0_22 = arith.constant 0 : index
    %c129 = arith.constant 129 : index
    %20 = vector.load %arg11[%c0_22, %c129] : memref<32x386xf32, #tpu.memory_space<vmem>>, vector<32x256xf32>
    %c96 = arith.constant 96 : index
    %c0_23 = arith.constant 0 : index
    %21 = vector.load %arg12[%c96, %c0_23] : memref<160x256xf32, #tpu.memory_space<vmem>>, vector<32x256xf32>
    tpu.vector_store %arg12[%c96, %c0_23], %20 {strides = array<i32>} : memref<160x256xf32, #tpu.memory_space<vmem>>, vector<32x256xf32>,
    %c0_24 = arith.constant 0 : index
    %c130 = arith.constant 130 : index
    %22 = vector.load %arg11[%c0_24, %c130] : memref<32x386xf32, #tpu.memory_space<vmem>>, vector<32x256xf32>
    %c128_25 = arith.constant 128 : index
    %c0_26 = arith.constant 0 : index
    %23 = vector.load %arg12[%c128_25, %c0_26] : memref<160x256xf32, #tpu.memory_space<vmem>>, vector<32x256xf32>
    tpu.vector_store %arg12[%c128_25, %c0_26], %22 {strides = array<i32>} : memref<160x256xf32, #tpu.memory_space<vmem>>, vector<32x256xf32>,
    %c0_27 = arith.constant 0 : index
    %c0_28 = arith.constant 0 : index
    %c0_29 = arith.constant 0 : index
    %24 = vector.load %arg5[%c0_27, %c0_28, %c0_29] : memref<4x64x160xf32, #tpu.memory_space<vmem>>, vector<1x64x160xf32>
    %25 = vector.shape_cast %24 : vector<1x64x160xf32> to vector<64x160xf32>
    %c0_30 = arith.constant 0 : index
    %c0_31 = arith.constant 0 : index
    %26 = vector.load %arg12[%c0_30, %c0_31] : memref<160x256xf32, #tpu.memory_space<vmem>>, vector<160x256xf32>
    %cst_32 = arith.constant dense<0.000000e+00> : vector<64x256xf32>
    %27 = tpu.matmul %25, %26, %cst_32 {dimension_numbers = #tpu.dot_dimension_numbers<[1], [0], [0], [1], [0, 0, 1, 1], [], []>} : vector<64x160xf32>, vector<160x256xf32>, vector<64x256xf32> -> vector<64x256xf32>
    %c0_33 = arith.constant 0 : index
    %c0_34 = arith.constant 0 : index
    %c0_35 = arith.constant 0 : index
    %28 = vector.load %arg2[%c0_33, %c0_34, %c0_35] : memref<1x256x1xf32, #tpu.memory_space<vmem>>, vector<1x64x1xf32>
    %29 = vector.shape_cast %28 : vector<1x64x1xf32> to vector<64x1xf32>
    %30 = vector.broadcast %29 : vector<64x1xf32> to vector<64x256xf32>
    %31 = arith.addf %27, %30 : vector<64x256xf32>
    %32 = vector.extract_strided_slice %31 {offsets = [0, 0], sizes = [32, 256], strides = [1, 1]} : vector<64x256xf32> to vector<32x256xf32>
    %33 = math.tanh %32 : vector<32x256xf32>
    %34 = vector.extract_strided_slice %31 {offsets = [32, 0], sizes = [32, 256], strides = [1, 1]} : vector<64x256xf32> to vector<32x256xf32>
    %35 = arith.negf %34 : vector<32x256xf32>
    %36 = math.exp %35 : vector<32x256xf32>
    %cst_36 = arith.constant 1.000000e+00 : f32
    %37 = vector.broadcast %cst_36 : f32 to vector<32x256xf32>
    %38 = arith.addf %37, %36 : vector<32x256xf32>
    %39 = arith.divf %37, %38 : vector<32x256xf32>
    %40 = arith.mulf %33, %39 : vector<32x256xf32>
    %c0_37 = arith.constant 0 : index
    %c0_38 = arith.constant 0 : index
    %c0_39 = arith.constant 0 : index
    %41 = vector.load %arg6[%c0_37, %c0_38, %c0_39] : memref<4x64x32xf32, #tpu.memory_space<vmem>>, vector<1x64x32xf32>
    %42 = vector.shape_cast %41 : vector<1x64x32xf32> to vector<64x32xf32>
    %cst_40 = arith.constant dense<0.000000e+00> : vector<64x256xf32>
    %43 = tpu.matmul %42, %40, %cst_40 {dimension_numbers = #tpu.dot_dimension_numbers<[1], [0], [0], [1], [0, 0, 1, 1], [], []>} : vector<64x32xf32>, vector<32x256xf32>, vector<64x256xf32> -> vector<64x256xf32>
    %c0_41 = arith.constant 0 : index
    %c0_42 = arith.constant 0 : index
    %c0_43 = arith.constant 0 : index
    %44 = vector.load %arg7[%c0_41, %c0_42, %c0_43] : memref<4x64x1xf32, #tpu.memory_space<vmem>>, vector<1x64x1xf32>
    %45 = vector.shape_cast %44 : vector<1x64x1xf32> to vector<64x1xf32>
    %46 = vector.broadcast %45 : vector<64x1xf32> to vector<64x256xf32>
    %47 = arith.addf %43, %46 : vector<64x256xf32>
    %48 = vector.extract_strided_slice %47 {offsets = [32, 0], sizes = [32, 256], strides = [1, 1]} : vector<64x256xf32> to vector<32x256xf32>
    %49 = vector.extract_strided_slice %47 {offsets = [0, 0], sizes = [32, 256], strides = [1, 1]} : vector<64x256xf32> to vector<32x256xf32>
    %50 = arith.addf %12, %49 : vector<32x256xf32>
    %c0_44 = arith.constant 0 : index
    %c128_45 = arith.constant 128 : index
    %51 = vector.load %arg11[%c0_44, %c128_45] : memref<32x386xf32, #tpu.memory_space<vmem>>, vector<32x256xf32>
    tpu.vector_store %arg11[%c0_44, %c128_45], %50 {strides = array<i32>} : memref<32x386xf32, #tpu.memory_space<vmem>>, vector<32x256xf32>,
    %c0_46 = arith.constant 0 : index
    %c126_47 = arith.constant 126 : index
    %52 = vector.load %arg11[%c0_46, %c126_47] : memref<32x386xf32, #tpu.memory_space<vmem>>, vector<32x256xf32>
    %c0_48 = arith.constant 0 : index
    %c0_49 = arith.constant 0 : index
    %53 = vector.load %arg12[%c0_48, %c0_49] : memref<160x256xf32, #tpu.memory_space<vmem>>, vector<32x256xf32>
    tpu.vector_store %arg12[%c0_48, %c0_49], %52 {strides = array<i32>} : memref<160x256xf32, #tpu.memory_space<vmem>>, vector<32x256xf32>,
    %c0_50 = arith.constant 0 : index
    %c127_51 = arith.constant 127 : index
    %54 = vector.load %arg11[%c0_50, %c127_51] : memref<32x386xf32, #tpu.memory_space<vmem>>, vector<32x256xf32>
    %c32_52 = arith.constant 32 : index
    %c0_53 = arith.constant 0 : index
    %55 = vector.load %arg12[%c32_52, %c0_53] : memref<160x256xf32, #tpu.memory_space<vmem>>, vector<32x256xf32>
    tpu.vector_store %arg12[%c32_52, %c0_53], %54 {strides = array<i32>} : memref<160x256xf32, #tpu.memory_space<vmem>>, vector<32x256xf32>,
    %c0_54 = arith.constant 0 : index
    %c128_55 = arith.constant 128 : index
    %56 = vector.load %arg11[%c0_54, %c128_55] : memref<32x386xf32, #tpu.memory_space<vmem>>, vector<32x256xf32>
    %c64_56 = arith.constant 64 : index
    %c0_57 = arith.constant 0 : index
    %57 = vector.load %arg12[%c64_56, %c0_57] : memref<160x256xf32, #tpu.memory_space<vmem>>, vector<32x256xf32>
    tpu.vector_store %arg12[%c64_56, %c0_57], %56 {strides = array<i32>} : memref<160x256xf32, #tpu.memory_space<vmem>>, vector<32x256xf32>,
    %c0_58 = arith.constant 0 : index
    %c129_59 = arith.constant 129 : index
    %58 = vector.load %arg11[%c0_58, %c129_59] : memref<32x386xf32, #tpu.memory_space<vmem>>, vector<32x256xf32>
    %c96_60 = arith.constant 96 : index
    %c0_61 = arith.constant 0 : index
    %59 = vector.load %arg12[%c96_60, %c0_61] : memref<160x256xf32, #tpu.memory_space<vmem>>, vector<32x256xf32>
    tpu.vector_store %arg12[%c96_60, %c0_61], %58 {strides = array<i32>} : memref<160x256xf32, #tpu.memory_space<vmem>>, vector<32x256xf32>,
    %c0_62 = arith.constant 0 : index
    %c130_63 = arith.constant 130 : index
    %60 = vector.load %arg11[%c0_62, %c130_63] : memref<32x386xf32, #tpu.memory_space<vmem>>, vector<32x256xf32>
    %c128_64 = arith.constant 128 : index
    %c0_65 = arith.constant 0 : index
    %61 = vector.load %arg12[%c128_64, %c0_65] : memref<160x256xf32, #tpu.memory_space<vmem>>, vector<32x256xf32>
    tpu.vector_store %arg12[%c128_64, %c0_65], %60 {strides = array<i32>} : memref<160x256xf32, #tpu.memory_space<vmem>>, vector<32x256xf32>,
    %c1 = arith.constant 1 : index
    %c0_66 = arith.constant 0 : index
    %c0_67 = arith.constant 0 : index
    %62 = vector.load %arg5[%c1, %c0_66, %c0_67] : memref<4x64x160xf32, #tpu.memory_space<vmem>>, vector<1x64x160xf32>
    %63 = vector.shape_cast %62 : vector<1x64x160xf32> to vector<64x160xf32>
    %c0_68 = arith.constant 0 : index
    %c0_69 = arith.constant 0 : index
    %64 = vector.load %arg12[%c0_68, %c0_69] : memref<160x256xf32, #tpu.memory_space<vmem>>, vector<160x256xf32>
    %cst_70 = arith.constant dense<0.000000e+00> : vector<64x256xf32>
    %65 = tpu.matmul %63, %64, %cst_70 {dimension_numbers = #tpu.dot_dimension_numbers<[1], [0], [0], [1], [0, 0, 1, 1], [], []>} : vector<64x160xf32>, vector<160x256xf32>, vector<64x256xf32> -> vector<64x256xf32>
    %c0_71 = arith.constant 0 : index
    %c64_72 = arith.constant 64 : index
    %c0_73 = arith.constant 0 : index
    %66 = vector.load %arg2[%c0_71, %c64_72, %c0_73] : memref<1x256x1xf32, #tpu.memory_space<vmem>>, vector<1x64x1xf32>
    %67 = vector.shape_cast %66 : vector<1x64x1xf32> to vector<64x1xf32>
    %68 = vector.broadcast %67 : vector<64x1xf32> to vector<64x256xf32>
    %69 = arith.addf %65, %68 : vector<64x256xf32>
    %70 = vector.extract_strided_slice %69 {offsets = [0, 0], sizes = [32, 256], strides = [1, 1]} : vector<64x256xf32> to vector<32x256xf32>
    %71 = math.tanh %70 : vector<32x256xf32>
    %72 = vector.extract_strided_slice %69 {offsets = [32, 0], sizes = [32, 256], strides = [1, 1]} : vector<64x256xf32> to vector<32x256xf32>
    %73 = arith.negf %72 : vector<32x256xf32>
    %74 = math.exp %73 : vector<32x256xf32>
    %cst_74 = arith.constant 1.000000e+00 : f32
    %75 = vector.broadcast %cst_74 : f32 to vector<32x256xf32>
    %76 = arith.addf %75, %74 : vector<32x256xf32>
    %77 = arith.divf %75, %76 : vector<32x256xf32>
    %78 = arith.mulf %71, %77 : vector<32x256xf32>
    %c1_75 = arith.constant 1 : index
    %c0_76 = arith.constant 0 : index
    %c0_77 = arith.constant 0 : index
    %79 = vector.load %arg6[%c1_75, %c0_76, %c0_77] : memref<4x64x32xf32, #tpu.memory_space<vmem>>, vector<1x64x32xf32>
    %80 = vector.shape_cast %79 : vector<1x64x32xf32> to vector<64x32xf32>
    %cst_78 = arith.constant dense<0.000000e+00> : vector<64x256xf32>
    %81 = tpu.matmul %80, %78, %cst_78 {dimension_numbers = #tpu.dot_dimension_numbers<[1], [0], [0], [1], [0, 0, 1, 1], [], []>} : vector<64x32xf32>, vector<32x256xf32>, vector<64x256xf32> -> vector<64x256xf32>
    %c1_79 = arith.constant 1 : index
    %c0_80 = arith.constant 0 : index
    %c0_81 = arith.constant 0 : index
    %82 = vector.load %arg7[%c1_79, %c0_80, %c0_81] : memref<4x64x1xf32, #tpu.memory_space<vmem>>, vector<1x64x1xf32>
    %83 = vector.shape_cast %82 : vector<1x64x1xf32> to vector<64x1xf32>
    %84 = vector.broadcast %83 : vector<64x1xf32> to vector<64x256xf32>
    %85 = arith.addf %81, %84 : vector<64x256xf32>
    %86 = vector.extract_strided_slice %85 {offsets = [32, 0], sizes = [32, 256], strides = [1, 1]} : vector<64x256xf32> to vector<32x256xf32>
    %87 = arith.addf %48, %86 : vector<32x256xf32>
    %c0_82 = arith.constant 0 : index
    %c0_83 = arith.constant 0 : index
    %c0_84 = arith.constant 0 : index
    %88 = vector.load %arg8[%c0_82, %c0_83, %c0_84] : memref<2x8x32xf32, #tpu.memory_space<vmem>>, vector<1x8x32xf32>
    %89 = vector.shape_cast %88 : vector<1x8x32xf32> to vector<8x32xf32>
    %cst_85 = arith.constant dense<0.000000e+00> : vector<8x256xf32>
    %90 = tpu.matmul %89, %87, %cst_85 {dimension_numbers = #tpu.dot_dimension_numbers<[1], [0], [0], [1], [0, 0, 1, 1], [], []>} : vector<8x32xf32>, vector<32x256xf32>, vector<8x256xf32> -> vector<8x256xf32>
    %c0_86 = arith.constant 0 : index
    %c0_87 = arith.constant 0 : index
    %c0_88 = arith.constant 0 : index
    %91 = vector.load %arg9[%c0_86, %c0_87, %c0_88] : memref<2x8x1xf32, #tpu.memory_space<vmem>>, vector<1x8x1xf32>
    %92 = vector.shape_cast %91 : vector<1x8x1xf32> to vector<8x1xf32>
    %93 = vector.broadcast %92 : vector<8x1xf32> to vector<8x256xf32>
    %94 = arith.addf %90, %93 : vector<8x256xf32>
    %95 = arith.addf %5, %94 : vector<8x256xf32>
    %c1_89 = arith.constant 1 : index
    %c0_90 = arith.constant 0 : index
    %c0_91 = arith.constant 0 : index
    %96 = vector.load %arg3[%c1_89, %c0_90, %c0_91] : memref<2x32x8xf32, #tpu.memory_space<vmem>>, vector<1x32x8xf32>
    %97 = vector.shape_cast %96 : vector<1x32x8xf32> to vector<32x8xf32>
    %cst_92 = arith.constant dense<0.000000e+00> : vector<32x256xf32>
    %98 = tpu.matmul %97, %95, %cst_92 {dimension_numbers = #tpu.dot_dimension_numbers<[1], [0], [0], [1], [0, 0, 1, 1], [], []>} : vector<32x8xf32>, vector<8x256xf32>, vector<32x256xf32> -> vector<32x256xf32>
    %c1_93 = arith.constant 1 : index
    %c0_94 = arith.constant 0 : index
    %c0_95 = arith.constant 0 : index
    %99 = vector.load %arg4[%c1_93, %c0_94, %c0_95] : memref<2x32x1xf32, #tpu.memory_space<vmem>>, vector<1x32x1xf32>
    %100 = vector.shape_cast %99 : vector<1x32x1xf32> to vector<32x1xf32>
    %101 = vector.broadcast %100 : vector<32x1xf32> to vector<32x256xf32>
    %102 = arith.addf %98, %101 : vector<32x256xf32>
    %c0_96 = arith.constant 0 : index
    %c128_97 = arith.constant 128 : index
    %103 = vector.load %arg11[%c0_96, %c128_97] : memref<32x386xf32, #tpu.memory_space<vmem>>, vector<32x256xf32>
    tpu.vector_store %arg11[%c0_96, %c128_97], %102 {strides = array<i32>} : memref<32x386xf32, #tpu.memory_space<vmem>>, vector<32x256xf32>,
    %c0_98 = arith.constant 0 : index
    %c126_99 = arith.constant 126 : index
    %104 = vector.load %arg11[%c0_98, %c126_99] : memref<32x386xf32, #tpu.memory_space<vmem>>, vector<32x256xf32>
    %c0_100 = arith.constant 0 : index
    %c0_101 = arith.constant 0 : index
    %105 = vector.load %arg12[%c0_100, %c0_101] : memref<160x256xf32, #tpu.memory_space<vmem>>, vector<32x256xf32>
    tpu.vector_store %arg12[%c0_100, %c0_101], %104 {strides = array<i32>} : memref<160x256xf32, #tpu.memory_space<vmem>>, vector<32x256xf32>,
    %c0_102 = arith.constant 0 : index
    %c127_103 = arith.constant 127 : index
    %106 = vector.load %arg11[%c0_102, %c127_103] : memref<32x386xf32, #tpu.memory_space<vmem>>, vector<32x256xf32>
    %c32_104 = arith.constant 32 : index
    %c0_105 = arith.constant 0 : index
    %107 = vector.load %arg12[%c32_104, %c0_105] : memref<160x256xf32, #tpu.memory_space<vmem>>, vector<32x256xf32>
    tpu.vector_store %arg12[%c32_104, %c0_105], %106 {strides = array<i32>} : memref<160x256xf32, #tpu.memory_space<vmem>>, vector<32x256xf32>,
    %c0_106 = arith.constant 0 : index
    %c128_107 = arith.constant 128 : index
    %108 = vector.load %arg11[%c0_106, %c128_107] : memref<32x386xf32, #tpu.memory_space<vmem>>, vector<32x256xf32>
    %c64_108 = arith.constant 64 : index
    %c0_109 = arith.constant 0 : index
    %109 = vector.load %arg12[%c64_108, %c0_109] : memref<160x256xf32, #tpu.memory_space<vmem>>, vector<32x256xf32>
    tpu.vector_store %arg12[%c64_108, %c0_109], %108 {strides = array<i32>} : memref<160x256xf32, #tpu.memory_space<vmem>>, vector<32x256xf32>,
    %c0_110 = arith.constant 0 : index
    %c129_111 = arith.constant 129 : index
    %110 = vector.load %arg11[%c0_110, %c129_111] : memref<32x386xf32, #tpu.memory_space<vmem>>, vector<32x256xf32>
    %c96_112 = arith.constant 96 : index
    %c0_113 = arith.constant 0 : index
    %111 = vector.load %arg12[%c96_112, %c0_113] : memref<160x256xf32, #tpu.memory_space<vmem>>, vector<32x256xf32>
    tpu.vector_store %arg12[%c96_112, %c0_113], %110 {strides = array<i32>} : memref<160x256xf32, #tpu.memory_space<vmem>>, vector<32x256xf32>,
    %c0_114 = arith.constant 0 : index
    %c130_115 = arith.constant 130 : index
    %112 = vector.load %arg11[%c0_114, %c130_115] : memref<32x386xf32, #tpu.memory_space<vmem>>, vector<32x256xf32>
    %c128_116 = arith.constant 128 : index
    %c0_117 = arith.constant 0 : index
    %113 = vector.load %arg12[%c128_116, %c0_117] : memref<160x256xf32, #tpu.memory_space<vmem>>, vector<32x256xf32>
    tpu.vector_store %arg12[%c128_116, %c0_117], %112 {strides = array<i32>} : memref<160x256xf32, #tpu.memory_space<vmem>>, vector<32x256xf32>,
    %c2 = arith.constant 2 : index
    %c0_118 = arith.constant 0 : index
    %c0_119 = arith.constant 0 : index
    %114 = vector.load %arg5[%c2, %c0_118, %c0_119] : memref<4x64x160xf32, #tpu.memory_space<vmem>>, vector<1x64x160xf32>
    %115 = vector.shape_cast %114 : vector<1x64x160xf32> to vector<64x160xf32>
    %c0_120 = arith.constant 0 : index
    %c0_121 = arith.constant 0 : index
    %116 = vector.load %arg12[%c0_120, %c0_121] : memref<160x256xf32, #tpu.memory_space<vmem>>, vector<160x256xf32>
    %cst_122 = arith.constant dense<0.000000e+00> : vector<64x256xf32>
    %117 = tpu.matmul %115, %116, %cst_122 {dimension_numbers = #tpu.dot_dimension_numbers<[1], [0], [0], [1], [0, 0, 1, 1], [], []>} : vector<64x160xf32>, vector<160x256xf32>, vector<64x256xf32> -> vector<64x256xf32>
    %c0_123 = arith.constant 0 : index
    %c128_124 = arith.constant 128 : index
    %c0_125 = arith.constant 0 : index
    %118 = vector.load %arg2[%c0_123, %c128_124, %c0_125] : memref<1x256x1xf32, #tpu.memory_space<vmem>>, vector<1x64x1xf32>
    %119 = vector.shape_cast %118 : vector<1x64x1xf32> to vector<64x1xf32>
    %120 = vector.broadcast %119 : vector<64x1xf32> to vector<64x256xf32>
    %121 = arith.addf %117, %120 : vector<64x256xf32>
    %122 = vector.extract_strided_slice %121 {offsets = [0, 0], sizes = [32, 256], strides = [1, 1]} : vector<64x256xf32> to vector<32x256xf32>
    %123 = math.tanh %122 : vector<32x256xf32>
    %124 = vector.extract_strided_slice %121 {offsets = [32, 0], sizes = [32, 256], strides = [1, 1]} : vector<64x256xf32> to vector<32x256xf32>
    %125 = arith.negf %124 : vector<32x256xf32>
    %126 = math.exp %125 : vector<32x256xf32>
    %cst_126 = arith.constant 1.000000e+00 : f32
    %127 = vector.broadcast %cst_126 : f32 to vector<32x256xf32>
    %128 = arith.addf %127, %126 : vector<32x256xf32>
    %129 = arith.divf %127, %128 : vector<32x256xf32>
    %130 = arith.mulf %123, %129 : vector<32x256xf32>
    %c2_127 = arith.constant 2 : index
    %c0_128 = arith.constant 0 : index
    %c0_129 = arith.constant 0 : index
    %131 = vector.load %arg6[%c2_127, %c0_128, %c0_129] : memref<4x64x32xf32, #tpu.memory_space<vmem>>, vector<1x64x32xf32>
    %132 = vector.shape_cast %131 : vector<1x64x32xf32> to vector<64x32xf32>
    %cst_130 = arith.constant dense<0.000000e+00> : vector<64x256xf32>
    %133 = tpu.matmul %132, %130, %cst_130 {dimension_numbers = #tpu.dot_dimension_numbers<[1], [0], [0], [1], [0, 0, 1, 1], [], []>} : vector<64x32xf32>, vector<32x256xf32>, vector<64x256xf32> -> vector<64x256xf32>
    %c2_131 = arith.constant 2 : index
    %c0_132 = arith.constant 0 : index
    %c0_133 = arith.constant 0 : index
    %134 = vector.load %arg7[%c2_131, %c0_132, %c0_133] : memref<4x64x1xf32, #tpu.memory_space<vmem>>, vector<1x64x1xf32>
    %135 = vector.shape_cast %134 : vector<1x64x1xf32> to vector<64x1xf32>
    %136 = vector.broadcast %135 : vector<64x1xf32> to vector<64x256xf32>
    %137 = arith.addf %133, %136 : vector<64x256xf32>
    %138 = vector.extract_strided_slice %137 {offsets = [32, 0], sizes = [32, 256], strides = [1, 1]} : vector<64x256xf32> to vector<32x256xf32>
    %139 = vector.extract_strided_slice %137 {offsets = [0, 0], sizes = [32, 256], strides = [1, 1]} : vector<64x256xf32> to vector<32x256xf32>
    %140 = arith.addf %102, %139 : vector<32x256xf32>
    %c0_134 = arith.constant 0 : index
    %c128_135 = arith.constant 128 : index
    %141 = vector.load %arg11[%c0_134, %c128_135] : memref<32x386xf32, #tpu.memory_space<vmem>>, vector<32x256xf32>
    tpu.vector_store %arg11[%c0_134, %c128_135], %140 {strides = array<i32>} : memref<32x386xf32, #tpu.memory_space<vmem>>, vector<32x256xf32>,
    %c0_136 = arith.constant 0 : index
    %c126_137 = arith.constant 126 : index
    %142 = vector.load %arg11[%c0_136, %c126_137] : memref<32x386xf32, #tpu.memory_space<vmem>>, vector<32x256xf32>
    %c0_138 = arith.constant 0 : index
    %c0_139 = arith.constant 0 : index
    %143 = vector.load %arg12[%c0_138, %c0_139] : memref<160x256xf32, #tpu.memory_space<vmem>>, vector<32x256xf32>
    tpu.vector_store %arg12[%c0_138, %c0_139], %142 {strides = array<i32>} : memref<160x256xf32, #tpu.memory_space<vmem>>, vector<32x256xf32>,
    %c0_140 = arith.constant 0 : index
    %c127_141 = arith.constant 127 : index
    %144 = vector.load %arg11[%c0_140, %c127_141] : memref<32x386xf32, #tpu.memory_space<vmem>>, vector<32x256xf32>
    %c32_142 = arith.constant 32 : index
    %c0_143 = arith.constant 0 : index
    %145 = vector.load %arg12[%c32_142, %c0_143] : memref<160x256xf32, #tpu.memory_space<vmem>>, vector<32x256xf32>
    tpu.vector_store %arg12[%c32_142, %c0_143], %144 {strides = array<i32>} : memref<160x256xf32, #tpu.memory_space<vmem>>, vector<32x256xf32>,
    %c0_144 = arith.constant 0 : index
    %c128_145 = arith.constant 128 : index
    %146 = vector.load %arg11[%c0_144, %c128_145] : memref<32x386xf32, #tpu.memory_space<vmem>>, vector<32x256xf32>
    %c64_146 = arith.constant 64 : index
    %c0_147 = arith.constant 0 : index
    %147 = vector.load %arg12[%c64_146, %c0_147] : memref<160x256xf32, #tpu.memory_space<vmem>>, vector<32x256xf32>
    tpu.vector_store %arg12[%c64_146, %c0_147], %146 {strides = array<i32>} : memref<160x256xf32, #tpu.memory_space<vmem>>, vector<32x256xf32>,
    %c0_148 = arith.constant 0 : index
    %c129_149 = arith.constant 129 : index
    %148 = vector.load %arg11[%c0_148, %c129_149] : memref<32x386xf32, #tpu.memory_space<vmem>>, vector<32x256xf32>
    %c96_150 = arith.constant 96 : index
    %c0_151 = arith.constant 0 : index
    %149 = vector.load %arg12[%c96_150, %c0_151] : memref<160x256xf32, #tpu.memory_space<vmem>>, vector<32x256xf32>
    tpu.vector_store %arg12[%c96_150, %c0_151], %148 {strides = array<i32>} : memref<160x256xf32, #tpu.memory_space<vmem>>, vector<32x256xf32>,
    %c0_152 = arith.constant 0 : index
    %c130_153 = arith.constant 130 : index
    %150 = vector.load %arg11[%c0_152, %c130_153] : memref<32x386xf32, #tpu.memory_space<vmem>>, vector<32x256xf32>
    %c128_154 = arith.constant 128 : index
    %c0_155 = arith.constant 0 : index
    %151 = vector.load %arg12[%c128_154, %c0_155] : memref<160x256xf32, #tpu.memory_space<vmem>>, vector<32x256xf32>
    tpu.vector_store %arg12[%c128_154, %c0_155], %150 {strides = array<i32>} : memref<160x256xf32, #tpu.memory_space<vmem>>, vector<32x256xf32>,
    %c3 = arith.constant 3 : index
    %c0_156 = arith.constant 0 : index
    %c0_157 = arith.constant 0 : index
    %152 = vector.load %arg5[%c3, %c0_156, %c0_157] : memref<4x64x160xf32, #tpu.memory_space<vmem>>, vector<1x64x160xf32>
    %153 = vector.shape_cast %152 : vector<1x64x160xf32> to vector<64x160xf32>
    %c0_158 = arith.constant 0 : index
    %c0_159 = arith.constant 0 : index
    %154 = vector.load %arg12[%c0_158, %c0_159] : memref<160x256xf32, #tpu.memory_space<vmem>>, vector<160x256xf32>
    %cst_160 = arith.constant dense<0.000000e+00> : vector<64x256xf32>
    %155 = tpu.matmul %153, %154, %cst_160 {dimension_numbers = #tpu.dot_dimension_numbers<[1], [0], [0], [1], [0, 0, 1, 1], [], []>} : vector<64x160xf32>, vector<160x256xf32>, vector<64x256xf32> -> vector<64x256xf32>
    %c0_161 = arith.constant 0 : index
    %c192 = arith.constant 192 : index
    %c0_162 = arith.constant 0 : index
    %156 = vector.load %arg2[%c0_161, %c192, %c0_162] : memref<1x256x1xf32, #tpu.memory_space<vmem>>, vector<1x64x1xf32>
    %157 = vector.shape_cast %156 : vector<1x64x1xf32> to vector<64x1xf32>
    %158 = vector.broadcast %157 : vector<64x1xf32> to vector<64x256xf32>
    %159 = arith.addf %155, %158 : vector<64x256xf32>
    %160 = vector.extract_strided_slice %159 {offsets = [0, 0], sizes = [32, 256], strides = [1, 1]} : vector<64x256xf32> to vector<32x256xf32>
    %161 = math.tanh %160 : vector<32x256xf32>
    %162 = vector.extract_strided_slice %159 {offsets = [32, 0], sizes = [32, 256], strides = [1, 1]} : vector<64x256xf32> to vector<32x256xf32>
    %163 = arith.negf %162 : vector<32x256xf32>
    %164 = math.exp %163 : vector<32x256xf32>
    %cst_163 = arith.constant 1.000000e+00 : f32
    %165 = vector.broadcast %cst_163 : f32 to vector<32x256xf32>
    %166 = arith.addf %165, %164 : vector<32x256xf32>
    %167 = arith.divf %165, %166 : vector<32x256xf32>
    %168 = arith.mulf %161, %167 : vector<32x256xf32>
    %c3_164 = arith.constant 3 : index
    %c0_165 = arith.constant 0 : index
    %c0_166 = arith.constant 0 : index
    %169 = vector.load %arg6[%c3_164, %c0_165, %c0_166] : memref<4x64x32xf32, #tpu.memory_space<vmem>>, vector<1x64x32xf32>
    %170 = vector.shape_cast %169 : vector<1x64x32xf32> to vector<64x32xf32>
    %cst_167 = arith.constant dense<0.000000e+00> : vector<64x256xf32>
    %171 = tpu.matmul %170, %168, %cst_167 {dimension_numbers = #tpu.dot_dimension_numbers<[1], [0], [0], [1], [0, 0, 1, 1], [], []>} : vector<64x32xf32>, vector<32x256xf32>, vector<64x256xf32> -> vector<64x256xf32>
    %c3_168 = arith.constant 3 : index
    %c0_169 = arith.constant 0 : index
    %c0_170 = arith.constant 0 : index
    %172 = vector.load %arg7[%c3_168, %c0_169, %c0_170] : memref<4x64x1xf32, #tpu.memory_space<vmem>>, vector<1x64x1xf32>
    %173 = vector.shape_cast %172 : vector<1x64x1xf32> to vector<64x1xf32>
    %174 = vector.broadcast %173 : vector<64x1xf32> to vector<64x256xf32>
    %175 = arith.addf %171, %174 : vector<64x256xf32>
    %176 = vector.extract_strided_slice %175 {offsets = [32, 0], sizes = [32, 256], strides = [1, 1]} : vector<64x256xf32> to vector<32x256xf32>
    %177 = arith.addf %138, %176 : vector<32x256xf32>
    %c1_171 = arith.constant 1 : index
    %c0_172 = arith.constant 0 : index
    %c0_173 = arith.constant 0 : index
    %178 = vector.load %arg8[%c1_171, %c0_172, %c0_173] : memref<2x8x32xf32, #tpu.memory_space<vmem>>, vector<1x8x32xf32>
    %179 = vector.shape_cast %178 : vector<1x8x32xf32> to vector<8x32xf32>
    %cst_174 = arith.constant dense<0.000000e+00> : vector<8x256xf32>
    %180 = tpu.matmul %179, %177, %cst_174 {dimension_numbers = #tpu.dot_dimension_numbers<[1], [0], [0], [1], [0, 0, 1, 1], [], []>} : vector<8x32xf32>, vector<32x256xf32>, vector<8x256xf32> -> vector<8x256xf32>
    %c1_175 = arith.constant 1 : index
    %c0_176 = arith.constant 0 : index
    %c0_177 = arith.constant 0 : index
    %181 = vector.load %arg9[%c1_175, %c0_176, %c0_177] : memref<2x8x1xf32, #tpu.memory_space<vmem>>, vector<1x8x1xf32>
    %182 = vector.shape_cast %181 : vector<1x8x1xf32> to vector<8x1xf32>
    %183 = vector.broadcast %182 : vector<8x1xf32> to vector<8x256xf32>
    %184 = arith.addf %180, %183 : vector<8x256xf32>
    %185 = arith.addf %3, %184 : vector<8x256xf32>
    %c0_178 = arith.constant 0 : index
    %c0_179 = arith.constant 0 : index
    %c0_180 = arith.constant 0 : index
    %186 = vector.load %arg10[%c0_178, %c0_179, %c0_180] : memref<1x16x256xf32, #tpu.memory_space<vmem>>, vector<1x8x256xf32>
    %187 = vector.shape_cast %186 : vector<1x8x256xf32> to vector<8x256xf32>
    %188 = vector.shape_cast %185 : vector<8x256xf32> to vector<1x8x256xf32>
    tpu.vector_store %arg10[%c0_178, %c0_179, %c0_180], %188 {strides = array<i32>} : memref<1x16x256xf32, #tpu.memory_space<vmem>>, vector<1x8x256xf32>,
    %c0_181 = arith.constant 0 : index
    %c8_182 = arith.constant 8 : index
    %c0_183 = arith.constant 0 : index
    %189 = vector.load %arg10[%c0_181, %c8_182, %c0_183] : memref<1x16x256xf32, #tpu.memory_space<vmem>>, vector<1x8x256xf32>
    %190 = vector.shape_cast %189 : vector<1x8x256xf32> to vector<8x256xf32>
    %191 = vector.shape_cast %95 : vector<8x256xf32> to vector<1x8x256xf32>
    tpu.vector_store %arg10[%c0_181, %c8_182, %c0_183], %191 {strides = array<i32>} : memref<1x16x256xf32, #tpu.memory_space<vmem>>, vector<1x8x256xf32>,
    return
  }
  func.func @transform_0(%arg0: i32) -> (i32, i32, i32) {
    %c0_i32 = arith.constant 0 : i32
    %c0_i32_0 = arith.constant 0 : i32
    %c0_i32_1 = arith.constant 0 : i32
    return %arg0, %c0_i32, %c0_i32_0 : i32, i32, i32
  }
  func.func @transform_1(%arg0: i32) -> (i32, i32, i32) {
    %c0_i32 = arith.constant 0 : i32
    %c0_i32_0 = arith.constant 0 : i32
    %c0_i32_1 = arith.constant 0 : i32
    return %arg0, %c0_i32, %c0_i32_0 : i32, i32, i32
  }
  func.func @transform_2(%arg0: i32) -> (i32, i32, i32) {
    %c0_i32 = arith.constant 0 : i32
    %c0_i32_0 = arith.constant 0 : i32
    %c0_i32_1 = arith.constant 0 : i32
    %c0_i32_2 = arith.constant 0 : i32
    return %c0_i32, %c0_i32_0, %c0_i32_1 : i32, i32, i32
  }
  func.func @transform_3(%arg0: i32) -> (i32, i32, i32) {
    %c0_i32 = arith.constant 0 : i32
    %c0_i32_0 = arith.constant 0 : i32
    %c0_i32_1 = arith.constant 0 : i32
    %c0_i32_2 = arith.constant 0 : i32
    return %c0_i32, %c0_i32_0, %c0_i32_1 : i32, i32, i32
  }
  func.func @transform_4(%arg0: i32) -> (i32, i32, i32) {
    %c0_i32 = arith.constant 0 : i32
    %c0_i32_0 = arith.constant 0 : i32
    %c0_i32_1 = arith.constant 0 : i32
    %c0_i32_2 = arith.constant 0 : i32
    return %c0_i32, %c0_i32_0, %c0_i32_1 : i32, i32, i32
  }
  func.func @transform_5(%arg0: i32) -> (i32, i32, i32) {
    %c0_i32 = arith.constant 0 : i32
    %c0_i32_0 = arith.constant 0 : i32
    %c0_i32_1 = arith.constant 0 : i32
    %c0_i32_2 = arith.constant 0 : i32
    return %c0_i32, %c0_i32_0, %c0_i32_1 : i32, i32, i32
  }
  func.func @transform_6(%arg0: i32) -> (i32, i32, i32) {
    %c0_i32 = arith.constant 0 : i32
    %c0_i32_0 = arith.constant 0 : i32
    %c0_i32_1 = arith.constant 0 : i32
    %c0_i32_2 = arith.constant 0 : i32
    return %c0_i32, %c0_i32_0, %c0_i32_1 : i32, i32, i32
  }
  func.func @transform_7(%arg0: i32) -> (i32, i32, i32) {
    %c0_i32 = arith.constant 0 : i32
    %c0_i32_0 = arith.constant 0 : i32
    %c0_i32_1 = arith.constant 0 : i32
    %c0_i32_2 = arith.constant 0 : i32
    return %c0_i32, %c0_i32_0, %c0_i32_1 : i32, i32, i32
  }
  func.func @transform_8(%arg0: i32) -> (i32, i32, i32) {
    %c0_i32 = arith.constant 0 : i32
    %c0_i32_0 = arith.constant 0 : i32
    %c0_i32_1 = arith.constant 0 : i32
    %c0_i32_2 = arith.constant 0 : i32
    return %c0_i32, %c0_i32_0, %c0_i32_1 : i32, i32, i32
  }
  func.func @transform_9(%arg0: i32) -> (i32, i32, i32) {
    %c0_i32 = arith.constant 0 : i32
    %c0_i32_0 = arith.constant 0 : i32
    %c0_i32_1 = arith.constant 0 : i32
    return %arg0, %c0_i32, %c0_i32_0 : i32, i32, i32
  }
}

</mosaic_0001>

<llo_original>
// kernel: tpu_custom_call.1
$region0: #{tpu_custom_call.1}
  #allocation0 [shape = 'u32[]', space=smem, size = 0x4, offset = 0x4, fixed_abs, tag = 'smem constant byte address 0x4 - core index']
  #allocation1 [shape = 'u32[144,128]{1,0:T(1,128)}', space=vmem, size = 0x12000, scoped, tag = 'internal scratch']
  #allocation2 [shape = 'f32[32,386]{1,0:T(8,128)}', space=vmem, size = 0x10000, scoped, tag = 'scratch operand']
  #allocation3 [shape = 'f32[160,256]{1,0:T(8,128)}', space=vmem, size = 0x28000, scoped, tag = 'scratch operand']
  %s0 = inlined_call_operand.vmem [shape: f32[2,16,256], index: 0, kind: input, shape index: {}]
  %s1 = inlined_call_operand.vmem [shape: f32[2,256,1], index: 1, kind: input, shape index: {}]
  %s2 = inlined_call_operand.vmem [shape: f32[2,32,8], index: 2, kind: input, shape index: {}]
  %s3 = inlined_call_operand.vmem [shape: f32[2,32,1], index: 3, kind: input, shape index: {}]
  %s4 = inlined_call_operand.vmem [shape: f32[4,64,160], index: 4, kind: input, shape index: {}]
  %s5 = inlined_call_operand.vmem [shape: f32[4,64,32], index: 5, kind: input, shape index: {}]
  %s6 = inlined_call_operand.vmem [shape: f32[4,64,1], index: 6, kind: input, shape index: {}]
  %s7 = inlined_call_operand.vmem [shape: f32[2,8,32], index: 7, kind: input, shape index: {}]
  %s8 = inlined_call_operand.vmem [shape: f32[2,8,1], index: 8, kind: input, shape index: {}]
  %s9 = inlined_call_operand.hbm [shape: f32[2,16,256], index: 9, kind: output, shape index: {}]
  %s10 = sld [smem:[#allocation0]]
  $region69: #{tpu_custom_call.1} parent=0
    _
  %s12 = ssub.s32 1, %s10
  %s13 = scalar_select 0, %s12, %s10
  $region1: #{tpu_custom_call.1} parent=0
    #allocation4 [shape = 'u8[32768]{0}', space=vmem, size = 0x8000, scoped, tag = 'output window, operand 0']
    #allocation5 [shape = 's32[2]{0}', space=sflag, size = 0x8, scoped, tag = 'scoped memory for tpu_custom_call.1']
    %14 = vsyncpa [#allocation5], 0
    %s15 = scalar_lea.sflag [#allocation5], 1
    %16 = vsyncpa %s15, 0
    loop: start=0, step=1, limit=4
    $region2: #{tpu_custom_call.1} parent=1 // loop_pre_header
      _
    $region3: #{tpu_custom_call.1} parent=1 // loop_header
      %s18 = sphi 0, %s22
      %p19 = scmp.ge.s32.totalorder %s18, 4
      %s28 = sphi 0, %s30
      %s31 = sphi 0, %s28
      %s32 = sphi 0, %s31
      %s48 = sphi 0, %s32
      %s54 = sphi 0, %s56
      %s57 = sphi 0, %s54
      %s58 = sphi 0, %s57
      %s74 = sphi 0, %s58
      %s78 = sphi 0, %s78
      %s80 = sphi 0, %s78
      %s81 = sphi 0, %s80
      %s95 = sphi 0, %s81
      %s99 = sphi 0, %s99
      %s101 = sphi 0, %s99
      %s102 = sphi 0, %s101
      %s116 = sphi 0, %s102
      %s120 = sphi 0, %s120
      %s122 = sphi 0, %s120
      %s123 = sphi 0, %s122
      %s137 = sphi 0, %s123
      %s141 = sphi 0, %s141
      %s143 = sphi 0, %s141
      %s144 = sphi 0, %s143
      %s158 = sphi 0, %s144
      %s162 = sphi 0, %s162
      %s164 = sphi 0, %s162
      %s165 = sphi 0, %s164
      %s179 = sphi 0, %s165
      %s183 = sphi 0, %s183
      %s185 = sphi 0, %s183
      %s186 = sphi 0, %s185
      %s200 = sphi 0, %s186
      %s204 = sphi 0, %s204
      %s206 = sphi 0, %s204
      %s207 = sphi 0, %s206
      %s221 = sphi 0, %s207
      %s227 = sphi 0, %s229
      %s230 = sphi 0, %s227
      %s231 = sphi 0, %s230
      %s247 = sphi 0, %s231
    $region4: #{tpu_custom_call.1} parent=1 // loop_header_branch
      %21 = sbr.rel (%p19) target = $region8
    $region5: #{tpu_custom_call.1} parent=1 // loop_body
      %s23 = ssub.s32 %s18, 1
      %s24 = ssub.s32 %s18, 2
      %s25 = sadd.s32 %s18, 1
      %s26 = ssub.s32 %s18, %s25
      %p27 = scmp.eq.s32.totalorder %s26, 0
      %s29 = sadd.s32 %s28, 1
      %s30 = scalar_select %p27, %s28, %s29
      %p33 = pneg %p27
      %p34 = scmp.eq.s32.totalorder %s18, 1
      %p35 = por %p33, %p34
      %p36 = scmp.ne.s32.totalorder %s28, %s31
      %p37 = scmp.eq.s32.totalorder %s18, 0
      %p38 = por %p36, %p37
      %p39 = scmp.ne.s32.totalorder %s28, %s31
      %p40 = scmp.eq.s32.totalorder %s23, 1
      %p41 = por %p39, %p40
      %p42 = scmp.ne.s32.totalorder %s31, %s32
      %p43 = scmp.eq.s32.totalorder %s23, 0
      %p44 = por %p42, %p43
      %p45 = scmp.ne.s32.totalorder %s31, %s32
      %p46 = scmp.eq.s32.totalorder %s24, 1
      %p47 = por %p45, %p46
      %p49 = scmp.ne.s32.totalorder %s32, %s48
      %p50 = scmp.eq.s32.totalorder %s24, 0
      %p51 = por %p49, %p50
      %s52 = ssub.s32 %s18, %s25
      %p53 = scmp.eq.s32.totalorder %s52, 0
      %s55 = sadd.s32 %s54, 1
      %s56 = scalar_select %p53, %s54, %s55
      %p59 = pneg %p53
      %p60 = scmp.eq.s32.totalorder %s18, 1
      %p61 = por %p59, %p60
      %p62 = scmp.ne.s32.totalorder %s54, %s57
      %p63 = scmp.eq.s32.totalorder %s18, 0
      %p64 = por %p62, %p63
      %p65 = scmp.ne.s32.totalorder %s54, %s57
      %p66 = scmp.eq.s32.totalorder %s23, 1
      %p67 = por %p65, %p66
      %p68 = scmp.ne.s32.totalorder %s57, %s58
      %p69 = scmp.eq.s32.totalorder %s23, 0
      %p70 = por %p68, %p69
      %p71 = scmp.ne.s32.totalorder %s57, %s58
      %p72 = scmp.eq.s32.totalorder %s24, 1
      %p73 = por %p71, %p72
      %p75 = scmp.ne.s32.totalorder %s58, %s74
      %p76 = scmp.eq.s32.totalorder %s24, 0
      %p77 = por %p75, %p76
      %s79 = sadd.s32 %s78, 1
      %p82 = scmp.eq.s32.totalorder %s18, 1
      %p83 = scmp.ne.s32.totalorder %s78, %s80
      %p84 = scmp.eq.s32.totalorder %s18, 0
      %p85 = por %p83, %p84
      %p86 = scmp.ne.s32.totalorder %s78, %s80
      %p87 = scmp.eq.s32.totalorder %s23, 1
      %p88 = por %p86, %p87
      %p89 = scmp.ne.s32.totalorder %s80, %s81
      %p90 = scmp.eq.s32.totalorder %s23, 0
      %p91 = por %p89, %p90
      %p92 = scmp.ne.s32.totalorder %s80, %s81
      %p93 = scmp.eq.s32.totalorder %s24, 1
      %p94 = por %p92, %p93
      %p96 = scmp.ne.s32.totalorder %s81, %s95
      %p97 = scmp.eq.s32.totalorder %s24, 0
      %p98 = por %p96, %p97
      %s100 = sadd.s32 %s99, 1
      %p103 = scmp.eq.s32.totalorder %s18, 1
      %p104 = scmp.ne.s32.totalorder %s99, %s101
      %p105 = scmp.eq.s32.totalorder %s18, 0
      %p106 = por %p104, %p105
      %p107 = scmp.ne.s32.totalorder %s99, %s101
      %p108 = scmp.eq.s32.totalorder %s23, 1
      %p109 = por %p107, %p108
      %p110 = scmp.ne.s32.totalorder %s101, %s102
      %p111 = scmp.eq.s32.totalorder %s23, 0
      %p112 = por %p110, %p111
      %p113 = scmp.ne.s32.totalorder %s101, %s102
      %p114 = scmp.eq.s32.totalorder %s24, 1
      %p115 = por %p113, %p114
      %p117 = scmp.ne.s32.totalorder %s102, %s116
      %p118 = scmp.eq.s32.totalorder %s24, 0
      %p119 = por %p117, %p118
      %s121 = sadd.s32 %s120, 1
      %p124 = scmp.eq.s32.totalorder %s18, 1
      %p125 = scmp.ne.s32.totalorder %s120, %s122
      %p126 = scmp.eq.s32.totalorder %s18, 0
      %p127 = por %p125, %p126
      %p128 = scmp.ne.s32.totalorder %s120, %s122
      %p129 = scmp.eq.s32.totalorder %s23, 1
      %p130 = por %p128, %p129
      %p131 = scmp.ne.s32.totalorder %s122, %s123
      %p132 = scmp.eq.s32.totalorder %s23, 0
      %p133 = por %p131, %p132
      %p134 = scmp.ne.s32.totalorder %s122, %s123
      %p135 = scmp.eq.s32.totalorder %s24, 1
      %p136 = por %p134, %p135
      %p138 = scmp.ne.s32.totalorder %s123, %s137
      %p139 = scmp.eq.s32.totalorder %s24, 0
      %p140 = por %p138, %p139
      %s142 = sadd.s32 %s141, 1
      %p145 = scmp.eq.s32.totalorder %s18, 1
      %p146 = scmp.ne.s32.totalorder %s141, %s143
      %p147 = scmp.eq.s32.totalorder %s18, 0
      %p148 = por %p146, %p147
      %p149 = scmp.ne.s32.totalorder %s141, %s143
      %p150 = scmp.eq.s32.totalorder %s23, 1
      %p151 = por %p149, %p150
      %p152 = scmp.ne.s32.totalorder %s143, %s144
      %p153 = scmp.eq.s32.totalorder %s23, 0
      %p154 = por %p152, %p153
      %p155 = scmp.ne.s32.totalorder %s143, %s144
      %p156 = scmp.eq.s32.totalorder %s24, 1
      %p157 = por %p155, %p156
      %p159 = scmp.ne.s32.totalorder %s144, %s158
      %p160 = scmp.eq.s32.totalorder %s24, 0
      %p161 = por %p159, %p160
      %s163 = sadd.s32 %s162, 1
      %p166 = scmp.eq.s32.totalorder %s18, 1
      %p167 = scmp.ne.s32.totalorder %s162, %s164
      %p168 = scmp.eq.s32.totalorder %s18, 0
      %p169 = por %p167, %p168
      %p170 = scmp.ne.s32.totalorder %s162, %s164
      %p171 = scmp.eq.s32.totalorder %s23, 1
      %p172 = por %p170, %p171
      %p173 = scmp.ne.s32.totalorder %s164, %s165
      %p174 = scmp.eq.s32.totalorder %s23, 0
      %p175 = por %p173, %p174
      %p176 = scmp.ne.s32.totalorder %s164, %s165
      %p177 = scmp.eq.s32.totalorder %s24, 1
      %p178 = por %p176, %p177
      %p180 = scmp.ne.s32.totalorder %s165, %s179
      %p181 = scmp.eq.s32.totalorder %s24, 0
      %p182 = por %p180, %p181
      %s184 = sadd.s32 %s183, 1
      %p187 = scmp.eq.s32.totalorder %s18, 1
      %p188 = scmp.ne.s32.totalorder %s183, %s185
      %p189 = scmp.eq.s32.totalorder %s18, 0
      %p190 = por %p188, %p189
      %p191 = scmp.ne.s32.totalorder %s183, %s185
      %p192 = scmp.eq.s32.totalorder %s23, 1
      %p193 = por %p191, %p192
      %p194 = scmp.ne.s32.totalorder %s185, %s186
      %p195 = scmp.eq.s32.totalorder %s23, 0
      %p196 = por %p194, %p195
      %p197 = scmp.ne.s32.totalorder %s185, %s186
      %p198 = scmp.eq.s32.totalorder %s24, 1
      %p199 = por %p197, %p198
      %p201 = scmp.ne.s32.totalorder %s186, %s200
      %p202 = scmp.eq.s32.totalorder %s24, 0
      %p203 = por %p201, %p202
      %s205 = sadd.s32 %s204, 1
      %p208 = scmp.eq.s32.totalorder %s18, 1
      %p209 = scmp.ne.s32.totalorder %s204, %s206
      %p210 = scmp.eq.s32.totalorder %s18, 0
      %p211 = por %p209, %p210
      %p212 = scmp.ne.s32.totalorder %s204, %s206
      %p213 = scmp.eq.s32.totalorder %s23, 1
      %p214 = por %p212, %p213
      %p215 = scmp.ne.s32.totalorder %s206, %s207
      %p216 = scmp.eq.s32.totalorder %s23, 0
      %p217 = por %p215, %p216
      %p218 = scmp.ne.s32.totalorder %s206, %s207
      %p219 = scmp.eq.s32.totalorder %s24, 1
      %p220 = por %p218, %p219
      %p222 = scmp.ne.s32.totalorder %s207, %s221
      %p223 = scmp.eq.s32.totalorder %s24, 0
      %p224 = por %p222, %p223
      %s225 = ssub.s32 %s18, %s25
      %p226 = scmp.eq.s32.totalorder %s225, 0
      %s228 = sadd.s32 %s227, 1
      %s229 = scalar_select %p226, %s227, %s228
      %p232 = pneg %p226
      %p233 = scmp.eq.s32.totalorder %s18, 1
      %p234 = por %p232, %p233
      %p235 = scmp.ne.s32.totalorder %s227, %s230
      %p236 = scmp.eq.s32.totalorder %s18, 0
      %p237 = por %p235, %p236
      %p238 = scmp.ne.s32.totalorder %s227, %s230
      %p239 = scmp.eq.s32.totalorder %s23, 1
      %p240 = por %p238, %p239
      %p241 = scmp.ne.s32.totalorder %s230, %s231
      %p242 = scmp.eq.s32.totalorder %s23, 0
      %p243 = por %p241, %p242
      %p244 = scmp.ne.s32.totalorder %s230, %s231
      %p245 = scmp.eq.s32.totalorder %s24, 1
      %p246 = por %p244, %p245
      %p248 = scmp.ne.s32.totalorder %s231, %s247
      %p249 = scmp.eq.s32.totalorder %s24, 0
      %p250 = por %p248, %p249
      %p251 = scmp.le.s32.totalorder 1, %s18
      %p252 = scmp.lt.s32.totalorder %s18, 3
      %p253 = pnand %p251, %p252
      %p254 = pneg %p253
      // Predicated region
      $region9: #{tpu_custom_call.1} parent=5 // pred_check
        _
      $region10: #{tpu_custom_call.1} parent=5 // pred_check_branch
        %256 = sbr.rel (%p253) target = $region12
      $region11: #{tpu_custom_call.1} parent=5 // pred_region
        %s257 = ssub.s32 %s18, 1
        // Predicated region
        $region13: #{tpu_custom_call.1} parent=11 // pred_check
          %p258 = pneg %p91
        $region14: #{tpu_custom_call.1} parent=11 // pred_check_branch
          %260 = sbr.rel (%p258) target = $region16
        $region15: #{tpu_custom_call.1} parent=11 // pred_region
          _
        $region16: #{tpu_custom_call.1} parent=11 // pred_fallthru
          _
        // Predicated region
        $region17: #{tpu_custom_call.1} parent=11 // pred_check
          %p261 = pneg %p112
        $region18: #{tpu_custom_call.1} parent=11 // pred_check_branch
          %263 = sbr.rel (%p261) target = $region20
        $region19: #{tpu_custom_call.1} parent=11 // pred_region
          _
        $region20: #{tpu_custom_call.1} parent=11 // pred_fallthru
          _
        // Predicated region
        $region21: #{tpu_custom_call.1} parent=11 // pred_check
          %p264 = pneg %p133
        $region22: #{tpu_custom_call.1} parent=11 // pred_check_branch
          %266 = sbr.rel (%p264) target = $region24
        $region23: #{tpu_custom_call.1} parent=11 // pred_region
          _
        $region24: #{tpu_custom_call.1} parent=11 // pred_fallthru
          _
        // Predicated region
        $region25: #{tpu_custom_call.1} parent=11 // pred_check
          %p267 = pneg %p154
        $region26: #{tpu_custom_call.1} parent=11 // pred_check_branch
          %269 = sbr.rel (%p267) target = $region28
        $region27: #{tpu_custom_call.1} parent=11 // pred_region
          _
        $region28: #{tpu_custom_call.1} parent=11 // pred_fallthru
          _
        // Predicated region
        $region29: #{tpu_custom_call.1} parent=11 // pred_check
          %p270 = pneg %p175
        $region30: #{tpu_custom_call.1} parent=11 // pred_check_branch
          %272 = sbr.rel (%p270) target = $region32
        $region31: #{tpu_custom_call.1} parent=11 // pred_region
          _
        $region32: #{tpu_custom_call.1} parent=11 // pred_fallthru
          _
        // Predicated region
        $region33: #{tpu_custom_call.1} parent=11 // pred_check
          %p273 = pneg %p196
        $region34: #{tpu_custom_call.1} parent=11 // pred_check_branch
          %275 = sbr.rel (%p273) target = $region36
        $region35: #{tpu_custom_call.1} parent=11 // pred_region
          _
        $region36: #{tpu_custom_call.1} parent=11 // pred_fallthru
          _
        // Predicated region
        $region37: #{tpu_custom_call.1} parent=11 // pred_check
          %p276 = pneg %p217
        $region38: #{tpu_custom_call.1} parent=11 // pred_check_branch
          %278 = sbr.rel (%p276) target = $region40
        $region39: #{tpu_custom_call.1} parent=11 // pred_region
          _
        $region40: #{tpu_custom_call.1} parent=11 // pred_fallthru
          _
      $region12: #{tpu_custom_call.1} parent=5 // pred_fallthru
        _
      %p279 = scmp.lt.s32.totalorder %s18, 2
      // Predicated region
      $region41: #{tpu_custom_call.1} parent=5 // pred_check
        %p280 = pneg %p279
      $region42: #{tpu_custom_call.1} parent=5 // pred_check_branch
        %282 = sbr.rel (%p280) target = $region44
      $region43: #{tpu_custom_call.1} parent=5 // pred_region
        // Predicated region
        $region45: #{tpu_custom_call.1} parent=43 // pred_check
          %p283 = pneg %p38
        $region46: #{tpu_custom_call.1} parent=43 // pred_check_branch
          %285 = sbr.rel (%p283) target = $region48
        $region47: #{tpu_custom_call.1} parent=43 // pred_region
          %p286 = scmp.lt.s32.totalorder %s18, 1
          %s287 = scalar_select %p286, %s18, 1
          %s288 = smul.addr %s287, 4
          %s289 = smul.addr %s288, 8
          %s290 = scalar_lea.vmem %s0, %s289
        $region48: #{tpu_custom_call.1} parent=43 // pred_fallthru
          _
        // Predicated region
        $region49: #{tpu_custom_call.1} parent=43 // pred_check
          %p291 = pneg %p64
        $region50: #{tpu_custom_call.1} parent=43 // pred_check_branch
          %293 = sbr.rel (%p291) target = $region52
        $region51: #{tpu_custom_call.1} parent=43 // pred_region
          %p294 = scmp.lt.s32.totalorder %s18, 1
          %s295 = scalar_select %p294, %s18, 1
          %s296 = smul.addr %s295, 32
          %s297 = smul.addr %s296, 8
          %s298 = scalar_lea.vmem %s1, %s297
        $region52: #{tpu_custom_call.1} parent=43 // pred_fallthru
          _
      $region44: #{tpu_custom_call.1} parent=5 // pred_fallthru
        _
      %p299 = scmp.le.s32.totalorder 1, %s18
      %p300 = scmp.lt.s32.totalorder %s18, 3
      %p301 = pnand %p299, %p300
      %p302 = pneg %p301
      // Predicated region
      $region53: #{tpu_custom_call.1} parent=5 // pred_check
        _
      $region54: #{tpu_custom_call.1} parent=5 // pred_check_branch
        %304 = sbr.rel (%p301) target = $region56
      $region55: #{tpu_custom_call.1} parent=5 // pred_region
        %s305 = ssub.s32 %s18, 1
        %p306 = scmp.lt.s32.totalorder %s23, 1
        %s307 = scalar_select %p306, %s23, 1
        %s308 = smul.addr %s307, 4
        %s309 = smul.addr %s308, 8
        %s310 = scalar_lea.vmem %s0, %s309
        %p311 = pneg %p44
        %p312 = pneg %p41
        %p313 = scmp.lt.s32.totalorder %s23, 1
        %s314 = scalar_select %p313, %s23, 1
        %s315 = smul.addr %s314, 32
        %s316 = smul.addr %s315, 8
        %s317 = scalar_lea.vmem %s1, %s316
        %p318 = pneg %p70
        %p319 = pneg %p67
        %p320 = pneg %p91
        %p321 = pneg %p88
        %p322 = pneg %p112
        %p323 = pneg %p109
        %p324 = pneg %p133
        %p325 = pneg %p130
        %p326 = pneg %p154
        %p327 = pneg %p151
        %p328 = pneg %p175
        %p329 = pneg %p172
        %p330 = pneg %p196
        %p331 = pneg %p193
        %p332 = pneg %p217
        %p333 = pneg %p214
        %p334 = pneg %p243
        %p335 = pneg %p240
        %s336 = sand.u32 %s230, 1
        %s337 = scalar_lea.sflag [#allocation5], %s336
        %s338 = sand.u32 %s230, 1
        %s339 = smul.addr %s338, 32
        %s340 = scalar_lea.vmem [#allocation4], %s339
        %p341 = scmp.lt.s32.totalorder %s23, 1
        %s342 = scalar_select %p341, %s23, 1
        %s343 = smul.addr %s342, 4
        %s344 = smul.addr %s343, 8
        %s345 = scalar_lea.vmem %s0, %s344
        %p346 = scmp.lt.s32.totalorder %s23, 1
        %s347 = scalar_select %p346, %s23, 1
        %s348 = smul.addr %s347, 32
        %s349 = smul.addr %s348, 8
        %s350 = scalar_lea.vmem %s1, %s349
        %351 = vst [vmem:[#allocation2] sm:$0xff] 0.0
        %352 = vst [vmem:[#allocation2 + $0x8] sm:$0xff] 0.0
        %353 = vst [vmem:[#allocation2 + $0x10] sm:$0xff] 0.0
        %vm354 = vcmask 15360
        %355 = vst.msk [vmem:[#allocation2 + $0x18] sm:$0xff] %vm354, 0.0
        %356 = vst [vmem:[#allocation2 + $0x20] sm:$0xff] 0.0
        %357 = vst [vmem:[#allocation2 + $0x28] sm:$0xff] 0.0
        %358 = vst [vmem:[#allocation2 + $0x30] sm:$0xff] 0.0
        %359 = vst.msk [vmem:[#allocation2 + $0x38] sm:$0xff] %vm354, 0.0
        %360 = vst [vmem:[#allocation2 + $0x40] sm:$0xff] 0.0
        %361 = vst [vmem:[#allocation2 + $0x48] sm:$0xff] 0.0
        %362 = vst [vmem:[#allocation2 + $0x50] sm:$0xff] 0.0
        %363 = vst.msk [vmem:[#allocation2 + $0x58] sm:$0xff] %vm354, 0.0
        %364 = vst [vmem:[#allocation2 + $0x60] sm:$0xff] 0.0
        %365 = vst [vmem:[#allocation2 + $0x68] sm:$0xff] 0.0
        %366 = vst [vmem:[#allocation2 + $0x70] sm:$0xff] 0.0
        %367 = vst.msk [vmem:[#allocation2 + $0x78] sm:$0xff] %vm354, 0.0
        %v368 = vld [vmem:[%s345] sm:$0xff]
        %v369 = vld [vmem:[%s345 + $0x8] sm:$0xff]
        %v370 = vld [vmem:[%s345 + $0x10] sm:$0xff]
        %v371 = vld [vmem:[%s345 + $0x18] sm:$0xff]
        %v372 = vld [vmem:[%s2] sm:$0xff]
        %v373 = vld [vmem:[%s2 + $0x8] sm:$0xff]
        %v374 = vld [vmem:[%s2 + $0x10] sm:$0xff]
        %v375 = vld [vmem:[%s2 + $0x18] sm:$0xff]
        %v376 = vld [vmem:[%s3] sm:$0xff]
        %v377 = vld [vmem:[%s3 + $0x8] sm:$0xff]
        %v378 = vld [vmem:[%s3 + $0x10] sm:$0xff]
        %v379 = vld [vmem:[%s3 + $0x18] sm:$0xff]
        %381 = vset.pattern.permute.xlu0 0
        %382 = vperm.xlu0 %381, %v376
        %v383 = vpop.permute.xlu0 %382
        %386 = vset.pattern.permute.xlu0 0
        %387 = vperm.xlu0 %386, %v377
        %v388 = vpop.permute.xlu0 %387
        %391 = vset.pattern.permute.xlu0 0
        %392 = vperm.xlu0 %391, %v378
        %v393 = vpop.permute.xlu0 %392
        %396 = vset.pattern.permute.xlu0 0
        %397 = vperm.xlu0 %396, %v379
        %v398 = vpop.permute.xlu0 %397
        %vm400 = vcmask 64512
        %v402 = vsel %vm400, %v372, 0
        %v405 = vsel %vm400, %v373, 0
        %v408 = vsel %vm400, %v374, 0
        %v411 = vsel %vm400, %v375, 0
        %413 = vmatprep.subr.mxu0 %v369
        %414 = vmatpush1.msra.mxu0 %v368
        %415 = vmatprep.subr.mxu0 0.0
        %416 = vmatpush1.msra.mxu0 0.0
        %417 = vmatprep.subr.mxu0 0.0
        %418 = vmatpush1.msra.mxu0 0.0
        %419 = vmatprep.subr.mxu0 0.0
        %420 = vmatpush1.msra.mxu0 0.0
        %421 = vmatprep.subr.mxu0 0.0
        %422 = vmatpush1.msra.mxu0 0.0
        %423 = vmatprep.subr.mxu0 0.0
        %424 = vmatpush1.msra.mxu0 0.0
        %425 = vmatprep.subr.mxu0 0.0
        %426 = vmatpush1.msra.mxu0 0.0
        %427 = vmatprep.subr.mxu0 0.0
        %428 = vmatpush1.msra.mxu0 0.0
        %429 = vmatprep.subr.mxu0 0.0
        %430 = vmatpush1.msra.mxu0 0.0
        %431 = vmatprep.subr.mxu0 0.0
        %432 = vmatpush1.msra.mxu0 0.0
        %433 = vmatprep.subr.mxu0 0.0
        %434 = vmatpush1.msra.mxu0 0.0
        %435 = vmatprep.subr.mxu0 0.0
        %436 = vmatpush1.msra.mxu0 0.0
        %437 = vmatprep.subr.mxu0 0.0
        %438 = vmatpush1.msra.mxu0 0.0
        %439 = vmatprep.subr.mxu0 0.0
        %440 = vmatpush1.msra.mxu0 0.0
        %441 = vmatprep.subr.mxu0 0.0
        %442 = vmatpush1.msra.mxu0 0.0
        %443 = vmatprep.subr.mxu0 0.0
        %444 = vmatpush1.msra.mxu0 0.0
        %445 = vmatprep.subr.mxu0 0.0
        %446 = vmatpush1.msra.mxu0 0.0
        %447 = vmatprep.subr.mxu0 0.0
        %448 = vmatpush1.msra.mxu0 0.0
        %449 = vmatprep.subr.mxu0 0.0
        %450 = vmatpush1.msra.mxu0 0.0
        %451 = vmatprep.subr.mxu0 0.0
        %452 = vmatpush1.msra.mxu0 0.0
        %453 = vmatprep.subr.mxu0 0.0
        %454 = vmatpush1.msra.mxu0 0.0
        %455 = vmatprep.subr.mxu0 0.0
        %456 = vmatpush1.msra.mxu0 0.0
        %457 = vmatprep.subr.mxu0 0.0
        %458 = vmatpush1.msra.mxu0 0.0
        %459 = vmatprep.subr.mxu0 0.0
        %460 = vmatpush1.msra.mxu0 0.0
        %461 = vmatprep.subr.mxu0 0.0
        %462 = vmatpush1.msra.mxu0 0.0
        %463 = vmatprep.subr.mxu0 0.0
        %464 = vmatpush1.msra.mxu0 0.0
        %465 = vmatprep.subr.mxu0 0.0
        %466 = vmatpush1.msra.mxu0 0.0
        %467 = vmatprep.subr.mxu0 0.0
        %468 = vmatpush1.msra.mxu0 0.0
        %469 = vmatprep.subr.mxu0 0.0
        %470 = vmatpush1.msra.mxu0 0.0
        %471 = vmatprep.subr.mxu0 0.0
        %472 = vmatpush1.msra.mxu0 0.0
        %473 = vmatprep.subr.mxu0 0.0
        %474 = vmatpush1.msra.mxu0 0.0
        %475 = vmatprep.subr.mxu0 0.0
        %476 = vmatpush1.msra.mxu0 0.0
        %477 = vmatprep.mubr.f32.mxu0 0.0
        %478 = vmatmul.mubr.f32.gmra.mrb[0].mxu0 %v402
        %v479 = vpop.f32.mrb[0].mxu0
        %v480 = vadd.f32 %v383, %v479
        %v481 = vpop.f32.mrb[0].mxu0
        %v482 = vadd.f32 %v383, %v481
        %483 = vmatprep.mubr.f32.mxu0 0.0
        %484 = vmatmul.mubr.f32.gmra.mrb[0].mxu0 %v405
        %v485 = vpop.f32.mrb[0].mxu0
        %v486 = vadd.f32 %v388, %v485
        %v487 = vpop.f32.mrb[0].mxu0
        %v488 = vadd.f32 %v388, %v487
        %489 = vmatprep.mubr.f32.mxu0 0.0
        %490 = vmatmul.mubr.f32.gmra.mrb[0].mxu0 %v408
        %v491 = vpop.f32.mrb[0].mxu0
        %v492 = vadd.f32 %v393, %v491
        %v493 = vpop.f32.mrb[0].mxu0
        %v494 = vadd.f32 %v393, %v493
        %495 = vmatprep.mubr.f32.mxu0 0.0
        %496 = vmatmul.mubr.f32.gmra.mrb[0].mxu0 %v411
        %v497 = vpop.f32.mrb[0].mxu0
        %v498 = vadd.f32 %v398, %v497
        %v499 = vpop.f32.mrb[0].mxu0
        %v500 = vadd.f32 %v398, %v499
        %501 = vdwg.mxu0
        %502 = vst [vmem:[#allocation2 + $0x8] sm:$0xff] %v480
        %503 = vst [vmem:[#allocation2 + $0x10] sm:$0xff] %v482
        %504 = vst [vmem:[#allocation2 + $0x28] sm:$0xff] %v486
        %505 = vst [vmem:[#allocation2 + $0x30] sm:$0xff] %v488
        %506 = vst [vmem:[#allocation2 + $0x48] sm:$0xff] %v492
        %507 = vst [vmem:[#allocation2 + $0x50] sm:$0xff] %v494
        %508 = vst [vmem:[#allocation2 + $0x68] sm:$0xff] %v498
        %509 = vst [vmem:[#allocation2 + $0x70] sm:$0xff] %v500
        %v510 = vld [vmem:[#allocation2] sm:$0xff]
        %v511 = vld [vmem:[#allocation2 + $0x8] sm:$0xff]
        %v512 = vld [vmem:[#allocation2 + $0x10] sm:$0xff]
        %v513 = vld [vmem:[#allocation2 + $0x20] sm:$0xff]
        %v514 = vld [vmem:[#allocation2 + $0x28] sm:$0xff]
        %v515 = vld [vmem:[#allocation2 + $0x30] sm:$0xff]
        %v516 = vld [vmem:[#allocation2 + $0x40] sm:$0xff]
        %v517 = vld [vmem:[#allocation2 + $0x48] sm:$0xff]
        %v518 = vld [vmem:[#allocation2 + $0x50] sm:$0xff]
        %v519 = vld [vmem:[#allocation2 + $0x60] sm:$0xff]
        %v520 = vld [vmem:[#allocation2 + $0x68] sm:$0xff]
        %v521 = vld [vmem:[#allocation2 + $0x70] sm:$0xff]
        %534 = vrot.lane.b32.xlu0 %v510, 2
        %v535 = vpop.permute.xlu0 %534
        %536 = vrot.lane.b32.xlu0 %v511, 2
        %v537 = vpop.permute.xlu0 %536
        %538 = vrot.lane.b32.xlu0 %v512, 2
        %v539 = vpop.permute.xlu0 %538
        %540 = vrot.lane.b32.xlu0 %v513, 2
        %v541 = vpop.permute.xlu0 %540
        %542 = vrot.lane.b32.xlu0 %v514, 2
        %v543 = vpop.permute.xlu0 %542
        %544 = vrot.lane.b32.xlu0 %v515, 2
        %v545 = vpop.permute.xlu0 %544
        %546 = vrot.lane.b32.xlu0 %v516, 2
        %v547 = vpop.permute.xlu0 %546
        %548 = vrot.lane.b32.xlu0 %v517, 2
        %v549 = vpop.permute.xlu0 %548
        %550 = vrot.lane.b32.xlu0 %v518, 2
        %v551 = vpop.permute.xlu0 %550
        %552 = vrot.lane.b32.xlu0 %v519, 2
        %v553 = vpop.permute.xlu0 %552
        %554 = vrot.lane.b32.xlu0 %v520, 2
        %v555 = vpop.permute.xlu0 %554
        %556 = vrot.lane.b32.xlu0 %v521, 2
        %v557 = vpop.permute.xlu0 %556
        %v558 = vsel %vm354, %v535, %v537
        %v559 = vsel %vm354, %v537, %v539
        %v560 = vsel %vm354, %v541, %v543
        %v561 = vsel %vm354, %v543, %v545
        %v562 = vsel %vm354, %v547, %v549
        %v563 = vsel %vm354, %v549, %v551
        %v564 = vsel %vm354, %v553, %v555
        %v565 = vsel %vm354, %v555, %v557
        %574 = vst [vmem:[#allocation3] sm:$0xff] %v558
        %575 = vst [vmem:[#allocation3 + $0x8] sm:$0xff] %v559
        %576 = vst [vmem:[#allocation3 + $0x10] sm:$0xff] %v560
        %577 = vst [vmem:[#allocation3 + $0x18] sm:$0xff] %v561
        %578 = vst [vmem:[#allocation3 + $0x20] sm:$0xff] %v562
        %579 = vst [vmem:[#allocation3 + $0x28] sm:$0xff] %v563
        %580 = vst [vmem:[#allocation3 + $0x30] sm:$0xff] %v564
        %581 = vst [vmem:[#allocation3 + $0x38] sm:$0xff] %v565
        %v582 = vld [vmem:[#allocation2] sm:$0xff]
        %v583 = vld [vmem:[#allocation2 + $0x8] sm:$0xff]
        %v584 = vld [vmem:[#allocation2 + $0x10] sm:$0xff]
        %v585 = vld [vmem:[#allocation2 + $0x20] sm:$0xff]
        %v586 = vld [vmem:[#allocation2 + $0x28] sm:$0xff]
        %v587 = vld [vmem:[#allocation2 + $0x30] sm:$0xff]
        %v588 = vld [vmem:[#allocation2 + $0x40] sm:$0xff]
        %v589 = vld [vmem:[#allocation2 + $0x48] sm:$0xff]
        %v590 = vld [vmem:[#allocation2 + $0x50] sm:$0xff]
        %v591 = vld [vmem:[#allocation2 + $0x60] sm:$0xff]
        %v592 = vld [vmem:[#allocation2 + $0x68] sm:$0xff]
        %v593 = vld [vmem:[#allocation2 + $0x70] sm:$0xff]
        %606 = vrot.lane.b32.xlu0 %v582, 1
        %v607 = vpop.permute.xlu0 %606
        %608 = vrot.lane.b32.xlu0 %v583, 1
        %v609 = vpop.permute.xlu0 %608
        %610 = vrot.lane.b32.xlu0 %v584, 1
        %v611 = vpop.permute.xlu0 %610
        %612 = vrot.lane.b32.xlu0 %v585, 1
        %v613 = vpop.permute.xlu0 %612
        %614 = vrot.lane.b32.xlu0 %v586, 1
        %v615 = vpop.permute.xlu0 %614
        %616 = vrot.lane.b32.xlu0 %v587, 1
        %v617 = vpop.permute.xlu0 %616
        %618 = vrot.lane.b32.xlu0 %v588, 1
        %v619 = vpop.permute.xlu0 %618
        %620 = vrot.lane.b32.xlu0 %v589, 1
        %v621 = vpop.permute.xlu0 %620
        %622 = vrot.lane.b32.xlu0 %v590, 1
        %v623 = vpop.permute.xlu0 %622
        %624 = vrot.lane.b32.xlu0 %v591, 1
        %v625 = vpop.permute.xlu0 %624
        %626 = vrot.lane.b32.xlu0 %v592, 1
        %v627 = vpop.permute.xlu0 %626
        %628 = vrot.lane.b32.xlu0 %v593, 1
        %v629 = vpop.permute.xlu0 %628
        %vm630 = vcmask 7168
        %v631 = vsel %vm630, %v607, %v609
        %v632 = vsel %vm630, %v609, %v611
        %v633 = vsel %vm630, %v613, %v615
        %v634 = vsel %vm630, %v615, %v617
        %v635 = vsel %vm630, %v619, %v621
        %v636 = vsel %vm630, %v621, %v623
        %v637 = vsel %vm630, %v625, %v627
        %v638 = vsel %vm630, %v627, %v629
        %647 = vst [vmem:[#allocation3 + $0x40] sm:$0xff] %v631
        %648 = vst [vmem:[#allocation3 + $0x48] sm:$0xff] %v632
        %649 = vst [vmem:[#allocation3 + $0x50] sm:$0xff] %v633
        %650 = vst [vmem:[#allocation3 + $0x58] sm:$0xff] %v634
        %651 = vst [vmem:[#allocation3 + $0x60] sm:$0xff] %v635
        %652 = vst [vmem:[#allocation3 + $0x68] sm:$0xff] %v636
        %653 = vst [vmem:[#allocation3 + $0x70] sm:$0xff] %v637
        %654 = vst [vmem:[#allocation3 + $0x78] sm:$0xff] %v638
        %v655 = vld [vmem:[#allocation2 + $0x8] sm:$0xff]
        %v656 = vld [vmem:[#allocation2 + $0x10] sm:$0xff]
        %v657 = vld [vmem:[#allocation2 + $0x28] sm:$0xff]
        %v658 = vld [vmem:[#allocation2 + $0x30] sm:$0xff]
        %v659 = vld [vmem:[#allocation2 + $0x48] sm:$0xff]
        %v660 = vld [vmem:[#allocation2 + $0x50] sm:$0xff]
        %v661 = vld [vmem:[#allocation2 + $0x68] sm:$0xff]
        %v662 = vld [vmem:[#allocation2 + $0x70] sm:$0xff]
        %663 = vst [vmem:[#allocation3 + $0x80] sm:$0xff] %v655
        %664 = vst [vmem:[#allocation3 + $0x88] sm:$0xff] %v656
        %665 = vst [vmem:[#allocation3 + $0x90] sm:$0xff] %v657
        %666 = vst [vmem:[#allocation3 + $0x98] sm:$0xff] %v658
        %667 = vst [vmem:[#allocation3 + $0xa0] sm:$0xff] %v659
        %668 = vst [vmem:[#allocation3 + $0xa8] sm:$0xff] %v660
        %669 = vst [vmem:[#allocation3 + $0xb0] sm:$0xff] %v661
        %670 = vst [vmem:[#allocation3 + $0xb8] sm:$0xff] %v662
        %v671 = vld [vmem:[#allocation2 + $0x8] sm:$0xff]
        %v672 = vld [vmem:[#allocation2 + $0x10] sm:$0xff]
        %v673 = vld [vmem:[#allocation2 + $0x18] sm:$0xff]
        %v674 = vld [vmem:[#allocation2 + $0x28] sm:$0xff]
        %v675 = vld [vmem:[#allocation2 + $0x30] sm:$0xff]
        %v676 = vld [vmem:[#allocation2 + $0x38] sm:$0xff]
        %v677 = vld [vmem:[#allocation2 + $0x48] sm:$0xff]
        %v678 = vld [vmem:[#allocation2 + $0x50] sm:$0xff]
        %v679 = vld [vmem:[#allocation2 + $0x58] sm:$0xff]
        %v680 = vld [vmem:[#allocation2 + $0x68] sm:$0xff]
        %v681 = vld [vmem:[#allocation2 + $0x70] sm:$0xff]
        %v682 = vld [vmem:[#allocation2 + $0x78] sm:$0xff]
        %695 = vrot.lane.b32.xlu0 %v671, 127
        %v696 = vpop.permute.xlu0 %695
        %697 = vrot.lane.b32.xlu0 %v672, 127
        %v698 = vpop.permute.xlu0 %697
        %699 = vrot.lane.b32.xlu0 %v673, 127
        %v700 = vpop.permute.xlu0 %699
        %701 = vrot.lane.b32.xlu0 %v674, 127
        %v702 = vpop.permute.xlu0 %701
        %703 = vrot.lane.b32.xlu0 %v675, 127
        %v704 = vpop.permute.xlu0 %703
        %705 = vrot.lane.b32.xlu0 %v676, 127
        %v706 = vpop.permute.xlu0 %705
        %707 = vrot.lane.b32.xlu0 %v677, 127
        %v708 = vpop.permute.xlu0 %707
        %709 = vrot.lane.b32.xlu0 %v678, 127
        %v710 = vpop.permute.xlu0 %709
        %711 = vrot.lane.b32.xlu0 %v679, 127
        %v712 = vpop.permute.xlu0 %711
        %713 = vrot.lane.b32.xlu0 %v680, 127
        %v714 = vpop.permute.xlu0 %713
        %715 = vrot.lane.b32.xlu0 %v681, 127
        %v716 = vpop.permute.xlu0 %715
        %717 = vrot.lane.b32.xlu0 %v682, 127
        %v718 = vpop.permute.xlu0 %717
        %vm719 = vcmask 1039360
        %v720 = vsel %vm719, %v696, %v698
        %v721 = vsel %vm719, %v698, %v700
        %v722 = vsel %vm719, %v702, %v704
        %v723 = vsel %vm719, %v704, %v706
        %v724 = vsel %vm719, %v708, %v710
        %v725 = vsel %vm719, %v710, %v712
        %v726 = vsel %vm719, %v714, %v716
        %v727 = vsel %vm719, %v716, %v718
        %736 = vst [vmem:[#allocation3 + $0xc0] sm:$0xff] %v720
        %737 = vst [vmem:[#allocation3 + $0xc8] sm:$0xff] %v721
        %738 = vst [vmem:[#allocation3 + $0xd0] sm:$0xff] %v722
        %739 = vst [vmem:[#allocation3 + $0xd8] sm:$0xff] %v723
        %740 = vst [vmem:[#allocation3 + $0xe0] sm:$0xff] %v724
        %741 = vst [vmem:[#allocation3 + $0xe8] sm:$0xff] %v725
        %742 = vst [vmem:[#allocation3 + $0xf0] sm:$0xff] %v726
        %743 = vst [vmem:[#allocation3 + $0xf8] sm:$0xff] %v727
        %v744 = vld [vmem:[#allocation2 + $0x8] sm:$0xff]
        %v745 = vld [vmem:[#allocation2 + $0x10] sm:$0xff]
        %v746 = vld [vmem:[#allocation2 + $0x18] sm:$0xff]
        %v747 = vld [vmem:[#allocation2 + $0x28] sm:$0xff]
        %v748 = vld [vmem:[#allocation2 + $0x30] sm:$0xff]
        %v749 = vld [vmem:[#allocation2 + $0x38] sm:$0xff]
        %v750 = vld [vmem:[#allocation2 + $0x48] sm:$0xff]
        %v751 = vld [vmem:[#allocation2 + $0x50] sm:$0xff]
        %v752 = vld [vmem:[#allocation2 + $0x58] sm:$0xff]
        %v753 = vld [vmem:[#allocation2 + $0x68] sm:$0xff]
        %v754 = vld [vmem:[#allocation2 + $0x70] sm:$0xff]
        %v755 = vld [vmem:[#allocation2 + $0x78] sm:$0xff]
        %768 = vrot.lane.b32.xlu0 %v744, 126
        %v769 = vpop.permute.xlu0 %768
        %770 = vrot.lane.b32.xlu0 %v745, 126
        %v771 = vpop.permute.xlu0 %770
        %772 = vrot.lane.b32.xlu0 %v746, 126
        %v773 = vpop.permute.xlu0 %772
        %774 = vrot.lane.b32.xlu0 %v747, 126
        %v775 = vpop.permute.xlu0 %774
        %776 = vrot.lane.b32.xlu0 %v748, 126
        %v777 = vpop.permute.xlu0 %776
        %778 = vrot.lane.b32.xlu0 %v749, 126
        %v779 = vpop.permute.xlu0 %778
        %780 = vrot.lane.b32.xlu0 %v750, 126
        %v781 = vpop.permute.xlu0 %780
        %782 = vrot.lane.b32.xlu0 %v751, 126
        %v783 = vpop.permute.xlu0 %782
        %784 = vrot.lane.b32.xlu0 %v752, 126
        %v785 = vpop.permute.xlu0 %784
        %786 = vrot.lane.b32.xlu0 %v753, 126
        %v787 = vpop.permute.xlu0 %786
        %788 = vrot.lane.b32.xlu0 %v754, 126
        %v789 = vpop.permute.xlu0 %788
        %790 = vrot.lane.b32.xlu0 %v755, 126
        %v791 = vpop.permute.xlu0 %790
        %vm792 = vcmask 1031168
        %v793 = vsel %vm792, %v769, %v771
        %v794 = vsel %vm792, %v771, %v773
        %v795 = vsel %vm792, %v775, %v777
        %v796 = vsel %vm792, %v777, %v779
        %v797 = vsel %vm792, %v781, %v783
        %v798 = vsel %vm792, %v783, %v785
        %v799 = vsel %vm792, %v787, %v789
        %v800 = vsel %vm792, %v789, %v791
        %809 = vst [vmem:[#allocation3 + $0x100] sm:$0xff] %v793
        %810 = vst [vmem:[#allocation3 + $0x108] sm:$0xff] %v794
        %811 = vst [vmem:[#allocation3 + $0x110] sm:$0xff] %v795
        %812 = vst [vmem:[#allocation3 + $0x118] sm:$0xff] %v796
        %813 = vst [vmem:[#allocation3 + $0x120] sm:$0xff] %v797
        %814 = vst [vmem:[#allocation3 + $0x128] sm:$0xff] %v798
        %815 = vst [vmem:[#allocation3 + $0x130] sm:$0xff] %v799
        %816 = vst [vmem:[#allocation3 + $0x138] sm:$0xff] %v800
        %v817 = vld [vmem:[%s4] sm:$0xff]
        %v818 = vld [vmem:[%s4 + $0x8] sm:$0xff]
        %v819 = vld [vmem:[%s4 + $0x10] sm:$0xff]
        %v820 = vld [vmem:[%s4 + $0x18] sm:$0xff]
        %v821 = vld [vmem:[%s4 + $0x20] sm:$0xff]
        %v822 = vld [vmem:[%s4 + $0x28] sm:$0xff]
        %v823 = vld [vmem:[%s4 + $0x30] sm:$0xff]
        %v824 = vld [vmem:[%s4 + $0x38] sm:$0xff]
        %v825 = vld [vmem:[%s4 + $0x40] sm:$0xff]
        %v826 = vld [vmem:[%s4 + $0x48] sm:$0xff]
        %v827 = vld [vmem:[%s4 + $0x50] sm:$0xff]
        %v828 = vld [vmem:[%s4 + $0x58] sm:$0xff]
        %v829 = vld [vmem:[%s4 + $0x60] sm:$0xff]
        %v830 = vld [vmem:[%s4 + $0x68] sm:$0xff]
        %v831 = vld [vmem:[%s4 + $0x70] sm:$0xff]
        %v832 = vld [vmem:[%s4 + $0x78] sm:$0xff]
        %v833 = vld [vmem:[#allocation3] sm:$0xff]
        %v834 = vld [vmem:[#allocation3 + $0x8] sm:$0xff]
        %v835 = vld [vmem:[#allocation3 + $0x10] sm:$0xff]
        %v836 = vld [vmem:[#allocation3 + $0x18] sm:$0xff]
        %v837 = vld [vmem:[#allocation3 + $0x20] sm:$0xff]
        %v838 = vld [vmem:[#allocation3 + $0x28] sm:$0xff]
        %v839 = vld [vmem:[#allocation3 + $0x30] sm:$0xff]
        %v840 = vld [vmem:[#allocation3 + $0x38] sm:$0xff]
        %v841 = vld [vmem:[#allocation3 + $0x40] sm:$0xff]
        %v842 = vld [vmem:[#allocation3 + $0x48] sm:$0xff]
        %v843 = vld [vmem:[#allocation3 + $0x50] sm:$0xff]
        %v844 = vld [vmem:[#allocation3 + $0x58] sm:$0xff]
        %v845 = vld [vmem:[#allocation3 + $0x60] sm:$0xff]
        %v846 = vld [vmem:[#allocation3 + $0x68] sm:$0xff]
        %v847 = vld [vmem:[#allocation3 + $0x70] sm:$0xff]
        %v848 = vld [vmem:[#allocation3 + $0x78] sm:$0xff]
        %v849 = vld [vmem:[#allocation3 + $0x80] sm:$0xff]
        %v850 = vld [vmem:[#allocation3 + $0x88] sm:$0xff]
        %v851 = vld [vmem:[#allocation3 + $0x90] sm:$0xff]
        %v852 = vld [vmem:[#allocation3 + $0x98] sm:$0xff]
        %v853 = vld [vmem:[#allocation3 + $0xa0] sm:$0xff]
        %v854 = vld [vmem:[#allocation3 + $0xa8] sm:$0xff]
        %v855 = vld [vmem:[#allocation3 + $0xb0] sm:$0xff]
        %v856 = vld [vmem:[#allocation3 + $0xb8] sm:$0xff]
        %v857 = vld [vmem:[#allocation3 + $0xc0] sm:$0xff]
        %v858 = vld [vmem:[#allocation3 + $0xc8] sm:$0xff]
        %v859 = vld [vmem:[#allocation3 + $0xd0] sm:$0xff]
        %v860 = vld [vmem:[#allocation3 + $0xd8] sm:$0xff]
        %v861 = vld [vmem:[#allocation3 + $0xe0] sm:$0xff]
        %v862 = vld [vmem:[#allocation3 + $0xe8] sm:$0xff]
        %v863 = vld [vmem:[#allocation3 + $0xf0] sm:$0xff]
        %v864 = vld [vmem:[#allocation3 + $0xf8] sm:$0xff]
        %v865 = vld [vmem:[#allocation3 + $0x100] sm:$0xff]
        %v866 = vld [vmem:[#allocation3 + $0x108] sm:$0xff]
        %v867 = vld [vmem:[#allocation3 + $0x110] sm:$0xff]
        %v868 = vld [vmem:[#allocation3 + $0x118] sm:$0xff]
        %v869 = vld [vmem:[#allocation3 + $0x120] sm:$0xff]
        %v870 = vld [vmem:[#allocation3 + $0x128] sm:$0xff]
        %v871 = vld [vmem:[#allocation3 + $0x130] sm:$0xff]
        %v872 = vld [vmem:[#allocation3 + $0x138] sm:$0xff]
        %v873 = vld [vmem:[%s350] sm:$0xff]
        %v874 = vld [vmem:[%s350 + $0x8] sm:$0xff]
        %v875 = vld [vmem:[%s350 + $0x10] sm:$0xff]
        %v876 = vld [vmem:[%s350 + $0x18] sm:$0xff]
        %v877 = vld [vmem:[%s350 + $0x20] sm:$0xff]
        %v878 = vld [vmem:[%s350 + $0x28] sm:$0xff]
        %v879 = vld [vmem:[%s350 + $0x30] sm:$0xff]
        %v880 = vld [vmem:[%s350 + $0x38] sm:$0xff]
        %882 = vset.pattern.permute.xlu0 0
        %883 = vperm.xlu0 %882, %v873
        %v884 = vpop.permute.xlu0 %883
        %887 = vset.pattern.permute.xlu0 0
        %888 = vperm.xlu0 %887, %v874
        %v889 = vpop.permute.xlu0 %888
        %892 = vset.pattern.permute.xlu0 0
        %893 = vperm.xlu0 %892, %v875
        %v894 = vpop.permute.xlu0 %893
        %897 = vset.pattern.permute.xlu0 0
        %898 = vperm.xlu0 %897, %v876
        %v899 = vpop.permute.xlu0 %898
        %902 = vset.pattern.permute.xlu0 0
        %903 = vperm.xlu0 %902, %v877
        %v904 = vpop.permute.xlu0 %903
        %907 = vset.pattern.permute.xlu0 0
        %908 = vperm.xlu0 %907, %v878
        %v909 = vpop.permute.xlu0 %908
        %912 = vset.pattern.permute.xlu0 0
        %913 = vperm.xlu0 %912, %v879
        %v914 = vpop.permute.xlu0 %913
        %917 = vset.pattern.permute.xlu0 0
        %918 = vperm.xlu0 %917, %v880
        %v919 = vpop.permute.xlu0 %918
        %vm921 = vcmask 261120
        %v923 = vsel %vm921, %v818, 0
        %v926 = vsel %vm921, %v820, 0
        %v929 = vsel %vm921, %v822, 0
        %v932 = vsel %vm921, %v824, 0
        %v935 = vsel %vm921, %v826, 0
        %v938 = vsel %vm921, %v828, 0
        %v941 = vsel %vm921, %v830, 0
        %v944 = vsel %vm921, %v832, 0
        %946 = vmatprep.subr.mxu0 %v834
        %947 = vmatpush1.msra.mxu0 %v833
        %948 = vmatprep.subr.mxu0 %v836
        %949 = vmatpush1.msra.mxu0 %v835
        %950 = vmatprep.subr.mxu0 %v838
        %951 = vmatpush1.msra.mxu0 %v837
        %952 = vmatprep.subr.mxu0 %v840
        %953 = vmatpush1.msra.mxu0 %v839
        %954 = vmatprep.subr.mxu0 %v842
        %955 = vmatpush1.msra.mxu0 %v841
        %956 = vmatprep.subr.mxu0 %v844
        %957 = vmatpush1.msra.mxu0 %v843
        %958 = vmatprep.subr.mxu0 %v846
        %959 = vmatpush1.msra.mxu0 %v845
        %960 = vmatprep.subr.mxu0 %v848
        %961 = vmatpush1.msra.mxu0 %v847
        %962 = vmatprep.subr.mxu0 %v850
        %963 = vmatpush1.msra.mxu0 %v849
        %964 = vmatprep.subr.mxu0 %v852
        %965 = vmatpush1.msra.mxu0 %v851
        %966 = vmatprep.subr.mxu0 %v854
        %967 = vmatpush1.msra.mxu0 %v853
        %968 = vmatprep.subr.mxu0 %v856
        %969 = vmatpush1.msra.mxu0 %v855
        %970 = vmatprep.subr.mxu0 %v858
        %971 = vmatpush1.msra.mxu0 %v857
        %972 = vmatprep.subr.mxu0 %v860
        %973 = vmatpush1.msra.mxu0 %v859
        %974 = vmatprep.subr.mxu0 %v862
        %975 = vmatpush1.msra.mxu0 %v861
        %976 = vmatprep.subr.mxu0 %v864
        %977 = vmatpush1.msra.mxu0 %v863
        %978 = vmatprep.subr.mxu0 %v866
        %979 = vmatpush1.msra.mxu0 %v865
        %980 = vmatprep.subr.mxu0 %v868
        %981 = vmatpush1.msra.mxu0 %v867
        %982 = vmatprep.subr.mxu0 %v870
        %983 = vmatpush1.msra.mxu0 %v869
        %984 = vmatprep.subr.mxu0 %v872
        %985 = vmatpush1.msra.mxu0 %v871
        %986 = vmatprep.subr.mxu0 0.0
        %987 = vmatpush1.msra.mxu0 0.0
        %988 = vmatprep.subr.mxu0 0.0
        %989 = vmatpush1.msra.mxu0 0.0
        %990 = vmatprep.subr.mxu0 0.0
        %991 = vmatpush1.msra.mxu0 0.0
        %992 = vmatprep.subr.mxu0 0.0
        %993 = vmatpush1.msra.mxu0 0.0
        %994 = vmatprep.subr.mxu0 0.0
        %995 = vmatpush1.msra.mxu0 0.0
        %996 = vmatprep.subr.mxu0 0.0
        %997 = vmatpush1.msra.mxu0 0.0
        %998 = vmatprep.subr.mxu0 0.0
        %999 = vmatpush1.msra.mxu0 0.0
        %1000 = vmatprep.subr.mxu0 0.0
        %1001 = vmatpush1.msra.mxu0 0.0
        %1002 = vmatprep.subr.mxu0 0.0
        %1003 = vmatpush1.msra.mxu0 0.0
        %1004 = vmatprep.subr.mxu0 0.0
        %1005 = vmatpush1.msra.mxu0 0.0
        %1006 = vmatprep.subr.mxu0 0.0
        %1007 = vmatpush1.msra.mxu0 0.0
        %1008 = vmatprep.subr.mxu0 0.0
        %1009 = vmatpush1.msra.mxu0 0.0
        %1010 = vmatprep.mubr.f32.mxu0 %v923
        %1011 = vmatmul.mubr.f32.gmra.mrb[0].mxu0 %v817
        %v1012 = vpop.f32.mrb[0].mxu0
        %v1013 = vadd.f32 %v884, %v1012
        %v1014 = vpop.f32.mrb[0].mxu0
        %v1015 = vadd.f32 %v884, %v1014
        %1016 = vmatprep.mubr.f32.mxu0 %v926
        %1017 = vmatmul.mubr.f32.gmra.mrb[0].mxu0 %v819
        %v1018 = vpop.f32.mrb[0].mxu0
        %v1019 = vadd.f32 %v889, %v1018
        %v1020 = vpop.f32.mrb[0].mxu0
        %v1021 = vadd.f32 %v889, %v1020
        %1022 = vmatprep.mubr.f32.mxu0 %v929
        %1023 = vmatmul.mubr.f32.gmra.mrb[0].mxu0 %v821
        %v1024 = vpop.f32.mrb[0].mxu0
        %v1025 = vadd.f32 %v894, %v1024
        %v1026 = vpop.f32.mrb[0].mxu0
        %v1027 = vadd.f32 %v894, %v1026
        %1028 = vmatprep.mubr.f32.mxu0 %v932
        %1029 = vmatmul.mubr.f32.gmra.mrb[0].mxu0 %v823
        %v1030 = vpop.f32.mrb[0].mxu0
        %v1031 = vadd.f32 %v899, %v1030
        %v1032 = vpop.f32.mrb[0].mxu0
        %v1033 = vadd.f32 %v899, %v1032
        %1034 = vmatprep.mubr.f32.mxu0 %v935
        %1035 = vmatmul.mubr.f32.gmra.mrb[0].mxu0 %v825
        %v1036 = vpop.f32.mrb[0].mxu0
        %v1037 = vadd.f32 %v904, %v1036
        %v1038 = vpop.f32.mrb[0].mxu0
        %v1039 = vadd.f32 %v904, %v1038
        %1040 = vmatprep.mubr.f32.mxu0 %v938
        %1041 = vmatmul.mubr.f32.gmra.mrb[0].mxu0 %v827
        %v1042 = vpop.f32.mrb[0].mxu0
        %v1043 = vadd.f32 %v909, %v1042
        %v1044 = vpop.f32.mrb[0].mxu0
        %v1045 = vadd.f32 %v909, %v1044
        %1046 = vmatprep.mubr.f32.mxu0 %v941
        %1047 = vmatmul.mubr.f32.gmra.mrb[0].mxu0 %v829
        %v1048 = vpop.f32.mrb[0].mxu0
        %v1049 = vadd.f32 %v914, %v1048
        %v1050 = vpop.f32.mrb[0].mxu0
        %v1051 = vadd.f32 %v914, %v1050
        %1052 = vmatprep.mubr.f32.mxu0 %v944
        %1053 = vmatmul.mubr.f32.gmra.mrb[0].mxu0 %v831
        %v1054 = vpop.f32.mrb[0].mxu0
        %v1055 = vadd.f32 %v919, %v1054
        %v1056 = vpop.f32.mrb[0].mxu0
        %v1057 = vadd.f32 %v919, %v1056
        %1058 = vdwg.mxu0
        %v1059 = vtanh.pop %v1013
        %v1060 = vtanh.pop %v1015
        %v1061 = vtanh.pop %v1019
        %v1062 = vtanh.pop %v1021
        %v1063 = vtanh.pop %v1025
        %v1064 = vtanh.pop %v1027
        %v1065 = vtanh.pop %v1031
        %v1066 = vtanh.pop %v1033
        %v1067 = vxor.u32 %v1037, 2147483648
        %v1068 = vxor.u32 %v1039, 2147483648
        %v1069 = vxor.u32 %v1043, 2147483648
        %v1070 = vxor.u32 %v1045, 2147483648
        %v1071 = vxor.u32 %v1049, 2147483648
        %v1072 = vxor.u32 %v1051, 2147483648
        %v1073 = vxor.u32 %v1055, 2147483648
        %v1074 = vxor.u32 %v1057, 2147483648
        %v1075 = vmul.f32 %v1067, 1.442695
        %v1076 = vpow.pop %v1075
        %v1077 = vmul.f32 %v1068, 1.442695
        %v1078 = vpow.pop %v1077
        %v1079 = vmul.f32 %v1069, 1.442695
        %v1080 = vpow.pop %v1079
        %v1081 = vmul.f32 %v1070, 1.442695
        %v1082 = vpow.pop %v1081
        %v1083 = vmul.f32 %v1071, 1.442695
        %v1084 = vpow.pop %v1083
        %v1085 = vmul.f32 %v1072, 1.442695
        %v1086 = vpow.pop %v1085
        %v1087 = vmul.f32 %v1073, 1.442695
        %v1088 = vpow.pop %v1087
        %v1089 = vmul.f32 %v1074, 1.442695
        %v1090 = vpow.pop %v1089
        %v1091 = vadd.f32 %v1076, 1.0
        %v1092 = vadd.f32 %v1078, 1.0
        %v1093 = vadd.f32 %v1080, 1.0
        %v1094 = vadd.f32 %v1082, 1.0
        %v1095 = vadd.f32 %v1084, 1.0
        %v1096 = vadd.f32 %v1086, 1.0
        %v1097 = vadd.f32 %v1088, 1.0
        %v1098 = vadd.f32 %v1090, 1.0
        %v1099 = vrcp.pop %v1091
        %v1100 = vmul.f32 1.0, %v1099
        %v1101 = vrcp.pop %v1092
        %v1102 = vmul.f32 1.0, %v1101
        %v1103 = vrcp.pop %v1093
        %v1104 = vmul.f32 1.0, %v1103
        %v1105 = vrcp.pop %v1094
        %v1106 = vmul.f32 1.0, %v1105
        %v1107 = vrcp.pop %v1095
        %v1108 = vmul.f32 1.0, %v1107
        %v1109 = vrcp.pop %v1096
        %v1110 = vmul.f32 1.0, %v1109
        %v1111 = vrcp.pop %v1097
        %v1112 = vmul.f32 1.0, %v1111
        %v1113 = vrcp.pop %v1098
        %v1114 = vmul.f32 1.0, %v1113
        %v1115 = vmul.f32 %v1059, %v1100
        %v1116 = vmul.f32 %v1060, %v1102
        %v1117 = vmul.f32 %v1061, %v1104
        %v1118 = vmul.f32 %v1062, %v1106
        %v1119 = vmul.f32 %v1063, %v1108
        %v1120 = vmul.f32 %v1064, %v1110
        %v1121 = vmul.f32 %v1065, %v1112
        %v1122 = vmul.f32 %v1066, %v1114
        %v1123 = vld [vmem:[%s5] sm:$0xff]
        %v1124 = vld [vmem:[%s5 + $0x8] sm:$0xff]
        %v1125 = vld [vmem:[%s5 + $0x10] sm:$0xff]
        %v1126 = vld [vmem:[%s5 + $0x18] sm:$0xff]
        %v1127 = vld [vmem:[%s5 + $0x20] sm:$0xff]
        %v1128 = vld [vmem:[%s5 + $0x28] sm:$0xff]
        %v1129 = vld [vmem:[%s5 + $0x30] sm:$0xff]
        %v1130 = vld [vmem:[%s5 + $0x38] sm:$0xff]
        %v1131 = vld [vmem:[%s6] sm:$0xff]
        %v1132 = vld [vmem:[%s6 + $0x8] sm:$0xff]
        %v1133 = vld [vmem:[%s6 + $0x10] sm:$0xff]
        %v1134 = vld [vmem:[%s6 + $0x18] sm:$0xff]
        %v1135 = vld [vmem:[%s6 + $0x20] sm:$0xff]
        %v1136 = vld [vmem:[%s6 + $0x28] sm:$0xff]
        %v1137 = vld [vmem:[%s6 + $0x30] sm:$0xff]
        %v1138 = vld [vmem:[%s6 + $0x38] sm:$0xff]
        %1140 = vset.pattern.permute.xlu0 0
        %1141 = vperm.xlu0 %1140, %v1131
        %v1142 = vpop.permute.xlu0 %1141
        %1145 = vset.pattern.permute.xlu0 0
        %1146 = vperm.xlu0 %1145, %v1132
        %v1147 = vpop.permute.xlu0 %1146
        %1150 = vset.pattern.permute.xlu0 0
        %1151 = vperm.xlu0 %1150, %v1133
        %v1152 = vpop.permute.xlu0 %1151
        %1155 = vset.pattern.permute.xlu0 0
        %1156 = vperm.xlu0 %1155, %v1134
        %v1157 = vpop.permute.xlu0 %1156
        %1160 = vset.pattern.permute.xlu0 0
        %1161 = vperm.xlu0 %1160, %v1135
        %v1162 = vpop.permute.xlu0 %1161
        %1165 = vset.pattern.permute.xlu0 0
        %1166 = vperm.xlu0 %1165, %v1136
        %v1167 = vpop.permute.xlu0 %1166
        %1170 = vset.pattern.permute.xlu0 0
        %1171 = vperm.xlu0 %1170, %v1137
        %v1172 = vpop.permute.xlu0 %1171
        %1175 = vset.pattern.permute.xlu0 0
        %1176 = vperm.xlu0 %1175, %v1138
        %v1177 = vpop.permute.xlu0 %1176
        %v1180 = vsel %vm921, %v1123, 0
        %v1183 = vsel %vm921, %v1124, 0
        %v1186 = vsel %vm921, %v1125, 0
        %v1189 = vsel %vm921, %v1126, 0
        %v1192 = vsel %vm921, %v1127, 0
        %v1195 = vsel %vm921, %v1128, 0
        %v1198 = vsel %vm921, %v1129, 0
        %v1201 = vsel %vm921, %v1130, 0
        %1203 = vmatprep.subr.mxu0 %v1116
        %1204 = vmatpush1.msra.mxu0 %v1115
        %1205 = vmatprep.subr.mxu0 %v1118
        %1206 = vmatpush1.msra.mxu0 %v1117
        %1207 = vmatprep.subr.mxu0 %v1120
        %1208 = vmatpush1.msra.mxu0 %v1119
        %1209 = vmatprep.subr.mxu0 %v1122
        %1210 = vmatpush1.msra.mxu0 %v1121
        %1211 = vmatprep.subr.mxu0 0.0
        %1212 = vmatpush1.msra.mxu0 0.0
        %1213 = vmatprep.subr.mxu0 0.0
        %1214 = vmatpush1.msra.mxu0 0.0
        %1215 = vmatprep.subr.mxu0 0.0
        %1216 = vmatpush1.msra.mxu0 0.0
        %1217 = vmatprep.subr.mxu0 0.0
        %1218 = vmatpush1.msra.mxu0 0.0
        %1219 = vmatprep.subr.mxu0 0.0
        %1220 = vmatpush1.msra.mxu0 0.0
        %1221 = vmatprep.subr.mxu0 0.0
        %1222 = vmatpush1.msra.mxu0 0.0
        %1223 = vmatprep.subr.mxu0 0.0
        %1224 = vmatpush1.msra.mxu0 0.0
        %1225 = vmatprep.subr.mxu0 0.0
        %1226 = vmatpush1.msra.mxu0 0.0
        %1227 = vmatprep.subr.mxu0 0.0
        %1228 = vmatpush1.msra.mxu0 0.0
        %1229 = vmatprep.subr.mxu0 0.0
        %1230 = vmatpush1.msra.mxu0 0.0
        %1231 = vmatprep.subr.mxu0 0.0
        %1232 = vmatpush1.msra.mxu0 0.0
        %1233 = vmatprep.subr.mxu0 0.0
        %1234 = vmatpush1.msra.mxu0 0.0
        %1235 = vmatprep.subr.mxu0 0.0
        %1236 = vmatpush1.msra.mxu0 0.0
        %1237 = vmatprep.subr.mxu0 0.0
        %1238 = vmatpush1.msra.mxu0 0.0
        %1239 = vmatprep.subr.mxu0 0.0
        %1240 = vmatpush1.msra.mxu0 0.0
        %1241 = vmatprep.subr.mxu0 0.0
        %1242 = vmatpush1.msra.mxu0 0.0
        %1243 = vmatprep.subr.mxu0 0.0
        %1244 = vmatpush1.msra.mxu0 0.0
        %1245 = vmatprep.subr.mxu0 0.0
        %1246 = vmatpush1.msra.mxu0 0.0
        %1247 = vmatprep.subr.mxu0 0.0
        %1248 = vmatpush1.msra.mxu0 0.0
        %1249 = vmatprep.subr.mxu0 0.0
        %1250 = vmatpush1.msra.mxu0 0.0
        %1251 = vmatprep.subr.mxu0 0.0
        %1252 = vmatpush1.msra.mxu0 0.0
        %1253 = vmatprep.subr.mxu0 0.0
        %1254 = vmatpush1.msra.mxu0 0.0
        %1255 = vmatprep.subr.mxu0 0.0
        %1256 = vmatpush1.msra.mxu0 0.0
        %1257 = vmatprep.subr.mxu0 0.0
        %1258 = vmatpush1.msra.mxu0 0.0
        %1259 = vmatprep.subr.mxu0 0.0
        %1260 = vmatpush1.msra.mxu0 0.0
        %1261 = vmatprep.subr.mxu0 0.0
        %1262 = vmatpush1.msra.mxu0 0.0
        %1263 = vmatprep.subr.mxu0 0.0
        %1264 = vmatpush1.msra.mxu0 0.0
        %1265 = vmatprep.subr.mxu0 0.0
        %1266 = vmatpush1.msra.mxu0 0.0
        %1267 = vmatprep.mubr.f32.mxu0 0.0
        %1268 = vmatmul.mubr.f32.gmra.mrb[0].mxu0 %v1180
        %v1269 = vpop.f32.mrb[0].mxu0
        %v1270 = vadd.f32 %v1142, %v1269
        %v1271 = vpop.f32.mrb[0].mxu0
        %v1272 = vadd.f32 %v1142, %v1271
        %1273 = vmatprep.mubr.f32.mxu0 0.0
        %1274 = vmatmul.mubr.f32.gmra.mrb[0].mxu0 %v1183
        %v1275 = vpop.f32.mrb[0].mxu0
        %v1276 = vadd.f32 %v1147, %v1275
        %v1277 = vpop.f32.mrb[0].mxu0
        %v1278 = vadd.f32 %v1147, %v1277
        %1279 = vmatprep.mubr.f32.mxu0 0.0
        %1280 = vmatmul.mubr.f32.gmra.mrb[0].mxu0 %v1186
        %v1281 = vpop.f32.mrb[0].mxu0
        %v1282 = vadd.f32 %v1152, %v1281
        %v1283 = vpop.f32.mrb[0].mxu0
        %v1284 = vadd.f32 %v1152, %v1283
        %1285 = vmatprep.mubr.f32.mxu0 0.0
        %1286 = vmatmul.mubr.f32.gmra.mrb[0].mxu0 %v1189
        %v1287 = vpop.f32.mrb[0].mxu0
        %v1288 = vadd.f32 %v1157, %v1287
        %v1289 = vpop.f32.mrb[0].mxu0
        %v1290 = vadd.f32 %v1157, %v1289
        %1291 = vmatprep.mubr.f32.mxu0 0.0
        %1292 = vmatmul.mubr.f32.gmra.mrb[0].mxu0 %v1192
        %v1293 = vpop.f32.mrb[0].mxu0
        %v1294 = vadd.f32 %v1162, %v1293
        %v1295 = vpop.f32.mrb[0].mxu0
        %v1296 = vadd.f32 %v1162, %v1295
        %1297 = vmatprep.mubr.f32.mxu0 0.0
        %1298 = vmatmul.mubr.f32.gmra.mrb[0].mxu0 %v1195
        %v1299 = vpop.f32.mrb[0].mxu0
        %v1300 = vadd.f32 %v1167, %v1299
        %v1301 = vpop.f32.mrb[0].mxu0
        %v1302 = vadd.f32 %v1167, %v1301
        %1303 = vmatprep.mubr.f32.mxu0 0.0
        %1304 = vmatmul.mubr.f32.gmra.mrb[0].mxu0 %v1198
        %v1305 = vpop.f32.mrb[0].mxu0
        %v1306 = vadd.f32 %v1172, %v1305
        %v1307 = vpop.f32.mrb[0].mxu0
        %v1308 = vadd.f32 %v1172, %v1307
        %1309 = vmatprep.mubr.f32.mxu0 0.0
        %1310 = vmatmul.mubr.f32.gmra.mrb[0].mxu0 %v1201
        %v1311 = vpop.f32.mrb[0].mxu0
        %v1312 = vadd.f32 %v1177, %v1311
        %v1313 = vpop.f32.mrb[0].mxu0
        %v1314 = vadd.f32 %v1177, %v1313
        %1315 = vdwg.mxu0
        %v1316 = vadd.f32 %v480, %v1270
        %v1317 = vadd.f32 %v482, %v1272
        %v1318 = vadd.f32 %v486, %v1276
        %v1319 = vadd.f32 %v488, %v1278
        %v1320 = vadd.f32 %v492, %v1282
        %v1321 = vadd.f32 %v494, %v1284
        %v1322 = vadd.f32 %v498, %v1288
        %v1323 = vadd.f32 %v500, %v1290
        %1324 = vst [vmem:[#allocation2 + $0x8] sm:$0xff] %v1316
        %1325 = vst [vmem:[#allocation2 + $0x10] sm:$0xff] %v1317
        %1326 = vst [vmem:[#allocation2 + $0x28] sm:$0xff] %v1318
        %1327 = vst [vmem:[#allocation2 + $0x30] sm:$0xff] %v1319
        %1328 = vst [vmem:[#allocation2 + $0x48] sm:$0xff] %v1320
        %1329 = vst [vmem:[#allocation2 + $0x50] sm:$0xff] %v1321
        %1330 = vst [vmem:[#allocation2 + $0x68] sm:$0xff] %v1322
        %1331 = vst [vmem:[#allocation2 + $0x70] sm:$0xff] %v1323
        %v1332 = vld [vmem:[#allocation2] sm:$0xff]
        %v1333 = vld [vmem:[#allocation2 + $0x8] sm:$0xff]
        %v1334 = vld [vmem:[#allocation2 + $0x10] sm:$0xff]
        %v1335 = vld [vmem:[#allocation2 + $0x20] sm:$0xff]
        %v1336 = vld [vmem:[#allocation2 + $0x28] sm:$0xff]
        %v1337 = vld [vmem:[#allocation2 + $0x30] sm:$0xff]
        %v1338 = vld [vmem:[#allocation2 + $0x40] sm:$0xff]
        %v1339 = vld [vmem:[#allocation2 + $0x48] sm:$0xff]
        %v1340 = vld [vmem:[#allocation2 + $0x50] sm:$0xff]
        %v1341 = vld [vmem:[#allocation2 + $0x60] sm:$0xff]
        %v1342 = vld [vmem:[#allocation2 + $0x68] sm:$0xff]
        %v1343 = vld [vmem:[#allocation2 + $0x70] sm:$0xff]
        %1356 = vrot.lane.b32.xlu0 %v1332, 2
        %v1357 = vpop.permute.xlu0 %1356
        %1358 = vrot.lane.b32.xlu0 %v1333, 2
        %v1359 = vpop.permute.xlu0 %1358
        %1360 = vrot.lane.b32.xlu0 %v1334, 2
        %v1361 = vpop.permute.xlu0 %1360
        %1362 = vrot.lane.b32.xlu0 %v1335, 2
        %v1363 = vpop.permute.xlu0 %1362
        %1364 = vrot.lane.b32.xlu0 %v1336, 2
        %v1365 = vpop.permute.xlu0 %1364
        %1366 = vrot.lane.b32.xlu0 %v1337, 2
        %v1367 = vpop.permute.xlu0 %1366
        %1368 = vrot.lane.b32.xlu0 %v1338, 2
        %v1369 = vpop.permute.xlu0 %1368
        %1370 = vrot.lane.b32.xlu0 %v1339, 2
        %v1371 = vpop.permute.xlu0 %1370
        %1372 = vrot.lane.b32.xlu0 %v1340, 2
        %v1373 = vpop.permute.xlu0 %1372
        %1374 = vrot.lane.b32.xlu0 %v1341, 2
        %v1375 = vpop.permute.xlu0 %1374
        %1376 = vrot.lane.b32.xlu0 %v1342, 2
        %v1377 = vpop.permute.xlu0 %1376
        %1378 = vrot.lane.b32.xlu0 %v1343, 2
        %v1379 = vpop.permute.xlu0 %1378
        %v1380 = vsel %vm354, %v1357, %v1359
        %v1381 = vsel %vm354, %v1359, %v1361
        %v1382 = vsel %vm354, %v1363, %v1365
        %v1383 = vsel %vm354, %v1365, %v1367
        %v1384 = vsel %vm354, %v1369, %v1371
        %v1385 = vsel %vm354, %v1371, %v1373
        %v1386 = vsel %vm354, %v1375, %v1377
        %v1387 = vsel %vm354, %v1377, %v1379
        %1396 = vst [vmem:[#allocation3] sm:$0xff] %v1380
        %1397 = vst [vmem:[#allocation3 + $0x8] sm:$0xff] %v1381
        %1398 = vst [vmem:[#allocation3 + $0x10] sm:$0xff] %v1382
        %1399 = vst [vmem:[#allocation3 + $0x18] sm:$0xff] %v1383
        %1400 = vst [vmem:[#allocation3 + $0x20] sm:$0xff] %v1384
        %1401 = vst [vmem:[#allocation3 + $0x28] sm:$0xff] %v1385
        %1402 = vst [vmem:[#allocation3 + $0x30] sm:$0xff] %v1386
        %1403 = vst [vmem:[#allocation3 + $0x38] sm:$0xff] %v1387
        %v1404 = vld [vmem:[#allocation2] sm:$0xff]
        %v1405 = vld [vmem:[#allocation2 + $0x8] sm:$0xff]
        %v1406 = vld [vmem:[#allocation2 + $0x10] sm:$0xff]
        %v1407 = vld [vmem:[#allocation2 + $0x20] sm:$0xff]
        %v1408 = vld [vmem:[#allocation2 + $0x28] sm:$0xff]
        %v1409 = vld [vmem:[#allocation2 + $0x30] sm:$0xff]
        %v1410 = vld [vmem:[#allocation2 + $0x40] sm:$0xff]
        %v1411 = vld [vmem:[#allocation2 + $0x48] sm:$0xff]
        %v1412 = vld [vmem:[#allocation2 + $0x50] sm:$0xff]
        %v1413 = vld [vmem:[#allocation2 + $0x60] sm:$0xff]
        %v1414 = vld [vmem:[#allocation2 + $0x68] sm:$0xff]
        %v1415 = vld [vmem:[#allocation2 + $0x70] sm:$0xff]
        %1428 = vrot.lane.b32.xlu0 %v1404, 1
        %v1429 = vpop.permute.xlu0 %1428
        %1430 = vrot.lane.b32.xlu0 %v1405, 1
        %v1431 = vpop.permute.xlu0 %1430
        %1432 = vrot.lane.b32.xlu0 %v1406, 1
        %v1433 = vpop.permute.xlu0 %1432
        %1434 = vrot.lane.b32.xlu0 %v1407, 1
        %v1435 = vpop.permute.xlu0 %1434
        %1436 = vrot.lane.b32.xlu0 %v1408, 1
        %v1437 = vpop.permute.xlu0 %1436
        %1438 = vrot.lane.b32.xlu0 %v1409, 1
        %v1439 = vpop.permute.xlu0 %1438
        %1440 = vrot.lane.b32.xlu0 %v1410, 1
        %v1441 = vpop.permute.xlu0 %1440
        %1442 = vrot.lane.b32.xlu0 %v1411, 1
        %v1443 = vpop.permute.xlu0 %1442
        %1444 = vrot.lane.b32.xlu0 %v1412, 1
        %v1445 = vpop.permute.xlu0 %1444
        %1446 = vrot.lane.b32.xlu0 %v1413, 1
        %v1447 = vpop.permute.xlu0 %1446
        %1448 = vrot.lane.b32.xlu0 %v1414, 1
        %v1449 = vpop.permute.xlu0 %1448
        %1450 = vrot.lane.b32.xlu0 %v1415, 1
        %v1451 = vpop.permute.xlu0 %1450
        %v1452 = vsel %vm630, %v1429, %v1431
        %v1453 = vsel %vm630, %v1431, %v1433
        %v1454 = vsel %vm630, %v1435, %v1437
        %v1455 = vsel %vm630, %v1437, %v1439
        %v1456 = vsel %vm630, %v1441, %v1443
        %v1457 = vsel %vm630, %v1443, %v1445
        %v1458 = vsel %vm630, %v1447, %v1449
        %v1459 = vsel %vm630, %v1449, %v1451
        %1468 = vst [vmem:[#allocation3 + $0x40] sm:$0xff] %v1452
        %1469 = vst [vmem:[#allocation3 + $0x48] sm:$0xff] %v1453
        %1470 = vst [vmem:[#allocation3 + $0x50] sm:$0xff] %v1454
        %1471 = vst [vmem:[#allocation3 + $0x58] sm:$0xff] %v1455
        %1472 = vst [vmem:[#allocation3 + $0x60] sm:$0xff] %v1456
        %1473 = vst [vmem:[#allocation3 + $0x68] sm:$0xff] %v1457
        %1474 = vst [vmem:[#allocation3 + $0x70] sm:$0xff] %v1458
        %1475 = vst [vmem:[#allocation3 + $0x78] sm:$0xff] %v1459
        %v1476 = vld [vmem:[#allocation2 + $0x8] sm:$0xff]
        %v1477 = vld [vmem:[#allocation2 + $0x10] sm:$0xff]
        %v1478 = vld [vmem:[#allocation2 + $0x28] sm:$0xff]
        %v1479 = vld [vmem:[#allocation2 + $0x30] sm:$0xff]
        %v1480 = vld [vmem:[#allocation2 + $0x48] sm:$0xff]
        %v1481 = vld [vmem:[#allocation2 + $0x50] sm:$0xff]
        %v1482 = vld [vmem:[#allocation2 + $0x68] sm:$0xff]
        %v1483 = vld [vmem:[#allocation2 + $0x70] sm:$0xff]
        %1484 = vst [vmem:[#allocation3 + $0x80] sm:$0xff] %v1476
        %1485 = vst [vmem:[#allocation3 + $0x88] sm:$0xff] %v1477
        %1486 = vst [vmem:[#allocation3 + $0x90] sm:$0xff] %v1478
        %1487 = vst [vmem:[#allocation3 + $0x98] sm:$0xff] %v1479
        %1488 = vst [vmem:[#allocation3 + $0xa0] sm:$0xff] %v1480
        %1489 = vst [vmem:[#allocation3 + $0xa8] sm:$0xff] %v1481
        %1490 = vst [vmem:[#allocation3 + $0xb0] sm:$0xff] %v1482
        %1491 = vst [vmem:[#allocation3 + $0xb8] sm:$0xff] %v1483
        %v1492 = vld [vmem:[#allocation2 + $0x8] sm:$0xff]
        %v1493 = vld [vmem:[#allocation2 + $0x10] sm:$0xff]
        %v1494 = vld [vmem:[#allocation2 + $0x18] sm:$0xff]
        %v1495 = vld [vmem:[#allocation2 + $0x28] sm:$0xff]
        %v1496 = vld [vmem:[#allocation2 + $0x30] sm:$0xff]
        %v1497 = vld [vmem:[#allocation2 + $0x38] sm:$0xff]
        %v1498 = vld [vmem:[#allocation2 + $0x48] sm:$0xff]
        %v1499 = vld [vmem:[#allocation2 + $0x50] sm:$0xff]
        %v1500 = vld [vmem:[#allocation2 + $0x58] sm:$0xff]
        %v1501 = vld [vmem:[#allocation2 + $0x68] sm:$0xff]
        %v1502 = vld [vmem:[#allocation2 + $0x70] sm:$0xff]
        %v1503 = vld [vmem:[#allocation2 + $0x78] sm:$0xff]
        %1516 = vrot.lane.b32.xlu0 %v1492, 127
        %v1517 = vpop.permute.xlu0 %1516
        %1518 = vrot.lane.b32.xlu0 %v1493, 127
        %v1519 = vpop.permute.xlu0 %1518
        %1520 = vrot.lane.b32.xlu0 %v1494, 127
        %v1521 = vpop.permute.xlu0 %1520
        %1522 = vrot.lane.b32.xlu0 %v1495, 127
        %v1523 = vpop.permute.xlu0 %1522
        %1524 = vrot.lane.b32.xlu0 %v1496, 127
        %v1525 = vpop.permute.xlu0 %1524
        %1526 = vrot.lane.b32.xlu0 %v1497, 127
        %v1527 = vpop.permute.xlu0 %1526
        %1528 = vrot.lane.b32.xlu0 %v1498, 127
        %v1529 = vpop.permute.xlu0 %1528
        %1530 = vrot.lane.b32.xlu0 %v1499, 127
        %v1531 = vpop.permute.xlu0 %1530
        %1532 = vrot.lane.b32.xlu0 %v1500, 127
        %v1533 = vpop.permute.xlu0 %1532
        %1534 = vrot.lane.b32.xlu0 %v1501, 127
        %v1535 = vpop.permute.xlu0 %1534
        %1536 = vrot.lane.b32.xlu0 %v1502, 127
        %v1537 = vpop.permute.xlu0 %1536
        %1538 = vrot.lane.b32.xlu0 %v1503, 127
        %v1539 = vpop.permute.xlu0 %1538
        %v1540 = vsel %vm719, %v1517, %v1519
        %v1541 = vsel %vm719, %v1519, %v1521
        %v1542 = vsel %vm719, %v1523, %v1525
        %v1543 = vsel %vm719, %v1525, %v1527
        %v1544 = vsel %vm719, %v1529, %v1531
        %v1545 = vsel %vm719, %v1531, %v1533
        %v1546 = vsel %vm719, %v1535, %v1537
        %v1547 = vsel %vm719, %v1537, %v1539
        %1556 = vst [vmem:[#allocation3 + $0xc0] sm:$0xff] %v1540
        %1557 = vst [vmem:[#allocation3 + $0xc8] sm:$0xff] %v1541
        %1558 = vst [vmem:[#allocation3 + $0xd0] sm:$0xff] %v1542
        %1559 = vst [vmem:[#allocation3 + $0xd8] sm:$0xff] %v1543
        %1560 = vst [vmem:[#allocation3 + $0xe0] sm:$0xff] %v1544
        %1561 = vst [vmem:[#allocation3 + $0xe8] sm:$0xff] %v1545
        %1562 = vst [vmem:[#allocation3 + $0xf0] sm:$0xff] %v1546
        %1563 = vst [vmem:[#allocation3 + $0xf8] sm:$0xff] %v1547
        %v1564 = vld [vmem:[#allocation2 + $0x8] sm:$0xff]
        %v1565 = vld [vmem:[#allocation2 + $0x10] sm:$0xff]
        %v1566 = vld [vmem:[#allocation2 + $0x18] sm:$0xff]
        %v1567 = vld [vmem:[#allocation2 + $0x28] sm:$0xff]
        %v1568 = vld [vmem:[#allocation2 + $0x30] sm:$0xff]
        %v1569 = vld [vmem:[#allocation2 + $0x38] sm:$0xff]
        %v1570 = vld [vmem:[#allocation2 + $0x48] sm:$0xff]
        %v1571 = vld [vmem:[#allocation2 + $0x50] sm:$0xff]
        %v1572 = vld [vmem:[#allocation2 + $0x58] sm:$0xff]
        %v1573 = vld [vmem:[#allocation2 + $0x68] sm:$0xff]
        %v1574 = vld [vmem:[#allocation2 + $0x70] sm:$0xff]
        %v1575 = vld [vmem:[#allocation2 + $0x78] sm:$0xff]
        %1588 = vrot.lane.b32.xlu0 %v1564, 126
        %v1589 = vpop.permute.xlu0 %1588
        %1590 = vrot.lane.b32.xlu0 %v1565, 126
        %v1591 = vpop.permute.xlu0 %1590
        %1592 = vrot.lane.b32.xlu0 %v1566, 126
        %v1593 = vpop.permute.xlu0 %1592
        %1594 = vrot.lane.b32.xlu0 %v1567, 126
        %v1595 = vpop.permute.xlu0 %1594
        %1596 = vrot.lane.b32.xlu0 %v1568, 126
        %v1597 = vpop.permute.xlu0 %1596
        %1598 = vrot.lane.b32.xlu0 %v1569, 126
        %v1599 = vpop.permute.xlu0 %1598
        %1600 = vrot.lane.b32.xlu0 %v1570, 126
        %v1601 = vpop.permute.xlu0 %1600
        %1602 = vrot.lane.b32.xlu0 %v1571, 126
        %v1603 = vpop.permute.xlu0 %1602
        %1604 = vrot.lane.b32.xlu0 %v1572, 126
        %v1605 = vpop.permute.xlu0 %1604
        %1606 = vrot.lane.b32.xlu0 %v1573, 126
        %v1607 = vpop.permute.xlu0 %1606
        %1608 = vrot.lane.b32.xlu0 %v1574, 126
        %v1609 = vpop.permute.xlu0 %1608
        %1610 = vrot.lane.b32.xlu0 %v1575, 126
        %v1611 = vpop.permute.xlu0 %1610
        %v1612 = vsel %vm792, %v1589, %v1591
        %v1613 = vsel %vm792, %v1591, %v1593
        %v1614 = vsel %vm792, %v1595, %v1597
        %v1615 = vsel %vm792, %v1597, %v1599
        %v1616 = vsel %vm792, %v1601, %v1603
        %v1617 = vsel %vm792, %v1603, %v1605
        %v1618 = vsel %vm792, %v1607, %v1609
        %v1619 = vsel %vm792, %v1609, %v1611
        %1628 = vst [vmem:[#allocation3 + $0x100] sm:$0xff] %v1612
        %1629 = vst [vmem:[#allocation3 + $0x108] sm:$0xff] %v1613
        %1630 = vst [vmem:[#allocation3 + $0x110] sm:$0xff] %v1614
        %1631 = vst [vmem:[#allocation3 + $0x118] sm:$0xff] %v1615
        %1632 = vst [vmem:[#allocation3 + $0x120] sm:$0xff] %v1616
        %1633 = vst [vmem:[#allocation3 + $0x128] sm:$0xff] %v1617
        %1634 = vst [vmem:[#allocation3 + $0x130] sm:$0xff] %v1618
        %1635 = vst [vmem:[#allocation3 + $0x138] sm:$0xff] %v1619
        %s1636 = scalar_lea.vmem %s4, 128
        %v1637 = vld [vmem:[%s1636] sm:$0xff]
        %v1638 = vld [vmem:[%s1636 + $0x8] sm:$0xff]
        %v1639 = vld [vmem:[%s1636 + $0x10] sm:$0xff]
        %v1640 = vld [vmem:[%s1636 + $0x18] sm:$0xff]
        %v1641 = vld [vmem:[%s1636 + $0x20] sm:$0xff]
        %v1642 = vld [vmem:[%s1636 + $0x28] sm:$0xff]
        %v1643 = vld [vmem:[%s1636 + $0x30] sm:$0xff]
        %v1644 = vld [vmem:[%s1636 + $0x38] sm:$0xff]
        %v1645 = vld [vmem:[%s1636 + $0x40] sm:$0xff]
        %v1646 = vld [vmem:[%s1636 + $0x48] sm:$0xff]
        %v1647 = vld [vmem:[%s1636 + $0x50] sm:$0xff]
        %v1648 = vld [vmem:[%s1636 + $0x58] sm:$0xff]
        %v1649 = vld [vmem:[%s1636 + $0x60] sm:$0xff]
        %v1650 = vld [vmem:[%s1636 + $0x68] sm:$0xff]
        %v1651 = vld [vmem:[%s1636 + $0x70] sm:$0xff]
        %v1652 = vld [vmem:[%s1636 + $0x78] sm:$0xff]
        %v1653 = vld [vmem:[#allocation3] sm:$0xff]
        %v1654 = vld [vmem:[#allocation3 + $0x8] sm:$0xff]
        %v1655 = vld [vmem:[#allocation3 + $0x10] sm:$0xff]
        %v1656 = vld [vmem:[#allocation3 + $0x18] sm:$0xff]
        %v1657 = vld [vmem:[#allocation3 + $0x20] sm:$0xff]
        %v1658 = vld [vmem:[#allocation3 + $0x28] sm:$0xff]
        %v1659 = vld [vmem:[#allocation3 + $0x30] sm:$0xff]
        %v1660 = vld [vmem:[#allocation3 + $0x38] sm:$0xff]
        %v1661 = vld [vmem:[#allocation3 + $0x40] sm:$0xff]
        %v1662 = vld [vmem:[#allocation3 + $0x48] sm:$0xff]
        %v1663 = vld [vmem:[#allocation3 + $0x50] sm:$0xff]
        %v1664 = vld [vmem:[#allocation3 + $0x58] sm:$0xff]
        %v1665 = vld [vmem:[#allocation3 + $0x60] sm:$0xff]
        %v1666 = vld [vmem:[#allocation3 + $0x68] sm:$0xff]
        %v1667 = vld [vmem:[#allocation3 + $0x70] sm:$0xff]
        %v1668 = vld [vmem:[#allocation3 + $0x78] sm:$0xff]
        %v1669 = vld [vmem:[#allocation3 + $0x80] sm:$0xff]
        %v1670 = vld [vmem:[#allocation3 + $0x88] sm:$0xff]
        %v1671 = vld [vmem:[#allocation3 + $0x90] sm:$0xff]
        %v1672 = vld [vmem:[#allocation3 + $0x98] sm:$0xff]
        %v1673 = vld [vmem:[#allocation3 + $0xa0] sm:$0xff]
        %v1674 = vld [vmem:[#allocation3 + $0xa8] sm:$0xff]
        %v1675 = vld [vmem:[#allocation3 + $0xb0] sm:$0xff]
        %v1676 = vld [vmem:[#allocation3 + $0xb8] sm:$0xff]
        %v1677 = vld [vmem:[#allocation3 + $0xc0] sm:$0xff]
        %v1678 = vld [vmem:[#allocation3 + $0xc8] sm:$0xff]
        %v1679 = vld [vmem:[#allocation3 + $0xd0] sm:$0xff]
        %v1680 = vld [vmem:[#allocation3 + $0xd8] sm:$0xff]
        %v1681 = vld [vmem:[#allocation3 + $0xe0] sm:$0xff]
        %v1682 = vld [vmem:[#allocation3 + $0xe8] sm:$0xff]
        %v1683 = vld [vmem:[#allocation3 + $0xf0] sm:$0xff]
        %v1684 = vld [vmem:[#allocation3 + $0xf8] sm:$0xff]
        %v1685 = vld [vmem:[#allocation3 + $0x100] sm:$0xff]
        %v1686 = vld [vmem:[#allocation3 + $0x108] sm:$0xff]
        %v1687 = vld [vmem:[#allocation3 + $0x110] sm:$0xff]
        %v1688 = vld [vmem:[#allocation3 + $0x118] sm:$0xff]
        %v1689 = vld [vmem:[#allocation3 + $0x120] sm:$0xff]
        %v1690 = vld [vmem:[#allocation3 + $0x128] sm:$0xff]
        %v1691 = vld [vmem:[#allocation3 + $0x130] sm:$0xff]
        %v1692 = vld [vmem:[#allocation3 + $0x138] sm:$0xff]
        %v1693 = vld [vmem:[%s350 + $0x40] sm:$0xff]
        %v1694 = vld [vmem:[%s350 + $0x48] sm:$0xff]
        %v1695 = vld [vmem:[%s350 + $0x50] sm:$0xff]
        %v1696 = vld [vmem:[%s350 + $0x58] sm:$0xff]
        %v1697 = vld [vmem:[%s350 + $0x60] sm:$0xff]
        %v1698 = vld [vmem:[%s350 + $0x68] sm:$0xff]
        %v1699 = vld [vmem:[%s350 + $0x70] sm:$0xff]
        %v1700 = vld [vmem:[%s350 + $0x78] sm:$0xff]
        %1702 = vset.pattern.permute.xlu0 0
        %1703 = vperm.xlu0 %1702, %v1693
        %v1704 = vpop.permute.xlu0 %1703
        %1707 = vset.pattern.permute.xlu0 0
        %1708 = vperm.xlu0 %1707, %v1694
        %v1709 = vpop.permute.xlu0 %1708
        %1712 = vset.pattern.permute.xlu0 0
        %1713 = vperm.xlu0 %1712, %v1695
        %v1714 = vpop.permute.xlu0 %1713
        %1717 = vset.pattern.permute.xlu0 0
        %1718 = vperm.xlu0 %1717, %v1696
        %v1719 = vpop.permute.xlu0 %1718
        %1722 = vset.pattern.permute.xlu0 0
        %1723 = vperm.xlu0 %1722, %v1697
        %v1724 = vpop.permute.xlu0 %1723
        %1727 = vset.pattern.permute.xlu0 0
        %1728 = vperm.xlu0 %1727, %v1698
        %v1729 = vpop.permute.xlu0 %1728
        %1732 = vset.pattern.permute.xlu0 0
        %1733 = vperm.xlu0 %1732, %v1699
        %v1734 = vpop.permute.xlu0 %1733
        %1737 = vset.pattern.permute.xlu0 0
        %1738 = vperm.xlu0 %1737, %v1700
        %v1739 = vpop.permute.xlu0 %1738
        %v1742 = vsel %vm921, %v1638, 0
        %v1745 = vsel %vm921, %v1640, 0
        %v1748 = vsel %vm921, %v1642, 0
        %v1751 = vsel %vm921, %v1644, 0
        %v1754 = vsel %vm921, %v1646, 0
        %v1757 = vsel %vm921, %v1648, 0
        %v1760 = vsel %vm921, %v1650, 0
        %v1763 = vsel %vm921, %v1652, 0
        %1765 = vmatprep.subr.mxu0 %v1654
        %1766 = vmatpush1.msra.mxu0 %v1653
        %1767 = vmatprep.subr.mxu0 %v1656
        %1768 = vmatpush1.msra.mxu0 %v1655
        %1769 = vmatprep.subr.mxu0 %v1658
        %1770 = vmatpush1.msra.mxu0 %v1657
        %1771 = vmatprep.subr.mxu0 %v1660
        %1772 = vmatpush1.msra.mxu0 %v1659
        %1773 = vmatprep.subr.mxu0 %v1662
        %1774 = vmatpush1.msra.mxu0 %v1661
        %1775 = vmatprep.subr.mxu0 %v1664
        %1776 = vmatpush1.msra.mxu0 %v1663
        %1777 = vmatprep.subr.mxu0 %v1666
        %1778 = vmatpush1.msra.mxu0 %v1665
        %1779 = vmatprep.subr.mxu0 %v1668
        %1780 = vmatpush1.msra.mxu0 %v1667
        %1781 = vmatprep.subr.mxu0 %v1670
        %1782 = vmatpush1.msra.mxu0 %v1669
        %1783 = vmatprep.subr.mxu0 %v1672
        %1784 = vmatpush1.msra.mxu0 %v1671
        %1785 = vmatprep.subr.mxu0 %v1674
        %1786 = vmatpush1.msra.mxu0 %v1673
        %1787 = vmatprep.subr.mxu0 %v1676
        %1788 = vmatpush1.msra.mxu0 %v1675
        %1789 = vmatprep.subr.mxu0 %v1678
        %1790 = vmatpush1.msra.mxu0 %v1677
        %1791 = vmatprep.subr.mxu0 %v1680
        %1792 = vmatpush1.msra.mxu0 %v1679
        %1793 = vmatprep.subr.mxu0 %v1682
        %1794 = vmatpush1.msra.mxu0 %v1681
        %1795 = vmatprep.subr.mxu0 %v1684
        %1796 = vmatpush1.msra.mxu0 %v1683
        %1797 = vmatprep.subr.mxu0 %v1686
        %1798 = vmatpush1.msra.mxu0 %v1685
        %1799 = vmatprep.subr.mxu0 %v1688
        %1800 = vmatpush1.msra.mxu0 %v1687
        %1801 = vmatprep.subr.mxu0 %v1690
        %1802 = vmatpush1.msra.mxu0 %v1689
        %1803 = vmatprep.subr.mxu0 %v1692
        %1804 = vmatpush1.msra.mxu0 %v1691
        %1805 = vmatprep.subr.mxu0 0.0
        %1806 = vmatpush1.msra.mxu0 0.0
        %1807 = vmatprep.subr.mxu0 0.0
        %1808 = vmatpush1.msra.mxu0 0.0
        %1809 = vmatprep.subr.mxu0 0.0
        %1810 = vmatpush1.msra.mxu0 0.0
        %1811 = vmatprep.subr.mxu0 0.0
        %1812 = vmatpush1.msra.mxu0 0.0
        %1813 = vmatprep.subr.mxu0 0.0
        %1814 = vmatpush1.msra.mxu0 0.0
        %1815 = vmatprep.subr.mxu0 0.0
        %1816 = vmatpush1.msra.mxu0 0.0
        %1817 = vmatprep.subr.mxu0 0.0
        %1818 = vmatpush1.msra.mxu0 0.0
        %1819 = vmatprep.subr.mxu0 0.0
        %1820 = vmatpush1.msra.mxu0 0.0
        %1821 = vmatprep.subr.mxu0 0.0
        %1822 = vmatpush1.msra.mxu0 0.0
        %1823 = vmatprep.subr.mxu0 0.0
        %1824 = vmatpush1.msra.mxu0 0.0
        %1825 = vmatprep.subr.mxu0 0.0
        %1826 = vmatpush1.msra.mxu0 0.0
        %1827 = vmatprep.subr.mxu0 0.0
        %1828 = vmatpush1.msra.mxu0 0.0
        %1829 = vmatprep.mubr.f32.mxu0 %v1742
        %1830 = vmatmul.mubr.f32.gmra.mrb[0].mxu0 %v1637
        %v1831 = vpop.f32.mrb[0].mxu0
        %v1832 = vadd.f32 %v1704, %v1831
        %v1833 = vpop.f32.mrb[0].mxu0
        %v1834 = vadd.f32 %v1704, %v1833
        %1835 = vmatprep.mubr.f32.mxu0 %v1745
        %1836 = vmatmul.mubr.f32.gmra.mrb[0].mxu0 %v1639
        %v1837 = vpop.f32.mrb[0].mxu0
        %v1838 = vadd.f32 %v1709, %v1837
        %v1839 = vpop.f32.mrb[0].mxu0
        %v1840 = vadd.f32 %v1709, %v1839
        %1841 = vmatprep.mubr.f32.mxu0 %v1748
        %1842 = vmatmul.mubr.f32.gmra.mrb[0].mxu0 %v1641
        %v1843 = vpop.f32.mrb[0].mxu0
        %v1844 = vadd.f32 %v1714, %v1843
        %v1845 = vpop.f32.mrb[0].mxu0
        %v1846 = vadd.f32 %v1714, %v1845
        %1847 = vmatprep.mubr.f32.mxu0 %v1751
        %1848 = vmatmul.mubr.f32.gmra.mrb[0].mxu0 %v1643
        %v1849 = vpop.f32.mrb[0].mxu0
        %v1850 = vadd.f32 %v1719, %v1849
        %v1851 = vpop.f32.mrb[0].mxu0
        %v1852 = vadd.f32 %v1719, %v1851
        %1853 = vmatprep.mubr.f32.mxu0 %v1754
        %1854 = vmatmul.mubr.f32.gmra.mrb[0].mxu0 %v1645
        %v1855 = vpop.f32.mrb[0].mxu0
        %v1856 = vadd.f32 %v1724, %v1855
        %v1857 = vpop.f32.mrb[0].mxu0
        %v1858 = vadd.f32 %v1724, %v1857
        %1859 = vmatprep.mubr.f32.mxu0 %v1757
        %1860 = vmatmul.mubr.f32.gmra.mrb[0].mxu0 %v1647
        %v1861 = vpop.f32.mrb[0].mxu0
        %v1862 = vadd.f32 %v1729, %v1861
        %v1863 = vpop.f32.mrb[0].mxu0
        %v1864 = vadd.f32 %v1729, %v1863
        %1865 = vmatprep.mubr.f32.mxu0 %v1760
        %1866 = vmatmul.mubr.f32.gmra.mrb[0].mxu0 %v1649
        %v1867 = vpop.f32.mrb[0].mxu0
        %v1868 = vadd.f32 %v1734, %v1867
        %v1869 = vpop.f32.mrb[0].mxu0
        %v1870 = vadd.f32 %v1734, %v1869
        %1871 = vmatprep.mubr.f32.mxu0 %v1763
        %1872 = vmatmul.mubr.f32.gmra.mrb[0].mxu0 %v1651
        %v1873 = vpop.f32.mrb[0].mxu0
        %v1874 = vadd.f32 %v1739, %v1873
        %v1875 = vpop.f32.mrb[0].mxu0
        %v1876 = vadd.f32 %v1739, %v1875
        %1877 = vdwg.mxu0
        %v1878 = vtanh.pop %v1832
        %v1879 = vtanh.pop %v1834
        %v1880 = vtanh.pop %v1838
        %v1881 = vtanh.pop %v1840
        %v1882 = vtanh.pop %v1844
        %v1883 = vtanh.pop %v1846
        %v1884 = vtanh.pop %v1850
        %v1885 = vtanh.pop %v1852
        %v1886 = vxor.u32 %v1856, 2147483648
        %v1887 = vxor.u32 %v1858, 2147483648
        %v1888 = vxor.u32 %v1862, 2147483648
        %v1889 = vxor.u32 %v1864, 2147483648
        %v1890 = vxor.u32 %v1868, 2147483648
        %v1891 = vxor.u32 %v1870, 2147483648
        %v1892 = vxor.u32 %v1874, 2147483648
        %v1893 = vxor.u32 %v1876, 2147483648
        %v1894 = vmul.f32 %v1886, 1.442695
        %v1895 = vpow.pop %v1894
        %v1896 = vmul.f32 %v1887, 1.442695
        %v1897 = vpow.pop %v1896
        %v1898 = vmul.f32 %v1888, 1.442695
        %v1899 = vpow.pop %v1898
        %v1900 = vmul.f32 %v1889, 1.442695
        %v1901 = vpow.pop %v1900
        %v1902 = vmul.f32 %v1890, 1.442695
        %v1903 = vpow.pop %v1902
        %v1904 = vmul.f32 %v1891, 1.442695
        %v1905 = vpow.pop %v1904
        %v1906 = vmul.f32 %v1892, 1.442695
        %v1907 = vpow.pop %v1906
        %v1908 = vmul.f32 %v1893, 1.442695
        %v1909 = vpow.pop %v1908
        %v1910 = vadd.f32 %v1895, 1.0
        %v1911 = vadd.f32 %v1897, 1.0
        %v1912 = vadd.f32 %v1899, 1.0
        %v1913 = vadd.f32 %v1901, 1.0
        %v1914 = vadd.f32 %v1903, 1.0
        %v1915 = vadd.f32 %v1905, 1.0
        %v1916 = vadd.f32 %v1907, 1.0
        %v1917 = vadd.f32 %v1909, 1.0
        %v1918 = vrcp.pop %v1910
        %v1919 = vmul.f32 1.0, %v1918
        %v1920 = vrcp.pop %v1911
        %v1921 = vmul.f32 1.0, %v1920
        %v1922 = vrcp.pop %v1912
        %v1923 = vmul.f32 1.0, %v1922
        %v1924 = vrcp.pop %v1913
        %v1925 = vmul.f32 1.0, %v1924
        %v1926 = vrcp.pop %v1914
        %v1927 = vmul.f32 1.0, %v1926
        %v1928 = vrcp.pop %v1915
        %v1929 = vmul.f32 1.0, %v1928
        %v1930 = vrcp.pop %v1916
        %v1931 = vmul.f32 1.0, %v1930
        %v1932 = vrcp.pop %v1917
        %v1933 = vmul.f32 1.0, %v1932
        %v1934 = vmul.f32 %v1878, %v1919
        %v1935 = vmul.f32 %v1879, %v1921
        %v1936 = vmul.f32 %v1880, %v1923
        %v1937 = vmul.f32 %v1881, %v1925
        %v1938 = vmul.f32 %v1882, %v1927
        %v1939 = vmul.f32 %v1883, %v1929
        %v1940 = vmul.f32 %v1884, %v1931
        %v1941 = vmul.f32 %v1885, %v1933
        %s1942 = scalar_lea.vmem %s5, 64
        %v1943 = vld [vmem:[%s1942] sm:$0xff]
        %v1944 = vld [vmem:[%s1942 + $0x8] sm:$0xff]
        %v1945 = vld [vmem:[%s1942 + $0x10] sm:$0xff]
        %v1946 = vld [vmem:[%s1942 + $0x18] sm:$0xff]
        %v1947 = vld [vmem:[%s1942 + $0x20] sm:$0xff]
        %v1948 = vld [vmem:[%s1942 + $0x28] sm:$0xff]
        %v1949 = vld [vmem:[%s1942 + $0x30] sm:$0xff]
        %v1950 = vld [vmem:[%s1942 + $0x38] sm:$0xff]
        %s1951 = scalar_lea.vmem %s6, 64
        %v1952 = vld [vmem:[%s1951] sm:$0xff]
        %v1953 = vld [vmem:[%s1951 + $0x8] sm:$0xff]
        %v1954 = vld [vmem:[%s1951 + $0x10] sm:$0xff]
        %v1955 = vld [vmem:[%s1951 + $0x18] sm:$0xff]
        %v1956 = vld [vmem:[%s1951 + $0x20] sm:$0xff]
        %v1957 = vld [vmem:[%s1951 + $0x28] sm:$0xff]
        %v1958 = vld [vmem:[%s1951 + $0x30] sm:$0xff]
        %v1959 = vld [vmem:[%s1951 + $0x38] sm:$0xff]
        %1961 = vset.pattern.permute.xlu0 0
        %1962 = vperm.xlu0 %1961, %v1952
        %v1963 = vpop.permute.xlu0 %1962
        %1965 = vset.pattern.permute.xlu0 0
        %1966 = vperm.xlu0 %1965, %v1953
        %v1967 = vpop.permute.xlu0 %1966
        %1969 = vset.pattern.permute.xlu0 0
        %1970 = vperm.xlu0 %1969, %v1954
        %v1971 = vpop.permute.xlu0 %1970
        %1973 = vset.pattern.permute.xlu0 0
        %1974 = vperm.xlu0 %1973, %v1955
        %v1975 = vpop.permute.xlu0 %1974
        %1977 = vset.pattern.permute.xlu0 0
        %1978 = vperm.xlu0 %1977, %v1956
        %v1979 = vpop.permute.xlu0 %1978
        %1982 = vset.pattern.permute.xlu0 0
        %1983 = vperm.xlu0 %1982, %v1957
        %v1984 = vpop.permute.xlu0 %1983
        %1987 = vset.pattern.permute.xlu0 0
        %1988 = vperm.xlu0 %1987, %v1958
        %v1989 = vpop.permute.xlu0 %1988
        %1992 = vset.pattern.permute.xlu0 0
        %1993 = vperm.xlu0 %1992, %v1959
        %v1994 = vpop.permute.xlu0 %1993
        %v1997 = vsel %vm921, %v1943, 0
        %v2000 = vsel %vm921, %v1944, 0
        %v2003 = vsel %vm921, %v1945, 0
        %v2006 = vsel %vm921, %v1946, 0
        %v2009 = vsel %vm921, %v1947, 0
        %v2012 = vsel %vm921, %v1948, 0
        %v2015 = vsel %vm921, %v1949, 0
        %v2018 = vsel %vm921, %v1950, 0
        %2020 = vmatprep.subr.mxu0 %v1935
        %2021 = vmatpush1.msra.mxu0 %v1934
        %2022 = vmatprep.subr.mxu0 %v1937
        %2023 = vmatpush1.msra.mxu0 %v1936
        %2024 = vmatprep.subr.mxu0 %v1939
        %2025 = vmatpush1.msra.mxu0 %v1938
        %2026 = vmatprep.subr.mxu0 %v1941
        %2027 = vmatpush1.msra.mxu0 %v1940
        %2028 = vmatprep.subr.mxu0 0.0
        %2029 = vmatpush1.msra.mxu0 0.0
        %2030 = vmatprep.subr.mxu0 0.0
        %2031 = vmatpush1.msra.mxu0 0.0
        %2032 = vmatprep.subr.mxu0 0.0
        %2033 = vmatpush1.msra.mxu0 0.0
        %2034 = vmatprep.subr.mxu0 0.0
        %2035 = vmatpush1.msra.mxu0 0.0
        %2036 = vmatprep.subr.mxu0 0.0
        %2037 = vmatpush1.msra.mxu0 0.0
        %2038 = vmatprep.subr.mxu0 0.0
        %2039 = vmatpush1.msra.mxu0 0.0
        %2040 = vmatprep.subr.mxu0 0.0
        %2041 = vmatpush1.msra.mxu0 0.0
        %2042 = vmatprep.subr.mxu0 0.0
        %2043 = vmatpush1.msra.mxu0 0.0
        %2044 = vmatprep.subr.mxu0 0.0
        %2045 = vmatpush1.msra.mxu0 0.0
        %2046 = vmatprep.subr.mxu0 0.0
        %2047 = vmatpush1.msra.mxu0 0.0
        %2048 = vmatprep.subr.mxu0 0.0
        %2049 = vmatpush1.msra.mxu0 0.0
        %2050 = vmatprep.subr.mxu0 0.0
        %2051 = vmatpush1.msra.mxu0 0.0
        %2052 = vmatprep.subr.mxu0 0.0
        %2053 = vmatpush1.msra.mxu0 0.0
        %2054 = vmatprep.subr.mxu0 0.0
        %2055 = vmatpush1.msra.mxu0 0.0
        %2056 = vmatprep.subr.mxu0 0.0
        %2057 = vmatpush1.msra.mxu0 0.0
        %2058 = vmatprep.subr.mxu0 0.0
        %2059 = vmatpush1.msra.mxu0 0.0
        %2060 = vmatprep.subr.mxu0 0.0
        %2061 = vmatpush1.msra.mxu0 0.0
        %2062 = vmatprep.subr.mxu0 0.0
        %2063 = vmatpush1.msra.mxu0 0.0
        %2064 = vmatprep.subr.mxu0 0.0
        %2065 = vmatpush1.msra.mxu0 0.0
        %2066 = vmatprep.subr.mxu0 0.0
        %2067 = vmatpush1.msra.mxu0 0.0
        %2068 = vmatprep.subr.mxu0 0.0
        %2069 = vmatpush1.msra.mxu0 0.0
        %2070 = vmatprep.subr.mxu0 0.0
        %2071 = vmatpush1.msra.mxu0 0.0
        %2072 = vmatprep.subr.mxu0 0.0
        %2073 = vmatpush1.msra.mxu0 0.0
        %2074 = vmatprep.subr.mxu0 0.0
        %2075 = vmatpush1.msra.mxu0 0.0
        %2076 = vmatprep.subr.mxu0 0.0
        %2077 = vmatpush1.msra.mxu0 0.0
        %2078 = vmatprep.subr.mxu0 0.0
        %2079 = vmatpush1.msra.mxu0 0.0
        %2080 = vmatprep.subr.mxu0 0.0
        %2081 = vmatpush1.msra.mxu0 0.0
        %2082 = vmatprep.subr.mxu0 0.0
        %2083 = vmatpush1.msra.mxu0 0.0
        %2084 = vmatprep.mubr.f32.mxu0 0.0
        %2085 = vmatmul.mubr.f32.gmra.mrb[0].mxu0 %v1997
        %v2086 = vpop.f32.mrb[0].mxu0
        %v2087 = vpop.f32.mrb[0].mxu0
        %2088 = vmatprep.mubr.f32.mxu0 0.0
        %2089 = vmatmul.mubr.f32.gmra.mrb[0].mxu0 %v2000
        %v2090 = vpop.f32.mrb[0].mxu0
        %v2091 = vpop.f32.mrb[0].mxu0
        %2092 = vmatprep.mubr.f32.mxu0 0.0
        %2093 = vmatmul.mubr.f32.gmra.mrb[0].mxu0 %v2003
        %v2094 = vpop.f32.mrb[0].mxu0
        %v2095 = vpop.f32.mrb[0].mxu0
        %2096 = vmatprep.mubr.f32.mxu0 0.0
        %2097 = vmatmul.mubr.f32.gmra.mrb[0].mxu0 %v2006
        %v2098 = vpop.f32.mrb[0].mxu0
        %v2099 = vpop.f32.mrb[0].mxu0
        %2100 = vmatprep.mubr.f32.mxu0 0.0
        %2101 = vmatmul.mubr.f32.gmra.mrb[0].mxu0 %v2009
        %v2102 = vpop.f32.mrb[0].mxu0
        %v2103 = vadd.f32 %v1979, %v2102
        %v2104 = vpop.f32.mrb[0].mxu0
        %v2105 = vadd.f32 %v1979, %v2104
        %2106 = vmatprep.mubr.f32.mxu0 0.0
        %2107 = vmatmul.mubr.f32.gmra.mrb[0].mxu0 %v2012
        %v2108 = vpop.f32.mrb[0].mxu0
        %v2109 = vadd.f32 %v1984, %v2108
        %v2110 = vpop.f32.mrb[0].mxu0
        %v2111 = vadd.f32 %v1984, %v2110
        %2112 = vmatprep.mubr.f32.mxu0 0.0
        %2113 = vmatmul.mubr.f32.gmra.mrb[0].mxu0 %v2015
        %v2114 = vpop.f32.mrb[0].mxu0
        %v2115 = vadd.f32 %v1989, %v2114
        %v2116 = vpop.f32.mrb[0].mxu0
        %v2117 = vadd.f32 %v1989, %v2116
        %2118 = vmatprep.mubr.f32.mxu0 0.0
        %2119 = vmatmul.mubr.f32.gmra.mrb[0].mxu0 %v2018
        %v2120 = vpop.f32.mrb[0].mxu0
        %v2121 = vadd.f32 %v1994, %v2120
        %v2122 = vpop.f32.mrb[0].mxu0
        %v2123 = vadd.f32 %v1994, %v2122
        %2124 = vdwg.mxu0
        %v2125 = vadd.f32 %v1294, %v2103
        %v2126 = vadd.f32 %v1296, %v2105
        %v2127 = vadd.f32 %v1300, %v2109
        %v2128 = vadd.f32 %v1302, %v2111
        %v2129 = vadd.f32 %v1306, %v2115
        %v2130 = vadd.f32 %v1308, %v2117
        %v2131 = vadd.f32 %v1312, %v2121
        %v2132 = vadd.f32 %v1314, %v2123
        %v2133 = vld [vmem:[%s7] sm:$0xff]
        %v2134 = vld [vmem:[%s8] sm:$0xff]
        %2136 = vset.pattern.permute.xlu0 0
        %2137 = vperm.xlu0 %2136, %v2134
        %v2138 = vpop.permute.xlu0 %2137
        %v2141 = vsel %vm921, %v2133, 0
        %2143 = vmatprep.subr.mxu0 %v2126
        %2144 = vmatpush1.msra.mxu0 %v2125
        %2145 = vmatprep.subr.mxu0 %v2128
        %2146 = vmatpush1.msra.mxu0 %v2127
        %2147 = vmatprep.subr.mxu0 %v2130
        %2148 = vmatpush1.msra.mxu0 %v2129
        %2149 = vmatprep.subr.mxu0 %v2132
        %2150 = vmatpush1.msra.mxu0 %v2131
        %2151 = vmatprep.subr.mxu0 0.0
        %2152 = vmatpush1.msra.mxu0 0.0
        %2153 = vmatprep.subr.mxu0 0.0
        %2154 = vmatpush1.msra.mxu0 0.0
        %2155 = vmatprep.subr.mxu0 0.0
        %2156 = vmatpush1.msra.mxu0 0.0
        %2157 = vmatprep.subr.mxu0 0.0
        %2158 = vmatpush1.msra.mxu0 0.0
        %2159 = vmatprep.subr.mxu0 0.0
        %2160 = vmatpush1.msra.mxu0 0.0
        %2161 = vmatprep.subr.mxu0 0.0
        %2162 = vmatpush1.msra.mxu0 0.0
        %2163 = vmatprep.subr.mxu0 0.0
        %2164 = vmatpush1.msra.mxu0 0.0
        %2165 = vmatprep.subr.mxu0 0.0
        %2166 = vmatpush1.msra.mxu0 0.0
        %2167 = vmatprep.subr.mxu0 0.0
        %2168 = vmatpush1.msra.mxu0 0.0
        %2169 = vmatprep.subr.mxu0 0.0
        %2170 = vmatpush1.msra.mxu0 0.0
        %2171 = vmatprep.subr.mxu0 0.0
        %2172 = vmatpush1.msra.mxu0 0.0
        %2173 = vmatprep.subr.mxu0 0.0
        %2174 = vmatpush1.msra.mxu0 0.0
        %2175 = vmatprep.subr.mxu0 0.0
        %2176 = vmatpush1.msra.mxu0 0.0
        %2177 = vmatprep.subr.mxu0 0.0
        %2178 = vmatpush1.msra.mxu0 0.0
        %2179 = vmatprep.subr.mxu0 0.0
        %2180 = vmatpush1.msra.mxu0 0.0
        %2181 = vmatprep.subr.mxu0 0.0
        %2182 = vmatpush1.msra.mxu0 0.0
        %2183 = vmatprep.subr.mxu0 0.0
        %2184 = vmatpush1.msra.mxu0 0.0
        %2185 = vmatprep.subr.mxu0 0.0
        %2186 = vmatpush1.msra.mxu0 0.0
        %2187 = vmatprep.subr.mxu0 0.0
        %2188 = vmatpush1.msra.mxu0 0.0
        %2189 = vmatprep.subr.mxu0 0.0
        %2190 = vmatpush1.msra.mxu0 0.0
        %2191 = vmatprep.subr.mxu0 0.0
        %2192 = vmatpush1.msra.mxu0 0.0
        %2193 = vmatprep.subr.mxu0 0.0
        %2194 = vmatpush1.msra.mxu0 0.0
        %2195 = vmatprep.subr.mxu0 0.0
        %2196 = vmatpush1.msra.mxu0 0.0
        %2197 = vmatprep.subr.mxu0 0.0
        %2198 = vmatpush1.msra.mxu0 0.0
        %2199 = vmatprep.subr.mxu0 0.0
        %2200 = vmatpush1.msra.mxu0 0.0
        %2201 = vmatprep.subr.mxu0 0.0
        %2202 = vmatpush1.msra.mxu0 0.0
        %2203 = vmatprep.subr.mxu0 0.0
        %2204 = vmatpush1.msra.mxu0 0.0
        %2205 = vmatprep.subr.mxu0 0.0
        %2206 = vmatpush1.msra.mxu0 0.0
        %2207 = vmatprep.mubr.f32.mxu0 0.0
        %2208 = vmatmul.mubr.f32.gmra.mrb[0].mxu0 %v2141
        %v2209 = vpop.f32.mrb[0].mxu0
        %v2210 = vadd.f32 %v2138, %v2209
        %v2211 = vpop.f32.mrb[0].mxu0
        %v2212 = vadd.f32 %v2138, %v2211
        %2213 = vdwg.mxu0
        %v2214 = vadd.f32 %v370, %v2210
        %v2215 = vadd.f32 %v371, %v2212
        %s2216 = scalar_lea.vmem %s2, 32
        %v2217 = vld [vmem:[%s2216] sm:$0xff]
        %v2218 = vld [vmem:[%s2216 + $0x8] sm:$0xff]
        %v2219 = vld [vmem:[%s2216 + $0x10] sm:$0xff]
        %v2220 = vld [vmem:[%s2216 + $0x18] sm:$0xff]
        %s2221 = scalar_lea.vmem %s3, 32
        %v2222 = vld [vmem:[%s2221] sm:$0xff]
        %v2223 = vld [vmem:[%s2221 + $0x8] sm:$0xff]
        %v2224 = vld [vmem:[%s2221 + $0x10] sm:$0xff]
        %v2225 = vld [vmem:[%s2221 + $0x18] sm:$0xff]
        %2227 = vset.pattern.permute.xlu0 0
        %2228 = vperm.xlu0 %2227, %v2222
        %v2229 = vpop.permute.xlu0 %2228
        %2232 = vset.pattern.permute.xlu0 0
        %2233 = vperm.xlu0 %2232, %v2223
        %v2234 = vpop.permute.xlu0 %2233
        %2237 = vset.pattern.permute.xlu0 0
        %2238 = vperm.xlu0 %2237, %v2224
        %v2239 = vpop.permute.xlu0 %2238
        %2242 = vset.pattern.permute.xlu0 0
        %2243 = vperm.xlu0 %2242, %v2225
        %v2244 = vpop.permute.xlu0 %2243
        %v2247 = vsel %vm400, %v2217, 0
        %v2250 = vsel %vm400, %v2218, 0
        %v2253 = vsel %vm400, %v2219, 0
        %v2256 = vsel %vm400, %v2220, 0
        %2258 = vmatprep.subr.mxu0 %v2215
        %2259 = vmatpush1.msra.mxu0 %v2214
        %2260 = vmatprep.subr.mxu0 0.0
        %2261 = vmatpush1.msra.mxu0 0.0
        %2262 = vmatprep.subr.mxu0 0.0
        %2263 = vmatpush1.msra.mxu0 0.0
        %2264 = vmatprep.subr.mxu0 0.0
        %2265 = vmatpush1.msra.mxu0 0.0
        %2266 = vmatprep.subr.mxu0 0.0
        %2267 = vmatpush1.msra.mxu0 0.0
        %2268 = vmatprep.subr.mxu0 0.0
        %2269 = vmatpush1.msra.mxu0 0.0
        %2270 = vmatprep.subr.mxu0 0.0
        %2271 = vmatpush1.msra.mxu0 0.0
        %2272 = vmatprep.subr.mxu0 0.0
        %2273 = vmatpush1.msra.mxu0 0.0
        %2274 = vmatprep.subr.mxu0 0.0
        %2275 = vmatpush1.msra.mxu0 0.0
        %2276 = vmatprep.subr.mxu0 0.0
        %2277 = vmatpush1.msra.mxu0 0.0
        %2278 = vmatprep.subr.mxu0 0.0
        %2279 = vmatpush1.msra.mxu0 0.0
        %2280 = vmatprep.subr.mxu0 0.0
        %2281 = vmatpush1.msra.mxu0 0.0
        %2282 = vmatprep.subr.mxu0 0.0
        %2283 = vmatpush1.msra.mxu0 0.0
        %2284 = vmatprep.subr.mxu0 0.0
        %2285 = vmatpush1.msra.mxu0 0.0
        %2286 = vmatprep.subr.mxu0 0.0
        %2287 = vmatpush1.msra.mxu0 0.0
        %2288 = vmatprep.subr.mxu0 0.0
        %2289 = vmatpush1.msra.mxu0 0.0
        %2290 = vmatprep.subr.mxu0 0.0
        %2291 = vmatpush1.msra.mxu0 0.0
        %2292 = vmatprep.subr.mxu0 0.0
        %2293 = vmatpush1.msra.mxu0 0.0
        %2294 = vmatprep.subr.mxu0 0.0
        %2295 = vmatpush1.msra.mxu0 0.0
        %2296 = vmatprep.subr.mxu0 0.0
        %2297 = vmatpush1.msra.mxu0 0.0
        %2298 = vmatprep.subr.mxu0 0.0
        %2299 = vmatpush1.msra.mxu0 0.0
        %2300 = vmatprep.subr.mxu0 0.0
        %2301 = vmatpush1.msra.mxu0 0.0
        %2302 = vmatprep.subr.mxu0 0.0
        %2303 = vmatpush1.msra.mxu0 0.0
        %2304 = vmatprep.subr.mxu0 0.0
        %2305 = vmatpush1.msra.mxu0 0.0
        %2306 = vmatprep.subr.mxu0 0.0
        %2307 = vmatpush1.msra.mxu0 0.0
        %2308 = vmatprep.subr.mxu0 0.0
        %2309 = vmatpush1.msra.mxu0 0.0
        %2310 = vmatprep.subr.mxu0 0.0
        %2311 = vmatpush1.msra.mxu0 0.0
        %2312 = vmatprep.subr.mxu0 0.0
        %2313 = vmatpush1.msra.mxu0 0.0
        %2314 = vmatprep.subr.mxu0 0.0
        %2315 = vmatpush1.msra.mxu0 0.0
        %2316 = vmatprep.subr.mxu0 0.0
        %2317 = vmatpush1.msra.mxu0 0.0
        %2318 = vmatprep.subr.mxu0 0.0
        %2319 = vmatpush1.msra.mxu0 0.0
        %2320 = vmatprep.subr.mxu0 0.0
        %2321 = vmatpush1.msra.mxu0 0.0
        %2322 = vmatprep.mubr.f32.mxu0 0.0
        %2323 = vmatmul.mubr.f32.gmra.mrb[0].mxu0 %v2247
        %v2324 = vpop.f32.mrb[0].mxu0
        %v2325 = vadd.f32 %v2229, %v2324
        %v2326 = vpop.f32.mrb[0].mxu0
        %v2327 = vadd.f32 %v2229, %v2326
        %2328 = vmatprep.mubr.f32.mxu0 0.0
        %2329 = vmatmul.mubr.f32.gmra.mrb[0].mxu0 %v2250
        %v2330 = vpop.f32.mrb[0].mxu0
        %v2331 = vadd.f32 %v2234, %v2330
        %v2332 = vpop.f32.mrb[0].mxu0
        %v2333 = vadd.f32 %v2234, %v2332
        %2334 = vmatprep.mubr.f32.mxu0 0.0
        %2335 = vmatmul.mubr.f32.gmra.mrb[0].mxu0 %v2253
        %v2336 = vpop.f32.mrb[0].mxu0
        %v2337 = vadd.f32 %v2239, %v2336
        %v2338 = vpop.f32.mrb[0].mxu0
        %v2339 = vadd.f32 %v2239, %v2338
        %2340 = vmatprep.mubr.f32.mxu0 0.0
        %2341 = vmatmul.mubr.f32.gmra.mrb[0].mxu0 %v2256
        %v2342 = vpop.f32.mrb[0].mxu0
        %v2343 = vadd.f32 %v2244, %v2342
        %v2344 = vpop.f32.mrb[0].mxu0
        %v2345 = vadd.f32 %v2244, %v2344
        %2346 = vdwg.mxu0
        %2347 = vst [vmem:[#allocation2 + $0x8] sm:$0xff] %v2325
        %2348 = vst [vmem:[#allocation2 + $0x10] sm:$0xff] %v2327
        %2349 = vst [vmem:[#allocation2 + $0x28] sm:$0xff] %v2331
        %2350 = vst [vmem:[#allocation2 + $0x30] sm:$0xff] %v2333
        %2351 = vst [vmem:[#allocation2 + $0x48] sm:$0xff] %v2337
        %2352 = vst [vmem:[#allocation2 + $0x50] sm:$0xff] %v2339
        %2353 = vst [vmem:[#allocation2 + $0x68] sm:$0xff] %v2343
        %2354 = vst [vmem:[#allocation2 + $0x70] sm:$0xff] %v2345
        %v2355 = vld [vmem:[#allocation2] sm:$0xff]
        %v2356 = vld [vmem:[#allocation2 + $0x8] sm:$0xff]
        %v2357 = vld [vmem:[#allocation2 + $0x10] sm:$0xff]
        %v2358 = vld [vmem:[#allocation2 + $0x20] sm:$0xff]
        %v2359 = vld [vmem:[#allocation2 + $0x28] sm:$0xff]
        %v2360 = vld [vmem:[#allocation2 + $0x30] sm:$0xff]
        %v2361 = vld [vmem:[#allocation2 + $0x40] sm:$0xff]
        %v2362 = vld [vmem:[#allocation2 + $0x48] sm:$0xff]
        %v2363 = vld [vmem:[#allocation2 + $0x50] sm:$0xff]
        %v2364 = vld [vmem:[#allocation2 + $0x60] sm:$0xff]
        %v2365 = vld [vmem:[#allocation2 + $0x68] sm:$0xff]
        %v2366 = vld [vmem:[#allocation2 + $0x70] sm:$0xff]
        %2379 = vrot.lane.b32.xlu0 %v2355, 2
        %v2380 = vpop.permute.xlu0 %2379
        %2381 = vrot.lane.b32.xlu0 %v2356, 2
        %v2382 = vpop.permute.xlu0 %2381
        %2383 = vrot.lane.b32.xlu0 %v2357, 2
        %v2384 = vpop.permute.xlu0 %2383
        %2385 = vrot.lane.b32.xlu0 %v2358, 2
        %v2386 = vpop.permute.xlu0 %2385
        %2387 = vrot.lane.b32.xlu0 %v2359, 2
        %v2388 = vpop.permute.xlu0 %2387
        %2389 = vrot.lane.b32.xlu0 %v2360, 2
        %v2390 = vpop.permute.xlu0 %2389
        %2391 = vrot.lane.b32.xlu0 %v2361, 2
        %v2392 = vpop.permute.xlu0 %2391
        %2393 = vrot.lane.b32.xlu0 %v2362, 2
        %v2394 = vpop.permute.xlu0 %2393
        %2395 = vrot.lane.b32.xlu0 %v2363, 2
        %v2396 = vpop.permute.xlu0 %2395
        %2397 = vrot.lane.b32.xlu0 %v2364, 2
        %v2398 = vpop.permute.xlu0 %2397
        %2399 = vrot.lane.b32.xlu0 %v2365, 2
        %v2400 = vpop.permute.xlu0 %2399
        %2401 = vrot.lane.b32.xlu0 %v2366, 2
        %v2402 = vpop.permute.xlu0 %2401
        %v2403 = vsel %vm354, %v2380, %v2382
        %v2404 = vsel %vm354, %v2382, %v2384
        %v2405 = vsel %vm354, %v2386, %v2388
        %v2406 = vsel %vm354, %v2388, %v2390
        %v2407 = vsel %vm354, %v2392, %v2394
        %v2408 = vsel %vm354, %v2394, %v2396
        %v2409 = vsel %vm354, %v2398, %v2400
        %v2410 = vsel %vm354, %v2400, %v2402
        %2419 = vst [vmem:[#allocation3] sm:$0xff] %v2403
        %2420 = vst [vmem:[#allocation3 + $0x8] sm:$0xff] %v2404
        %2421 = vst [vmem:[#allocation3 + $0x10] sm:$0xff] %v2405
        %2422 = vst [vmem:[#allocation3 + $0x18] sm:$0xff] %v2406
        %2423 = vst [vmem:[#allocation3 + $0x20] sm:$0xff] %v2407
        %2424 = vst [vmem:[#allocation3 + $0x28] sm:$0xff] %v2408
        %2425 = vst [vmem:[#allocation3 + $0x30] sm:$0xff] %v2409
        %2426 = vst [vmem:[#allocation3 + $0x38] sm:$0xff] %v2410
        %v2427 = vld [vmem:[#allocation2] sm:$0xff]
        %v2428 = vld [vmem:[#allocation2 + $0x8] sm:$0xff]
        %v2429 = vld [vmem:[#allocation2 + $0x10] sm:$0xff]
        %v2430 = vld [vmem:[#allocation2 + $0x20] sm:$0xff]
        %v2431 = vld [vmem:[#allocation2 + $0x28] sm:$0xff]
        %v2432 = vld [vmem:[#allocation2 + $0x30] sm:$0xff]
        %v2433 = vld [vmem:[#allocation2 + $0x40] sm:$0xff]
        %v2434 = vld [vmem:[#allocation2 + $0x48] sm:$0xff]
        %v2435 = vld [vmem:[#allocation2 + $0x50] sm:$0xff]
        %v2436 = vld [vmem:[#allocation2 + $0x60] sm:$0xff]
        %v2437 = vld [vmem:[#allocation2 + $0x68] sm:$0xff]
        %v2438 = vld [vmem:[#allocation2 + $0x70] sm:$0xff]
        %2451 = vrot.lane.b32.xlu0 %v2427, 1
        %v2452 = vpop.permute.xlu0 %2451
        %2453 = vrot.lane.b32.xlu0 %v2428, 1
        %v2454 = vpop.permute.xlu0 %2453
        %2455 = vrot.lane.b32.xlu0 %v2429, 1
        %v2456 = vpop.permute.xlu0 %2455
        %2457 = vrot.lane.b32.xlu0 %v2430, 1
        %v2458 = vpop.permute.xlu0 %2457
        %2459 = vrot.lane.b32.xlu0 %v2431, 1
        %v2460 = vpop.permute.xlu0 %2459
        %2461 = vrot.lane.b32.xlu0 %v2432, 1
        %v2462 = vpop.permute.xlu0 %2461
        %2463 = vrot.lane.b32.xlu0 %v2433, 1
        %v2464 = vpop.permute.xlu0 %2463
        %2465 = vrot.lane.b32.xlu0 %v2434, 1
        %v2466 = vpop.permute.xlu0 %2465
        %2467 = vrot.lane.b32.xlu0 %v2435, 1
        %v2468 = vpop.permute.xlu0 %2467
        %2469 = vrot.lane.b32.xlu0 %v2436, 1
        %v2470 = vpop.permute.xlu0 %2469
        %2471 = vrot.lane.b32.xlu0 %v2437, 1
        %v2472 = vpop.permute.xlu0 %2471
        %2473 = vrot.lane.b32.xlu0 %v2438, 1
        %v2474 = vpop.permute.xlu0 %2473
        %v2475 = vsel %vm630, %v2452, %v2454
        %v2476 = vsel %vm630, %v2454, %v2456
        %v2477 = vsel %vm630, %v2458, %v2460
        %v2478 = vsel %vm630, %v2460, %v2462
        %v2479 = vsel %vm630, %v2464, %v2466
        %v2480 = vsel %vm630, %v2466, %v2468
        %v2481 = vsel %vm630, %v2470, %v2472
        %v2482 = vsel %vm630, %v2472, %v2474
        %2491 = vst [vmem:[#allocation3 + $0x40] sm:$0xff] %v2475
        %2492 = vst [vmem:[#allocation3 + $0x48] sm:$0xff] %v2476
        %2493 = vst [vmem:[#allocation3 + $0x50] sm:$0xff] %v2477
        %2494 = vst [vmem:[#allocation3 + $0x58] sm:$0xff] %v2478
        %2495 = vst [vmem:[#allocation3 + $0x60] sm:$0xff] %v2479
        %2496 = vst [vmem:[#allocation3 + $0x68] sm:$0xff] %v2480
        %2497 = vst [vmem:[#allocation3 + $0x70] sm:$0xff] %v2481
        %2498 = vst [vmem:[#allocation3 + $0x78] sm:$0xff] %v2482
        %v2499 = vld [vmem:[#allocation2 + $0x8] sm:$0xff]
        %v2500 = vld [vmem:[#allocation2 + $0x10] sm:$0xff]
        %v2501 = vld [vmem:[#allocation2 + $0x28] sm:$0xff]
        %v2502 = vld [vmem:[#allocation2 + $0x30] sm:$0xff]
        %v2503 = vld [vmem:[#allocation2 + $0x48] sm:$0xff]
        %v2504 = vld [vmem:[#allocation2 + $0x50] sm:$0xff]
        %v2505 = vld [vmem:[#allocation2 + $0x68] sm:$0xff]
        %v2506 = vld [vmem:[#allocation2 + $0x70] sm:$0xff]
        %2507 = vst [vmem:[#allocation3 + $0x80] sm:$0xff] %v2499
        %2508 = vst [vmem:[#allocation3 + $0x88] sm:$0xff] %v2500
        %2509 = vst [vmem:[#allocation3 + $0x90] sm:$0xff] %v2501
        %2510 = vst [vmem:[#allocation3 + $0x98] sm:$0xff] %v2502
        %2511 = vst [vmem:[#allocation3 + $0xa0] sm:$0xff] %v2503
        %2512 = vst [vmem:[#allocation3 + $0xa8] sm:$0xff] %v2504
        %2513 = vst [vmem:[#allocation3 + $0xb0] sm:$0xff] %v2505
        %2514 = vst [vmem:[#allocation3 + $0xb8] sm:$0xff] %v2506
        %v2515 = vld [vmem:[#allocation2 + $0x8] sm:$0xff]
        %v2516 = vld [vmem:[#allocation2 + $0x10] sm:$0xff]
        %v2517 = vld [vmem:[#allocation2 + $0x18] sm:$0xff]
        %v2518 = vld [vmem:[#allocation2 + $0x28] sm:$0xff]
        %v2519 = vld [vmem:[#allocation2 + $0x30] sm:$0xff]
        %v2520 = vld [vmem:[#allocation2 + $0x38] sm:$0xff]
        %v2521 = vld [vmem:[#allocation2 + $0x48] sm:$0xff]
        %v2522 = vld [vmem:[#allocation2 + $0x50] sm:$0xff]
        %v2523 = vld [vmem:[#allocation2 + $0x58] sm:$0xff]
        %v2524 = vld [vmem:[#allocation2 + $0x68] sm:$0xff]
        %v2525 = vld [vmem:[#allocation2 + $0x70] sm:$0xff]
        %v2526 = vld [vmem:[#allocation2 + $0x78] sm:$0xff]
        %2539 = vrot.lane.b32.xlu0 %v2515, 127
        %v2540 = vpop.permute.xlu0 %2539
        %2541 = vrot.lane.b32.xlu0 %v2516, 127
        %v2542 = vpop.permute.xlu0 %2541
        %2543 = vrot.lane.b32.xlu0 %v2517, 127
        %v2544 = vpop.permute.xlu0 %2543
        %2545 = vrot.lane.b32.xlu0 %v2518, 127
        %v2546 = vpop.permute.xlu0 %2545
        %2547 = vrot.lane.b32.xlu0 %v2519, 127
        %v2548 = vpop.permute.xlu0 %2547
        %2549 = vrot.lane.b32.xlu0 %v2520, 127
        %v2550 = vpop.permute.xlu0 %2549
        %2551 = vrot.lane.b32.xlu0 %v2521, 127
        %v2552 = vpop.permute.xlu0 %2551
        %2553 = vrot.lane.b32.xlu0 %v2522, 127
        %v2554 = vpop.permute.xlu0 %2553
        %2555 = vrot.lane.b32.xlu0 %v2523, 127
        %v2556 = vpop.permute.xlu0 %2555
        %2557 = vrot.lane.b32.xlu0 %v2524, 127
        %v2558 = vpop.permute.xlu0 %2557
        %2559 = vrot.lane.b32.xlu0 %v2525, 127
        %v2560 = vpop.permute.xlu0 %2559
        %2561 = vrot.lane.b32.xlu0 %v2526, 127
        %v2562 = vpop.permute.xlu0 %2561
        %v2563 = vsel %vm719, %v2540, %v2542
        %v2564 = vsel %vm719, %v2542, %v2544
        %v2565 = vsel %vm719, %v2546, %v2548
        %v2566 = vsel %vm719, %v2548, %v2550
        %v2567 = vsel %vm719, %v2552, %v2554
        %v2568 = vsel %vm719, %v2554, %v2556
        %v2569 = vsel %vm719, %v2558, %v2560
        %v2570 = vsel %vm719, %v2560, %v2562
        %2579 = vst [vmem:[#allocation3 + $0xc0] sm:$0xff] %v2563
        %2580 = vst [vmem:[#allocation3 + $0xc8] sm:$0xff] %v2564
        %2581 = vst [vmem:[#allocation3 + $0xd0] sm:$0xff] %v2565
        %2582 = vst [vmem:[#allocation3 + $0xd8] sm:$0xff] %v2566
        %2583 = vst [vmem:[#allocation3 + $0xe0] sm:$0xff] %v2567
        %2584 = vst [vmem:[#allocation3 + $0xe8] sm:$0xff] %v2568
        %2585 = vst [vmem:[#allocation3 + $0xf0] sm:$0xff] %v2569
        %2586 = vst [vmem:[#allocation3 + $0xf8] sm:$0xff] %v2570
        %v2587 = vld [vmem:[#allocation2 + $0x8] sm:$0xff]
        %v2588 = vld [vmem:[#allocation2 + $0x10] sm:$0xff]
        %v2589 = vld [vmem:[#allocation2 + $0x18] sm:$0xff]
        %v2590 = vld [vmem:[#allocation2 + $0x28] sm:$0xff]
        %v2591 = vld [vmem:[#allocation2 + $0x30] sm:$0xff]
        %v2592 = vld [vmem:[#allocation2 + $0x38] sm:$0xff]
        %v2593 = vld [vmem:[#allocation2 + $0x48] sm:$0xff]
        %v2594 = vld [vmem:[#allocation2 + $0x50] sm:$0xff]
        %v2595 = vld [vmem:[#allocation2 + $0x58] sm:$0xff]
        %v2596 = vld [vmem:[#allocation2 + $0x68] sm:$0xff]
        %v2597 = vld [vmem:[#allocation2 + $0x70] sm:$0xff]
        %v2598 = vld [vmem:[#allocation2 + $0x78] sm:$0xff]
        %2611 = vrot.lane.b32.xlu0 %v2587, 126
        %v2612 = vpop.permute.xlu0 %2611
        %2613 = vrot.lane.b32.xlu0 %v2588, 126
        %v2614 = vpop.permute.xlu0 %2613
        %2615 = vrot.lane.b32.xlu0 %v2589, 126
        %v2616 = vpop.permute.xlu0 %2615
        %2617 = vrot.lane.b32.xlu0 %v2590, 126
        %v2618 = vpop.permute.xlu0 %2617
        %2619 = vrot.lane.b32.xlu0 %v2591, 126
        %v2620 = vpop.permute.xlu0 %2619
        %2621 = vrot.lane.b32.xlu0 %v2592, 126
        %v2622 = vpop.permute.xlu0 %2621
        %2623 = vrot.lane.b32.xlu0 %v2593, 126
        %v2624 = vpop.permute.xlu0 %2623
        %2625 = vrot.lane.b32.xlu0 %v2594, 126
        %v2626 = vpop.permute.xlu0 %2625
        %2627 = vrot.lane.b32.xlu0 %v2595, 126
        %v2628 = vpop.permute.xlu0 %2627
        %2629 = vrot.lane.b32.xlu0 %v2596, 126
        %v2630 = vpop.permute.xlu0 %2629
        %2631 = vrot.lane.b32.xlu0 %v2597, 126
        %v2632 = vpop.permute.xlu0 %2631
        %2633 = vrot.lane.b32.xlu0 %v2598, 126
        %v2634 = vpop.permute.xlu0 %2633
        %v2635 = vsel %vm792, %v2612, %v2614
        %v2636 = vsel %vm792, %v2614, %v2616
        %v2637 = vsel %vm792, %v2618, %v2620
        %v2638 = vsel %vm792, %v2620, %v2622
        %v2639 = vsel %vm792, %v2624, %v2626
        %v2640 = vsel %vm792, %v2626, %v2628
        %v2641 = vsel %vm792, %v2630, %v2632
        %v2642 = vsel %vm792, %v2632, %v2634
        %2651 = vst [vmem:[#allocation3 + $0x100] sm:$0xff] %v2635
        %2652 = vst [vmem:[#allocation3 + $0x108] sm:$0xff] %v2636
        %2653 = vst [vmem:[#allocation3 + $0x110] sm:$0xff] %v2637
        %2654 = vst [vmem:[#allocation3 + $0x118] sm:$0xff] %v2638
        %2655 = vst [vmem:[#allocation3 + $0x120] sm:$0xff] %v2639
        %2656 = vst [vmem:[#allocation3 + $0x128] sm:$0xff] %v2640
        %2657 = vst [vmem:[#allocation3 + $0x130] sm:$0xff] %v2641
        %2658 = vst [vmem:[#allocation3 + $0x138] sm:$0xff] %v2642
        %s2659 = scalar_lea.vmem %s4, 256
        %v2660 = vld [vmem:[%s2659] sm:$0xff]
        %v2661 = vld [vmem:[%s2659 + $0x8] sm:$0xff]
        %v2662 = vld [vmem:[%s2659 + $0x10] sm:$0xff]
        %v2663 = vld [vmem:[%s2659 + $0x18] sm:$0xff]
        %v2664 = vld [vmem:[%s2659 + $0x20] sm:$0xff]
        %v2665 = vld [vmem:[%s2659 + $0x28] sm:$0xff]
        %v2666 = vld [vmem:[%s2659 + $0x30] sm:$0xff]
        %v2667 = vld [vmem:[%s2659 + $0x38] sm:$0xff]
        %v2668 = vld [vmem:[%s2659 + $0x40] sm:$0xff]
        %v2669 = vld [vmem:[%s2659 + $0x48] sm:$0xff]
        %v2670 = vld [vmem:[%s2659 + $0x50] sm:$0xff]
        %v2671 = vld [vmem:[%s2659 + $0x58] sm:$0xff]
        %v2672 = vld [vmem:[%s2659 + $0x60] sm:$0xff]
        %v2673 = vld [vmem:[%s2659 + $0x68] sm:$0xff]
        %v2674 = vld [vmem:[%s2659 + $0x70] sm:$0xff]
        %v2675 = vld [vmem:[%s2659 + $0x78] sm:$0xff]
        %v2676 = vld [vmem:[#allocation3] sm:$0xff]
        %v2677 = vld [vmem:[#allocation3 + $0x8] sm:$0xff]
        %v2678 = vld [vmem:[#allocation3 + $0x10] sm:$0xff]
        %v2679 = vld [vmem:[#allocation3 + $0x18] sm:$0xff]
        %v2680 = vld [vmem:[#allocation3 + $0x20] sm:$0xff]
        %v2681 = vld [vmem:[#allocation3 + $0x28] sm:$0xff]
        %v2682 = vld [vmem:[#allocation3 + $0x30] sm:$0xff]
        %v2683 = vld [vmem:[#allocation3 + $0x38] sm:$0xff]
        %v2684 = vld [vmem:[#allocation3 + $0x40] sm:$0xff]
        %v2685 = vld [vmem:[#allocation3 + $0x48] sm:$0xff]
        %v2686 = vld [vmem:[#allocation3 + $0x50] sm:$0xff]
        %v2687 = vld [vmem:[#allocation3 + $0x58] sm:$0xff]
        %v2688 = vld [vmem:[#allocation3 + $0x60] sm:$0xff]
        %v2689 = vld [vmem:[#allocation3 + $0x68] sm:$0xff]
        %v2690 = vld [vmem:[#allocation3 + $0x70] sm:$0xff]
        %v2691 = vld [vmem:[#allocation3 + $0x78] sm:$0xff]
        %v2692 = vld [vmem:[#allocation3 + $0x80] sm:$0xff]
        %v2693 = vld [vmem:[#allocation3 + $0x88] sm:$0xff]
        %v2694 = vld [vmem:[#allocation3 + $0x90] sm:$0xff]
        %v2695 = vld [vmem:[#allocation3 + $0x98] sm:$0xff]
        %v2696 = vld [vmem:[#allocation3 + $0xa0] sm:$0xff]
        %v2697 = vld [vmem:[#allocation3 + $0xa8] sm:$0xff]
        %v2698 = vld [vmem:[#allocation3 + $0xb0] sm:$0xff]
        %v2699 = vld [vmem:[#allocation3 + $0xb8] sm:$0xff]
        %v2700 = vld [vmem:[#allocation3 + $0xc0] sm:$0xff]
        %v2701 = vld [vmem:[#allocation3 + $0xc8] sm:$0xff]
        %v2702 = vld [vmem:[#allocation3 + $0xd0] sm:$0xff]
        %v2703 = vld [vmem:[#allocation3 + $0xd8] sm:$0xff]
        %v2704 = vld [vmem:[#allocation3 + $0xe0] sm:$0xff]
        %v2705 = vld [vmem:[#allocation3 + $0xe8] sm:$0xff]
        %v2706 = vld [vmem:[#allocation3 + $0xf0] sm:$0xff]
        %v2707 = vld [vmem:[#allocation3 + $0xf8] sm:$0xff]
        %v2708 = vld [vmem:[#allocation3 + $0x100] sm:$0xff]
        %v2709 = vld [vmem:[#allocation3 + $0x108] sm:$0xff]
        %v2710 = vld [vmem:[#allocation3 + $0x110] sm:$0xff]
        %v2711 = vld [vmem:[#allocation3 + $0x118] sm:$0xff]
        %v2712 = vld [vmem:[#allocation3 + $0x120] sm:$0xff]
        %v2713 = vld [vmem:[#allocation3 + $0x128] sm:$0xff]
        %v2714 = vld [vmem:[#allocation3 + $0x130] sm:$0xff]
        %v2715 = vld [vmem:[#allocation3 + $0x138] sm:$0xff]
        %v2716 = vld [vmem:[%s350 + $0x80] sm:$0xff]
        %v2717 = vld [vmem:[%s350 + $0x88] sm:$0xff]
        %v2718 = vld [vmem:[%s350 + $0x90] sm:$0xff]
        %v2719 = vld [vmem:[%s350 + $0x98] sm:$0xff]
        %v2720 = vld [vmem:[%s350 + $0xa0] sm:$0xff]
        %v2721 = vld [vmem:[%s350 + $0xa8] sm:$0xff]
        %v2722 = vld [vmem:[%s350 + $0xb0] sm:$0xff]
        %v2723 = vld [vmem:[%s350 + $0xb8] sm:$0xff]
        %2725 = vset.pattern.permute.xlu0 0
        %2726 = vperm.xlu0 %2725, %v2716
        %v2727 = vpop.permute.xlu0 %2726
        %2730 = vset.pattern.permute.xlu0 0
        %2731 = vperm.xlu0 %2730, %v2717
        %v2732 = vpop.permute.xlu0 %2731
        %2735 = vset.pattern.permute.xlu0 0
        %2736 = vperm.xlu0 %2735, %v2718
        %v2737 = vpop.permute.xlu0 %2736
        %2740 = vset.pattern.permute.xlu0 0
        %2741 = vperm.xlu0 %2740, %v2719
        %v2742 = vpop.permute.xlu0 %2741
        %2745 = vset.pattern.permute.xlu0 0
        %2746 = vperm.xlu0 %2745, %v2720
        %v2747 = vpop.permute.xlu0 %2746
        %2750 = vset.pattern.permute.xlu0 0
        %2751 = vperm.xlu0 %2750, %v2721
        %v2752 = vpop.permute.xlu0 %2751
        %2755 = vset.pattern.permute.xlu0 0
        %2756 = vperm.xlu0 %2755, %v2722
        %v2757 = vpop.permute.xlu0 %2756
        %2760 = vset.pattern.permute.xlu0 0
        %2761 = vperm.xlu0 %2760, %v2723
        %v2762 = vpop.permute.xlu0 %2761
        %v2765 = vsel %vm921, %v2661, 0
        %v2768 = vsel %vm921, %v2663, 0
        %v2771 = vsel %vm921, %v2665, 0
        %v2774 = vsel %vm921, %v2667, 0
        %v2777 = vsel %vm921, %v2669, 0
        %v2780 = vsel %vm921, %v2671, 0
        %v2783 = vsel %vm921, %v2673, 0
        %v2786 = vsel %vm921, %v2675, 0
        %2788 = vmatprep.subr.mxu0 %v2677
        %2789 = vmatpush1.msra.mxu0 %v2676
        %2790 = vmatprep.subr.mxu0 %v2679
        %2791 = vmatpush1.msra.mxu0 %v2678
        %2792 = vmatprep.subr.mxu0 %v2681
        %2793 = vmatpush1.msra.mxu0 %v2680
        %2794 = vmatprep.subr.mxu0 %v2683
        %2795 = vmatpush1.msra.mxu0 %v2682
        %2796 = vmatprep.subr.mxu0 %v2685
        %2797 = vmatpush1.msra.mxu0 %v2684
        %2798 = vmatprep.subr.mxu0 %v2687
        %2799 = vmatpush1.msra.mxu0 %v2686
        %2800 = vmatprep.subr.mxu0 %v2689
        %2801 = vmatpush1.msra.mxu0 %v2688
        %2802 = vmatprep.subr.mxu0 %v2691
        %2803 = vmatpush1.msra.mxu0 %v2690
        %2804 = vmatprep.subr.mxu0 %v2693
        %2805 = vmatpush1.msra.mxu0 %v2692
        %2806 = vmatprep.subr.mxu0 %v2695
        %2807 = vmatpush1.msra.mxu0 %v2694
        %2808 = vmatprep.subr.mxu0 %v2697
        %2809 = vmatpush1.msra.mxu0 %v2696
        %2810 = vmatprep.subr.mxu0 %v2699
        %2811 = vmatpush1.msra.mxu0 %v2698
        %2812 = vmatprep.subr.mxu0 %v2701
        %2813 = vmatpush1.msra.mxu0 %v2700
        %2814 = vmatprep.subr.mxu0 %v2703
        %2815 = vmatpush1.msra.mxu0 %v2702
        %2816 = vmatprep.subr.mxu0 %v2705
        %2817 = vmatpush1.msra.mxu0 %v2704
        %2818 = vmatprep.subr.mxu0 %v2707
        %2819 = vmatpush1.msra.mxu0 %v2706
        %2820 = vmatprep.subr.mxu0 %v2709
        %2821 = vmatpush1.msra.mxu0 %v2708
        %2822 = vmatprep.subr.mxu0 %v2711
        %2823 = vmatpush1.msra.mxu0 %v2710
        %2824 = vmatprep.subr.mxu0 %v2713
        %2825 = vmatpush1.msra.mxu0 %v2712
        %2826 = vmatprep.subr.mxu0 %v2715
        %2827 = vmatpush1.msra.mxu0 %v2714
        %2828 = vmatprep.subr.mxu0 0.0
        %2829 = vmatpush1.msra.mxu0 0.0
        %2830 = vmatprep.subr.mxu0 0.0
        %2831 = vmatpush1.msra.mxu0 0.0
        %2832 = vmatprep.subr.mxu0 0.0
        %2833 = vmatpush1.msra.mxu0 0.0
        %2834 = vmatprep.subr.mxu0 0.0
        %2835 = vmatpush1.msra.mxu0 0.0
        %2836 = vmatprep.subr.mxu0 0.0
        %2837 = vmatpush1.msra.mxu0 0.0
        %2838 = vmatprep.subr.mxu0 0.0
        %2839 = vmatpush1.msra.mxu0 0.0
        %2840 = vmatprep.subr.mxu0 0.0
        %2841 = vmatpush1.msra.mxu0 0.0
        %2842 = vmatprep.subr.mxu0 0.0
        %2843 = vmatpush1.msra.mxu0 0.0
        %2844 = vmatprep.subr.mxu0 0.0
        %2845 = vmatpush1.msra.mxu0 0.0
        %2846 = vmatprep.subr.mxu0 0.0
        %2847 = vmatpush1.msra.mxu0 0.0
        %2848 = vmatprep.subr.mxu0 0.0
        %2849 = vmatpush1.msra.mxu0 0.0
        %2850 = vmatprep.subr.mxu0 0.0
        %2851 = vmatpush1.msra.mxu0 0.0
        %2852 = vmatprep.mubr.f32.mxu0 %v2765
        %2853 = vmatmul.mubr.f32.gmra.mrb[0].mxu0 %v2660
        %v2854 = vpop.f32.mrb[0].mxu0
        %v2855 = vadd.f32 %v2727, %v2854
        %v2856 = vpop.f32.mrb[0].mxu0
        %v2857 = vadd.f32 %v2727, %v2856
        %2858 = vmatprep.mubr.f32.mxu0 %v2768
        %2859 = vmatmul.mubr.f32.gmra.mrb[0].mxu0 %v2662
        %v2860 = vpop.f32.mrb[0].mxu0
        %v2861 = vadd.f32 %v2732, %v2860
        %v2862 = vpop.f32.mrb[0].mxu0
        %v2863 = vadd.f32 %v2732, %v2862
        %2864 = vmatprep.mubr.f32.mxu0 %v2771
        %2865 = vmatmul.mubr.f32.gmra.mrb[0].mxu0 %v2664
        %v2866 = vpop.f32.mrb[0].mxu0
        %v2867 = vadd.f32 %v2737, %v2866
        %v2868 = vpop.f32.mrb[0].mxu0
        %v2869 = vadd.f32 %v2737, %v2868
        %2870 = vmatprep.mubr.f32.mxu0 %v2774
        %2871 = vmatmul.mubr.f32.gmra.mrb[0].mxu0 %v2666
        %v2872 = vpop.f32.mrb[0].mxu0
        %v2873 = vadd.f32 %v2742, %v2872
        %v2874 = vpop.f32.mrb[0].mxu0
        %v2875 = vadd.f32 %v2742, %v2874
        %2876 = vmatprep.mubr.f32.mxu0 %v2777
        %2877 = vmatmul.mubr.f32.gmra.mrb[0].mxu0 %v2668
        %v2878 = vpop.f32.mrb[0].mxu0
        %v2879 = vadd.f32 %v2747, %v2878
        %v2880 = vpop.f32.mrb[0].mxu0
        %v2881 = vadd.f32 %v2747, %v2880
        %2882 = vmatprep.mubr.f32.mxu0 %v2780
        %2883 = vmatmul.mubr.f32.gmra.mrb[0].mxu0 %v2670
        %v2884 = vpop.f32.mrb[0].mxu0
        %v2885 = vadd.f32 %v2752, %v2884
        %v2886 = vpop.f32.mrb[0].mxu0
        %v2887 = vadd.f32 %v2752, %v2886
        %2888 = vmatprep.mubr.f32.mxu0 %v2783
        %2889 = vmatmul.mubr.f32.gmra.mrb[0].mxu0 %v2672
        %v2890 = vpop.f32.mrb[0].mxu0
        %v2891 = vadd.f32 %v2757, %v2890
        %v2892 = vpop.f32.mrb[0].mxu0
        %v2893 = vadd.f32 %v2757, %v2892
        %2894 = vmatprep.mubr.f32.mxu0 %v2786
        %2895 = vmatmul.mubr.f32.gmra.mrb[0].mxu0 %v2674
        %v2896 = vpop.f32.mrb[0].mxu0
        %v2897 = vadd.f32 %v2762, %v2896
        %v2898 = vpop.f32.mrb[0].mxu0
        %v2899 = vadd.f32 %v2762, %v2898
        %2900 = vdwg.mxu0
        %v2901 = vtanh.pop %v2855
        %v2902 = vtanh.pop %v2857
        %v2903 = vtanh.pop %v2861
        %v2904 = vtanh.pop %v2863
        %v2905 = vtanh.pop %v2867
        %v2906 = vtanh.pop %v2869
        %v2907 = vtanh.pop %v2873
        %v2908 = vtanh.pop %v2875
        %v2909 = vxor.u32 %v2879, 2147483648
        %v2910 = vxor.u32 %v2881, 2147483648
        %v2911 = vxor.u32 %v2885, 2147483648
        %v2912 = vxor.u32 %v2887, 2147483648
        %v2913 = vxor.u32 %v2891, 2147483648
        %v2914 = vxor.u32 %v2893, 2147483648
        %v2915 = vxor.u32 %v2897, 2147483648
        %v2916 = vxor.u32 %v2899, 2147483648
        %v2917 = vmul.f32 %v2909, 1.442695
        %v2918 = vpow.pop %v2917
        %v2919 = vmul.f32 %v2910, 1.442695
        %v2920 = vpow.pop %v2919
        %v2921 = vmul.f32 %v2911, 1.442695
        %v2922 = vpow.pop %v2921
        %v2923 = vmul.f32 %v2912, 1.442695
        %v2924 = vpow.pop %v2923
        %v2925 = vmul.f32 %v2913, 1.442695
        %v2926 = vpow.pop %v2925
        %v2927 = vmul.f32 %v2914, 1.442695
        %v2928 = vpow.pop %v2927
        %v2929 = vmul.f32 %v2915, 1.442695
        %v2930 = vpow.pop %v2929
        %v2931 = vmul.f32 %v2916, 1.442695
        %v2932 = vpow.pop %v2931
        %v2933 = vadd.f32 %v2918, 1.0
        %v2934 = vadd.f32 %v2920, 1.0
        %v2935 = vadd.f32 %v2922, 1.0
        %v2936 = vadd.f32 %v2924, 1.0
        %v2937 = vadd.f32 %v2926, 1.0
        %v2938 = vadd.f32 %v2928, 1.0
        %v2939 = vadd.f32 %v2930, 1.0
        %v2940 = vadd.f32 %v2932, 1.0
        %v2941 = vrcp.pop %v2933
        %v2942 = vmul.f32 1.0, %v2941
        %v2943 = vrcp.pop %v2934
        %v2944 = vmul.f32 1.0, %v2943
        %v2945 = vrcp.pop %v2935
        %v2946 = vmul.f32 1.0, %v2945
        %v2947 = vrcp.pop %v2936
        %v2948 = vmul.f32 1.0, %v2947
        %v2949 = vrcp.pop %v2937
        %v2950 = vmul.f32 1.0, %v2949
        %v2951 = vrcp.pop %v2938
        %v2952 = vmul.f32 1.0, %v2951
        %v2953 = vrcp.pop %v2939
        %v2954 = vmul.f32 1.0, %v2953
        %v2955 = vrcp.pop %v2940
        %v2956 = vmul.f32 1.0, %v2955
        %v2957 = vmul.f32 %v2901, %v2942
        %v2958 = vmul.f32 %v2902, %v2944
        %v2959 = vmul.f32 %v2903, %v2946
        %v2960 = vmul.f32 %v2904, %v2948
        %v2961 = vmul.f32 %v2905, %v2950
        %v2962 = vmul.f32 %v2906, %v2952
        %v2963 = vmul.f32 %v2907, %v2954
        %v2964 = vmul.f32 %v2908, %v2956
        %s2965 = scalar_lea.vmem %s5, 128
        %v2966 = vld [vmem:[%s2965] sm:$0xff]
        %v2967 = vld [vmem:[%s2965 + $0x8] sm:$0xff]
        %v2968 = vld [vmem:[%s2965 + $0x10] sm:$0xff]
        %v2969 = vld [vmem:[%s2965 + $0x18] sm:$0xff]
        %v2970 = vld [vmem:[%s2965 + $0x20] sm:$0xff]
        %v2971 = vld [vmem:[%s2965 + $0x28] sm:$0xff]
        %v2972 = vld [vmem:[%s2965 + $0x30] sm:$0xff]
        %v2973 = vld [vmem:[%s2965 + $0x38] sm:$0xff]
        %s2974 = scalar_lea.vmem %s6, 128
        %v2975 = vld [vmem:[%s2974] sm:$0xff]
        %v2976 = vld [vmem:[%s2974 + $0x8] sm:$0xff]
        %v2977 = vld [vmem:[%s2974 + $0x10] sm:$0xff]
        %v2978 = vld [vmem:[%s2974 + $0x18] sm:$0xff]
        %v2979 = vld [vmem:[%s2974 + $0x20] sm:$0xff]
        %v2980 = vld [vmem:[%s2974 + $0x28] sm:$0xff]
        %v2981 = vld [vmem:[%s2974 + $0x30] sm:$0xff]
        %v2982 = vld [vmem:[%s2974 + $0x38] sm:$0xff]
        %2984 = vset.pattern.permute.xlu0 0
        %2985 = vperm.xlu0 %2984, %v2975
        %v2986 = vpop.permute.xlu0 %2985
        %2989 = vset.pattern.permute.xlu0 0
        %2990 = vperm.xlu0 %2989, %v2976
        %v2991 = vpop.permute.xlu0 %2990
        %2994 = vset.pattern.permute.xlu0 0
        %2995 = vperm.xlu0 %2994, %v2977
        %v2996 = vpop.permute.xlu0 %2995
        %2999 = vset.pattern.permute.xlu0 0
        %3000 = vperm.xlu0 %2999, %v2978
        %v3001 = vpop.permute.xlu0 %3000
        %3004 = vset.pattern.permute.xlu0 0
        %3005 = vperm.xlu0 %3004, %v2979
        %v3006 = vpop.permute.xlu0 %3005
        %3009 = vset.pattern.permute.xlu0 0
        %3010 = vperm.xlu0 %3009, %v2980
        %v3011 = vpop.permute.xlu0 %3010
        %3014 = vset.pattern.permute.xlu0 0
        %3015 = vperm.xlu0 %3014, %v2981
        %v3016 = vpop.permute.xlu0 %3015
        %3019 = vset.pattern.permute.xlu0 0
        %3020 = vperm.xlu0 %3019, %v2982
        %v3021 = vpop.permute.xlu0 %3020
        %v3024 = vsel %vm921, %v2966, 0
        %v3027 = vsel %vm921, %v2967, 0
        %v3030 = vsel %vm921, %v2968, 0
        %v3033 = vsel %vm921, %v2969, 0
        %v3036 = vsel %vm921, %v2970, 0
        %v3039 = vsel %vm921, %v2971, 0
        %v3042 = vsel %vm921, %v2972, 0
        %v3045 = vsel %vm921, %v2973, 0
        %3047 = vmatprep.subr.mxu0 %v2958
        %3048 = vmatpush1.msra.mxu0 %v2957
        %3049 = vmatprep.subr.mxu0 %v2960
        %3050 = vmatpush1.msra.mxu0 %v2959
        %3051 = vmatprep.subr.mxu0 %v2962
        %3052 = vmatpush1.msra.mxu0 %v2961
        %3053 = vmatprep.subr.mxu0 %v2964
        %3054 = vmatpush1.msra.mxu0 %v2963
        %3055 = vmatprep.subr.mxu0 0.0
        %3056 = vmatpush1.msra.mxu0 0.0
        %3057 = vmatprep.subr.mxu0 0.0
        %3058 = vmatpush1.msra.mxu0 0.0
        %3059 = vmatprep.subr.mxu0 0.0
        %3060 = vmatpush1.msra.mxu0 0.0
        %3061 = vmatprep.subr.mxu0 0.0
        %3062 = vmatpush1.msra.mxu0 0.0
        %3063 = vmatprep.subr.mxu0 0.0
        %3064 = vmatpush1.msra.mxu0 0.0
        %3065 = vmatprep.subr.mxu0 0.0
        %3066 = vmatpush1.msra.mxu0 0.0
        %3067 = vmatprep.subr.mxu0 0.0
        %3068 = vmatpush1.msra.mxu0 0.0
        %3069 = vmatprep.subr.mxu0 0.0
        %3070 = vmatpush1.msra.mxu0 0.0
        %3071 = vmatprep.subr.mxu0 0.0
        %3072 = vmatpush1.msra.mxu0 0.0
        %3073 = vmatprep.subr.mxu0 0.0
        %3074 = vmatpush1.msra.mxu0 0.0
        %3075 = vmatprep.subr.mxu0 0.0
        %3076 = vmatpush1.msra.mxu0 0.0
        %3077 = vmatprep.subr.mxu0 0.0
        %3078 = vmatpush1.msra.mxu0 0.0
        %3079 = vmatprep.subr.mxu0 0.0
        %3080 = vmatpush1.msra.mxu0 0.0
        %3081 = vmatprep.subr.mxu0 0.0
        %3082 = vmatpush1.msra.mxu0 0.0
        %3083 = vmatprep.subr.mxu0 0.0
        %3084 = vmatpush1.msra.mxu0 0.0
        %3085 = vmatprep.subr.mxu0 0.0
        %3086 = vmatpush1.msra.mxu0 0.0
        %3087 = vmatprep.subr.mxu0 0.0
        %3088 = vmatpush1.msra.mxu0 0.0
        %3089 = vmatprep.subr.mxu0 0.0
        %3090 = vmatpush1.msra.mxu0 0.0
        %3091 = vmatprep.subr.mxu0 0.0
        %3092 = vmatpush1.msra.mxu0 0.0
        %3093 = vmatprep.subr.mxu0 0.0
        %3094 = vmatpush1.msra.mxu0 0.0
        %3095 = vmatprep.subr.mxu0 0.0
        %3096 = vmatpush1.msra.mxu0 0.0
        %3097 = vmatprep.subr.mxu0 0.0
        %3098 = vmatpush1.msra.mxu0 0.0
        %3099 = vmatprep.subr.mxu0 0.0
        %3100 = vmatpush1.msra.mxu0 0.0
        %3101 = vmatprep.subr.mxu0 0.0
        %3102 = vmatpush1.msra.mxu0 0.0
        %3103 = vmatprep.subr.mxu0 0.0
        %3104 = vmatpush1.msra.mxu0 0.0
        %3105 = vmatprep.subr.mxu0 0.0
        %3106 = vmatpush1.msra.mxu0 0.0
        %3107 = vmatprep.subr.mxu0 0.0
        %3108 = vmatpush1.msra.mxu0 0.0
        %3109 = vmatprep.subr.mxu0 0.0
        %3110 = vmatpush1.msra.mxu0 0.0
        %3111 = vmatprep.mubr.f32.mxu0 0.0
        %3112 = vmatmul.mubr.f32.gmra.mrb[0].mxu0 %v3024
        %v3113 = vpop.f32.mrb[0].mxu0
        %v3114 = vadd.f32 %v2986, %v3113
        %v3115 = vpop.f32.mrb[0].mxu0
        %v3116 = vadd.f32 %v2986, %v3115
        %3117 = vmatprep.mubr.f32.mxu0 0.0
        %3118 = vmatmul.mubr.f32.gmra.mrb[0].mxu0 %v3027
        %v3119 = vpop.f32.mrb[0].mxu0
        %v3120 = vadd.f32 %v2991, %v3119
        %v3121 = vpop.f32.mrb[0].mxu0
        %v3122 = vadd.f32 %v2991, %v3121
        %3123 = vmatprep.mubr.f32.mxu0 0.0
        %3124 = vmatmul.mubr.f32.gmra.mrb[0].mxu0 %v3030
        %v3125 = vpop.f32.mrb[0].mxu0
        %v3126 = vadd.f32 %v2996, %v3125
        %v3127 = vpop.f32.mrb[0].mxu0
        %v3128 = vadd.f32 %v2996, %v3127
        %3129 = vmatprep.mubr.f32.mxu0 0.0
        %3130 = vmatmul.mubr.f32.gmra.mrb[0].mxu0 %v3033
        %v3131 = vpop.f32.mrb[0].mxu0
        %v3132 = vadd.f32 %v3001, %v3131
        %v3133 = vpop.f32.mrb[0].mxu0
        %v3134 = vadd.f32 %v3001, %v3133
        %3135 = vmatprep.mubr.f32.mxu0 0.0
        %3136 = vmatmul.mubr.f32.gmra.mrb[0].mxu0 %v3036
        %v3137 = vpop.f32.mrb[0].mxu0
        %v3138 = vadd.f32 %v3006, %v3137
        %v3139 = vpop.f32.mrb[0].mxu0
        %v3140 = vadd.f32 %v3006, %v3139
        %3141 = vmatprep.mubr.f32.mxu0 0.0
        %3142 = vmatmul.mubr.f32.gmra.mrb[0].mxu0 %v3039
        %v3143 = vpop.f32.mrb[0].mxu0
        %v3144 = vadd.f32 %v3011, %v3143
        %v3145 = vpop.f32.mrb[0].mxu0
        %v3146 = vadd.f32 %v3011, %v3145
        %3147 = vmatprep.mubr.f32.mxu0 0.0
        %3148 = vmatmul.mubr.f32.gmra.mrb[0].mxu0 %v3042
        %v3149 = vpop.f32.mrb[0].mxu0
        %v3150 = vadd.f32 %v3016, %v3149
        %v3151 = vpop.f32.mrb[0].mxu0
        %v3152 = vadd.f32 %v3016, %v3151
        %3153 = vmatprep.mubr.f32.mxu0 0.0
        %3154 = vmatmul.mubr.f32.gmra.mrb[0].mxu0 %v3045
        %v3155 = vpop.f32.mrb[0].mxu0
        %v3156 = vadd.f32 %v3021, %v3155
        %v3157 = vpop.f32.mrb[0].mxu0
        %v3158 = vadd.f32 %v3021, %v3157
        %3159 = vdwg.mxu0
        %v3160 = vadd.f32 %v2325, %v3114
        %v3161 = vadd.f32 %v2327, %v3116
        %v3162 = vadd.f32 %v2331, %v3120
        %v3163 = vadd.f32 %v2333, %v3122
        %v3164 = vadd.f32 %v2337, %v3126
        %v3165 = vadd.f32 %v2339, %v3128
        %v3166 = vadd.f32 %v2343, %v3132
        %v3167 = vadd.f32 %v2345, %v3134
        %3168 = vst [vmem:[#allocation2 + $0x8] sm:$0xff] %v3160
        %3169 = vst [vmem:[#allocation2 + $0x10] sm:$0xff] %v3161
        %3170 = vst [vmem:[#allocation2 + $0x28] sm:$0xff] %v3162
        %3171 = vst [vmem:[#allocation2 + $0x30] sm:$0xff] %v3163
        %3172 = vst [vmem:[#allocation2 + $0x48] sm:$0xff] %v3164
        %3173 = vst [vmem:[#allocation2 + $0x50] sm:$0xff] %v3165
        %3174 = vst [vmem:[#allocation2 + $0x68] sm:$0xff] %v3166
        %3175 = vst [vmem:[#allocation2 + $0x70] sm:$0xff] %v3167
        %v3176 = vld [vmem:[#allocation2] sm:$0xff]
        %v3177 = vld [vmem:[#allocation2 + $0x8] sm:$0xff]
        %v3178 = vld [vmem:[#allocation2 + $0x10] sm:$0xff]
        %v3179 = vld [vmem:[#allocation2 + $0x20] sm:$0xff]
        %v3180 = vld [vmem:[#allocation2 + $0x28] sm:$0xff]
        %v3181 = vld [vmem:[#allocation2 + $0x30] sm:$0xff]
        %v3182 = vld [vmem:[#allocation2 + $0x40] sm:$0xff]
        %v3183 = vld [vmem:[#allocation2 + $0x48] sm:$0xff]
        %v3184 = vld [vmem:[#allocation2 + $0x50] sm:$0xff]
        %v3185 = vld [vmem:[#allocation2 + $0x60] sm:$0xff]
        %v3186 = vld [vmem:[#allocation2 + $0x68] sm:$0xff]
        %v3187 = vld [vmem:[#allocation2 + $0x70] sm:$0xff]
        %3200 = vrot.lane.b32.xlu0 %v3176, 2
        %v3201 = vpop.permute.xlu0 %3200
        %3202 = vrot.lane.b32.xlu0 %v3177, 2
        %v3203 = vpop.permute.xlu0 %3202
        %3204 = vrot.lane.b32.xlu0 %v3178, 2
        %v3205 = vpop.permute.xlu0 %3204
        %3206 = vrot.lane.b32.xlu0 %v3179, 2
        %v3207 = vpop.permute.xlu0 %3206
        %3208 = vrot.lane.b32.xlu0 %v3180, 2
        %v3209 = vpop.permute.xlu0 %3208
        %3210 = vrot.lane.b32.xlu0 %v3181, 2
        %v3211 = vpop.permute.xlu0 %3210
        %3212 = vrot.lane.b32.xlu0 %v3182, 2
        %v3213 = vpop.permute.xlu0 %3212
        %3214 = vrot.lane.b32.xlu0 %v3183, 2
        %v3215 = vpop.permute.xlu0 %3214
        %3216 = vrot.lane.b32.xlu0 %v3184, 2
        %v3217 = vpop.permute.xlu0 %3216
        %3218 = vrot.lane.b32.xlu0 %v3185, 2
        %v3219 = vpop.permute.xlu0 %3218
        %3220 = vrot.lane.b32.xlu0 %v3186, 2
        %v3221 = vpop.permute.xlu0 %3220
        %3222 = vrot.lane.b32.xlu0 %v3187, 2
        %v3223 = vpop.permute.xlu0 %3222
        %v3224 = vsel %vm354, %v3201, %v3203
        %v3225 = vsel %vm354, %v3203, %v3205
        %v3226 = vsel %vm354, %v3207, %v3209
        %v3227 = vsel %vm354, %v3209, %v3211
        %v3228 = vsel %vm354, %v3213, %v3215
        %v3229 = vsel %vm354, %v3215, %v3217
        %v3230 = vsel %vm354, %v3219, %v3221
        %v3231 = vsel %vm354, %v3221, %v3223
        %3240 = vst [vmem:[#allocation3] sm:$0xff] %v3224
        %3241 = vst [vmem:[#allocation3 + $0x8] sm:$0xff] %v3225
        %3242 = vst [vmem:[#allocation3 + $0x10] sm:$0xff] %v3226
        %3243 = vst [vmem:[#allocation3 + $0x18] sm:$0xff] %v3227
        %3244 = vst [vmem:[#allocation3 + $0x20] sm:$0xff] %v3228
        %3245 = vst [vmem:[#allocation3 + $0x28] sm:$0xff] %v3229
        %3246 = vst [vmem:[#allocation3 + $0x30] sm:$0xff] %v3230
        %3247 = vst [vmem:[#allocation3 + $0x38] sm:$0xff] %v3231
        %v3248 = vld [vmem:[#allocation2] sm:$0xff]
        %v3249 = vld [vmem:[#allocation2 + $0x8] sm:$0xff]
        %v3250 = vld [vmem:[#allocation2 + $0x10] sm:$0xff]
        %v3251 = vld [vmem:[#allocation2 + $0x20] sm:$0xff]
        %v3252 = vld [vmem:[#allocation2 + $0x28] sm:$0xff]
        %v3253 = vld [vmem:[#allocation2 + $0x30] sm:$0xff]
        %v3254 = vld [vmem:[#allocation2 + $0x40] sm:$0xff]
        %v3255 = vld [vmem:[#allocation2 + $0x48] sm:$0xff]
        %v3256 = vld [vmem:[#allocation2 + $0x50] sm:$0xff]
        %v3257 = vld [vmem:[#allocation2 + $0x60] sm:$0xff]
        %v3258 = vld [vmem:[#allocation2 + $0x68] sm:$0xff]
        %v3259 = vld [vmem:[#allocation2 + $0x70] sm:$0xff]
        %3272 = vrot.lane.b32.xlu0 %v3248, 1
        %v3273 = vpop.permute.xlu0 %3272
        %3274 = vrot.lane.b32.xlu0 %v3249, 1
        %v3275 = vpop.permute.xlu0 %3274
        %3276 = vrot.lane.b32.xlu0 %v3250, 1
        %v3277 = vpop.permute.xlu0 %3276
        %3278 = vrot.lane.b32.xlu0 %v3251, 1
        %v3279 = vpop.permute.xlu0 %3278
        %3280 = vrot.lane.b32.xlu0 %v3252, 1
        %v3281 = vpop.permute.xlu0 %3280
        %3282 = vrot.lane.b32.xlu0 %v3253, 1
        %v3283 = vpop.permute.xlu0 %3282
        %3284 = vrot.lane.b32.xlu0 %v3254, 1
        %v3285 = vpop.permute.xlu0 %3284
        %3286 = vrot.lane.b32.xlu0 %v3255, 1
        %v3287 = vpop.permute.xlu0 %3286
        %3288 = vrot.lane.b32.xlu0 %v3256, 1
        %v3289 = vpop.permute.xlu0 %3288
        %3290 = vrot.lane.b32.xlu0 %v3257, 1
        %v3291 = vpop.permute.xlu0 %3290
        %3292 = vrot.lane.b32.xlu0 %v3258, 1
        %v3293 = vpop.permute.xlu0 %3292
        %3294 = vrot.lane.b32.xlu0 %v3259, 1
        %v3295 = vpop.permute.xlu0 %3294
        %v3296 = vsel %vm630, %v3273, %v3275
        %v3297 = vsel %vm630, %v3275, %v3277
        %v3298 = vsel %vm630, %v3279, %v3281
        %v3299 = vsel %vm630, %v3281, %v3283
        %v3300 = vsel %vm630, %v3285, %v3287
        %v3301 = vsel %vm630, %v3287, %v3289
        %v3302 = vsel %vm630, %v3291, %v3293
        %v3303 = vsel %vm630, %v3293, %v3295
        %3312 = vst [vmem:[#allocation3 + $0x40] sm:$0xff] %v3296
        %3313 = vst [vmem:[#allocation3 + $0x48] sm:$0xff] %v3297
        %3314 = vst [vmem:[#allocation3 + $0x50] sm:$0xff] %v3298
        %3315 = vst [vmem:[#allocation3 + $0x58] sm:$0xff] %v3299
        %3316 = vst [vmem:[#allocation3 + $0x60] sm:$0xff] %v3300
        %3317 = vst [vmem:[#allocation3 + $0x68] sm:$0xff] %v3301
        %3318 = vst [vmem:[#allocation3 + $0x70] sm:$0xff] %v3302
        %3319 = vst [vmem:[#allocation3 + $0x78] sm:$0xff] %v3303
        %v3320 = vld [vmem:[#allocation2 + $0x8] sm:$0xff]
        %v3321 = vld [vmem:[#allocation2 + $0x10] sm:$0xff]
        %v3322 = vld [vmem:[#allocation2 + $0x28] sm:$0xff]
        %v3323 = vld [vmem:[#allocation2 + $0x30] sm:$0xff]
        %v3324 = vld [vmem:[#allocation2 + $0x48] sm:$0xff]
        %v3325 = vld [vmem:[#allocation2 + $0x50] sm:$0xff]
        %v3326 = vld [vmem:[#allocation2 + $0x68] sm:$0xff]
        %v3327 = vld [vmem:[#allocation2 + $0x70] sm:$0xff]
        %3328 = vst [vmem:[#allocation3 + $0x80] sm:$0xff] %v3320
        %3329 = vst [vmem:[#allocation3 + $0x88] sm:$0xff] %v3321
        %3330 = vst [vmem:[#allocation3 + $0x90] sm:$0xff] %v3322
        %3331 = vst [vmem:[#allocation3 + $0x98] sm:$0xff] %v3323
        %3332 = vst [vmem:[#allocation3 + $0xa0] sm:$0xff] %v3324
        %3333 = vst [vmem:[#allocation3 + $0xa8] sm:$0xff] %v3325
        %3334 = vst [vmem:[#allocation3 + $0xb0] sm:$0xff] %v3326
        %3335 = vst [vmem:[#allocation3 + $0xb8] sm:$0xff] %v3327
        %v3336 = vld [vmem:[#allocation2 + $0x8] sm:$0xff]
        %v3337 = vld [vmem:[#allocation2 + $0x10] sm:$0xff]
        %v3338 = vld [vmem:[#allocation2 + $0x18] sm:$0xff]
        %v3339 = vld [vmem:[#allocation2 + $0x28] sm:$0xff]
        %v3340 = vld [vmem:[#allocation2 + $0x30] sm:$0xff]
        %v3341 = vld [vmem:[#allocation2 + $0x38] sm:$0xff]
        %v3342 = vld [vmem:[#allocation2 + $0x48] sm:$0xff]
        %v3343 = vld [vmem:[#allocation2 + $0x50] sm:$0xff]
        %v3344 = vld [vmem:[#allocation2 + $0x58] sm:$0xff]
        %v3345 = vld [vmem:[#allocation2 + $0x68] sm:$0xff]
        %v3346 = vld [vmem:[#allocation2 + $0x70] sm:$0xff]
        %v3347 = vld [vmem:[#allocation2 + $0x78] sm:$0xff]
        %3360 = vrot.lane.b32.xlu0 %v3336, 127
        %v3361 = vpop.permute.xlu0 %3360
        %3362 = vrot.lane.b32.xlu0 %v3337, 127
        %v3363 = vpop.permute.xlu0 %3362
        %3364 = vrot.lane.b32.xlu0 %v3338, 127
        %v3365 = vpop.permute.xlu0 %3364
        %3366 = vrot.lane.b32.xlu0 %v3339, 127
        %v3367 = vpop.permute.xlu0 %3366
        %3368 = vrot.lane.b32.xlu0 %v3340, 127
        %v3369 = vpop.permute.xlu0 %3368
        %3370 = vrot.lane.b32.xlu0 %v3341, 127
        %v3371 = vpop.permute.xlu0 %3370
        %3372 = vrot.lane.b32.xlu0 %v3342, 127
        %v3373 = vpop.permute.xlu0 %3372
        %3374 = vrot.lane.b32.xlu0 %v3343, 127
        %v3375 = vpop.permute.xlu0 %3374
        %3376 = vrot.lane.b32.xlu0 %v3344, 127
        %v3377 = vpop.permute.xlu0 %3376
        %3378 = vrot.lane.b32.xlu0 %v3345, 127
        %v3379 = vpop.permute.xlu0 %3378
        %3380 = vrot.lane.b32.xlu0 %v3346, 127
        %v3381 = vpop.permute.xlu0 %3380
        %3382 = vrot.lane.b32.xlu0 %v3347, 127
        %v3383 = vpop.permute.xlu0 %3382
        %v3384 = vsel %vm719, %v3361, %v3363
        %v3385 = vsel %vm719, %v3363, %v3365
        %v3386 = vsel %vm719, %v3367, %v3369
        %v3387 = vsel %vm719, %v3369, %v3371
        %v3388 = vsel %vm719, %v3373, %v3375
        %v3389 = vsel %vm719, %v3375, %v3377
        %v3390 = vsel %vm719, %v3379, %v3381
        %v3391 = vsel %vm719, %v3381, %v3383
        %3400 = vst [vmem:[#allocation3 + $0xc0] sm:$0xff] %v3384
        %3401 = vst [vmem:[#allocation3 + $0xc8] sm:$0xff] %v3385
        %3402 = vst [vmem:[#allocation3 + $0xd0] sm:$0xff] %v3386
        %3403 = vst [vmem:[#allocation3 + $0xd8] sm:$0xff] %v3387
        %3404 = vst [vmem:[#allocation3 + $0xe0] sm:$0xff] %v3388
        %3405 = vst [vmem:[#allocation3 + $0xe8] sm:$0xff] %v3389
        %3406 = vst [vmem:[#allocation3 + $0xf0] sm:$0xff] %v3390
        %3407 = vst [vmem:[#allocation3 + $0xf8] sm:$0xff] %v3391
        %v3408 = vld [vmem:[#allocation2 + $0x8] sm:$0xff]
        %v3409 = vld [vmem:[#allocation2 + $0x10] sm:$0xff]
        %v3410 = vld [vmem:[#allocation2 + $0x18] sm:$0xff]
        %v3411 = vld [vmem:[#allocation2 + $0x28] sm:$0xff]
        %v3412 = vld [vmem:[#allocation2 + $0x30] sm:$0xff]
        %v3413 = vld [vmem:[#allocation2 + $0x38] sm:$0xff]
        %v3414 = vld [vmem:[#allocation2 + $0x48] sm:$0xff]
        %v3415 = vld [vmem:[#allocation2 + $0x50] sm:$0xff]
        %v3416 = vld [vmem:[#allocation2 + $0x58] sm:$0xff]
        %v3417 = vld [vmem:[#allocation2 + $0x68] sm:$0xff]
        %v3418 = vld [vmem:[#allocation2 + $0x70] sm:$0xff]
        %v3419 = vld [vmem:[#allocation2 + $0x78] sm:$0xff]
        %3432 = vrot.lane.b32.xlu0 %v3408, 126
        %v3433 = vpop.permute.xlu0 %3432
        %3434 = vrot.lane.b32.xlu0 %v3409, 126
        %v3435 = vpop.permute.xlu0 %3434
        %3436 = vrot.lane.b32.xlu0 %v3410, 126
        %v3437 = vpop.permute.xlu0 %3436
        %3438 = vrot.lane.b32.xlu0 %v3411, 126
        %v3439 = vpop.permute.xlu0 %3438
        %3440 = vrot.lane.b32.xlu0 %v3412, 126
        %v3441 = vpop.permute.xlu0 %3440
        %3442 = vrot.lane.b32.xlu0 %v3413, 126
        %v3443 = vpop.permute.xlu0 %3442
        %3444 = vrot.lane.b32.xlu0 %v3414, 126
        %v3445 = vpop.permute.xlu0 %3444
        %3446 = vrot.lane.b32.xlu0 %v3415, 126
        %v3447 = vpop.permute.xlu0 %3446
        %3448 = vrot.lane.b32.xlu0 %v3416, 126
        %v3449 = vpop.permute.xlu0 %3448
        %3450 = vrot.lane.b32.xlu0 %v3417, 126
        %v3451 = vpop.permute.xlu0 %3450
        %3452 = vrot.lane.b32.xlu0 %v3418, 126
        %v3453 = vpop.permute.xlu0 %3452
        %3454 = vrot.lane.b32.xlu0 %v3419, 126
        %v3455 = vpop.permute.xlu0 %3454
        %v3456 = vsel %vm792, %v3433, %v3435
        %v3457 = vsel %vm792, %v3435, %v3437
        %v3458 = vsel %vm792, %v3439, %v3441
        %v3459 = vsel %vm792, %v3441, %v3443
        %v3460 = vsel %vm792, %v3445, %v3447
        %v3461 = vsel %vm792, %v3447, %v3449
        %v3462 = vsel %vm792, %v3451, %v3453
        %v3463 = vsel %vm792, %v3453, %v3455
        %3472 = vst [vmem:[#allocation3 + $0x100] sm:$0xff] %v3456
        %3473 = vst [vmem:[#allocation3 + $0x108] sm:$0xff] %v3457
        %3474 = vst [vmem:[#allocation3 + $0x110] sm:$0xff] %v3458
        %3475 = vst [vmem:[#allocation3 + $0x118] sm:$0xff] %v3459
        %3476 = vst [vmem:[#allocation3 + $0x120] sm:$0xff] %v3460
        %3477 = vst [vmem:[#allocation3 + $0x128] sm:$0xff] %v3461
        %3478 = vst [vmem:[#allocation3 + $0x130] sm:$0xff] %v3462
        %3479 = vst [vmem:[#allocation3 + $0x138] sm:$0xff] %v3463
        %s3480 = scalar_lea.vmem %s4, 384
        %v3481 = vld [vmem:[%s3480] sm:$0xff]
        %v3482 = vld [vmem:[%s3480 + $0x8] sm:$0xff]
        %v3483 = vld [vmem:[%s3480 + $0x10] sm:$0xff]
        %v3484 = vld [vmem:[%s3480 + $0x18] sm:$0xff]
        %v3485 = vld [vmem:[%s3480 + $0x20] sm:$0xff]
        %v3486 = vld [vmem:[%s3480 + $0x28] sm:$0xff]
        %v3487 = vld [vmem:[%s3480 + $0x30] sm:$0xff]
        %v3488 = vld [vmem:[%s3480 + $0x38] sm:$0xff]
        %v3489 = vld [vmem:[%s3480 + $0x40] sm:$0xff]
        %v3490 = vld [vmem:[%s3480 + $0x48] sm:$0xff]
        %v3491 = vld [vmem:[%s3480 + $0x50] sm:$0xff]
        %v3492 = vld [vmem:[%s3480 + $0x58] sm:$0xff]
        %v3493 = vld [vmem:[%s3480 + $0x60] sm:$0xff]
        %v3494 = vld [vmem:[%s3480 + $0x68] sm:$0xff]
        %v3495 = vld [vmem:[%s3480 + $0x70] sm:$0xff]
        %v3496 = vld [vmem:[%s3480 + $0x78] sm:$0xff]
        %v3497 = vld [vmem:[#allocation3] sm:$0xff]
        %v3498 = vld [vmem:[#allocation3 + $0x8] sm:$0xff]
        %v3499 = vld [vmem:[#allocation3 + $0x10] sm:$0xff]
        %v3500 = vld [vmem:[#allocation3 + $0x18] sm:$0xff]
        %v3501 = vld [vmem:[#allocation3 + $0x20] sm:$0xff]
        %v3502 = vld [vmem:[#allocation3 + $0x28] sm:$0xff]
        %v3503 = vld [vmem:[#allocation3 + $0x30] sm:$0xff]
        %v3504 = vld [vmem:[#allocation3 + $0x38] sm:$0xff]
        %v3505 = vld [vmem:[#allocation3 + $0x40] sm:$0xff]
        %v3506 = vld [vmem:[#allocation3 + $0x48] sm:$0xff]
        %v3507 = vld [vmem:[#allocation3 + $0x50] sm:$0xff]
        %v3508 = vld [vmem:[#allocation3 + $0x58] sm:$0xff]
        %v3509 = vld [vmem:[#allocation3 + $0x60] sm:$0xff]
        %v3510 = vld [vmem:[#allocation3 + $0x68] sm:$0xff]
        %v3511 = vld [vmem:[#allocation3 + $0x70] sm:$0xff]
        %v3512 = vld [vmem:[#allocation3 + $0x78] sm:$0xff]
        %v3513 = vld [vmem:[#allocation3 + $0x80] sm:$0xff]
        %v3514 = vld [vmem:[#allocation3 + $0x88] sm:$0xff]
        %v3515 = vld [vmem:[#allocation3 + $0x90] sm:$0xff]
        %v3516 = vld [vmem:[#allocation3 + $0x98] sm:$0xff]
        %v3517 = vld [vmem:[#allocation3 + $0xa0] sm:$0xff]
        %v3518 = vld [vmem:[#allocation3 + $0xa8] sm:$0xff]
        %v3519 = vld [vmem:[#allocation3 + $0xb0] sm:$0xff]
        %v3520 = vld [vmem:[#allocation3 + $0xb8] sm:$0xff]
        %v3521 = vld [vmem:[#allocation3 + $0xc0] sm:$0xff]
        %v3522 = vld [vmem:[#allocation3 + $0xc8] sm:$0xff]
        %v3523 = vld [vmem:[#allocation3 + $0xd0] sm:$0xff]
        %v3524 = vld [vmem:[#allocation3 + $0xd8] sm:$0xff]
        %v3525 = vld [vmem:[#allocation3 + $0xe0] sm:$0xff]
        %v3526 = vld [vmem:[#allocation3 + $0xe8] sm:$0xff]
        %v3527 = vld [vmem:[#allocation3 + $0xf0] sm:$0xff]
        %v3528 = vld [vmem:[#allocation3 + $0xf8] sm:$0xff]
        %v3529 = vld [vmem:[#allocation3 + $0x100] sm:$0xff]
        %v3530 = vld [vmem:[#allocation3 + $0x108] sm:$0xff]
        %v3531 = vld [vmem:[#allocation3 + $0x110] sm:$0xff]
        %v3532 = vld [vmem:[#allocation3 + $0x118] sm:$0xff]
        %v3533 = vld [vmem:[#allocation3 + $0x120] sm:$0xff]
        %v3534 = vld [vmem:[#allocation3 + $0x128] sm:$0xff]
        %v3535 = vld [vmem:[#allocation3 + $0x130] sm:$0xff]
        %v3536 = vld [vmem:[#allocation3 + $0x138] sm:$0xff]
        %v3537 = vld [vmem:[%s350 + $0xc0] sm:$0xff]
        %v3538 = vld [vmem:[%s350 + $0xc8] sm:$0xff]
        %v3539 = vld [vmem:[%s350 + $0xd0] sm:$0xff]
        %v3540 = vld [vmem:[%s350 + $0xd8] sm:$0xff]
        %v3541 = vld [vmem:[%s350 + $0xe0] sm:$0xff]
        %v3542 = vld [vmem:[%s350 + $0xe8] sm:$0xff]
        %v3543 = vld [vmem:[%s350 + $0xf0] sm:$0xff]
        %v3544 = vld [vmem:[%s350 + $0xf8] sm:$0xff]
        %3546 = vset.pattern.permute.xlu0 0
        %3547 = vperm.xlu0 %3546, %v3537
        %v3548 = vpop.permute.xlu0 %3547
        %3551 = vset.pattern.permute.xlu0 0
        %3552 = vperm.xlu0 %3551, %v3538
        %v3553 = vpop.permute.xlu0 %3552
        %3556 = vset.pattern.permute.xlu0 0
        %3557 = vperm.xlu0 %3556, %v3539
        %v3558 = vpop.permute.xlu0 %3557
        %3561 = vset.pattern.permute.xlu0 0
        %3562 = vperm.xlu0 %3561, %v3540
        %v3563 = vpop.permute.xlu0 %3562
        %3566 = vset.pattern.permute.xlu0 0
        %3567 = vperm.xlu0 %3566, %v3541
        %v3568 = vpop.permute.xlu0 %3567
        %3571 = vset.pattern.permute.xlu0 0
        %3572 = vperm.xlu0 %3571, %v3542
        %v3573 = vpop.permute.xlu0 %3572
        %3576 = vset.pattern.permute.xlu0 0
        %3577 = vperm.xlu0 %3576, %v3543
        %v3578 = vpop.permute.xlu0 %3577
        %3581 = vset.pattern.permute.xlu0 0
        %3582 = vperm.xlu0 %3581, %v3544
        %v3583 = vpop.permute.xlu0 %3582
        %v3586 = vsel %vm921, %v3482, 0
        %v3589 = vsel %vm921, %v3484, 0
        %v3592 = vsel %vm921, %v3486, 0
        %v3595 = vsel %vm921, %v3488, 0
        %v3598 = vsel %vm921, %v3490, 0
        %v3601 = vsel %vm921, %v3492, 0
        %v3604 = vsel %vm921, %v3494, 0
        %v3607 = vsel %vm921, %v3496, 0
        %3609 = vmatprep.subr.mxu0 %v3498
        %3610 = vmatpush1.msra.mxu0 %v3497
        %3611 = vmatprep.subr.mxu0 %v3500
        %3612 = vmatpush1.msra.mxu0 %v3499
        %3613 = vmatprep.subr.mxu0 %v3502
        %3614 = vmatpush1.msra.mxu0 %v3501
        %3615 = vmatprep.subr.mxu0 %v3504
        %3616 = vmatpush1.msra.mxu0 %v3503
        %3617 = vmatprep.subr.mxu0 %v3506
        %3618 = vmatpush1.msra.mxu0 %v3505
        %3619 = vmatprep.subr.mxu0 %v3508
        %3620 = vmatpush1.msra.mxu0 %v3507
        %3621 = vmatprep.subr.mxu0 %v3510
        %3622 = vmatpush1.msra.mxu0 %v3509
        %3623 = vmatprep.subr.mxu0 %v3512
        %3624 = vmatpush1.msra.mxu0 %v3511
        %3625 = vmatprep.subr.mxu0 %v3514
        %3626 = vmatpush1.msra.mxu0 %v3513
        %3627 = vmatprep.subr.mxu0 %v3516
        %3628 = vmatpush1.msra.mxu0 %v3515
        %3629 = vmatprep.subr.mxu0 %v3518
        %3630 = vmatpush1.msra.mxu0 %v3517
        %3631 = vmatprep.subr.mxu0 %v3520
        %3632 = vmatpush1.msra.mxu0 %v3519
        %3633 = vmatprep.subr.mxu0 %v3522
        %3634 = vmatpush1.msra.mxu0 %v3521
        %3635 = vmatprep.subr.mxu0 %v3524
        %3636 = vmatpush1.msra.mxu0 %v3523
        %3637 = vmatprep.subr.mxu0 %v3526
        %3638 = vmatpush1.msra.mxu0 %v3525
        %3639 = vmatprep.subr.mxu0 %v3528
        %3640 = vmatpush1.msra.mxu0 %v3527
        %3641 = vmatprep.subr.mxu0 %v3530
        %3642 = vmatpush1.msra.mxu0 %v3529
        %3643 = vmatprep.subr.mxu0 %v3532
        %3644 = vmatpush1.msra.mxu0 %v3531
        %3645 = vmatprep.subr.mxu0 %v3534
        %3646 = vmatpush1.msra.mxu0 %v3533
        %3647 = vmatprep.subr.mxu0 %v3536
        %3648 = vmatpush1.msra.mxu0 %v3535
        %3649 = vmatprep.subr.mxu0 0.0
        %3650 = vmatpush1.msra.mxu0 0.0
        %3651 = vmatprep.subr.mxu0 0.0
        %3652 = vmatpush1.msra.mxu0 0.0
        %3653 = vmatprep.subr.mxu0 0.0
        %3654 = vmatpush1.msra.mxu0 0.0
        %3655 = vmatprep.subr.mxu0 0.0
        %3656 = vmatpush1.msra.mxu0 0.0
        %3657 = vmatprep.subr.mxu0 0.0
        %3658 = vmatpush1.msra.mxu0 0.0
        %3659 = vmatprep.subr.mxu0 0.0
        %3660 = vmatpush1.msra.mxu0 0.0
        %3661 = vmatprep.subr.mxu0 0.0
        %3662 = vmatpush1.msra.mxu0 0.0
        %3663 = vmatprep.subr.mxu0 0.0
        %3664 = vmatpush1.msra.mxu0 0.0
        %3665 = vmatprep.subr.mxu0 0.0
        %3666 = vmatpush1.msra.mxu0 0.0
        %3667 = vmatprep.subr.mxu0 0.0
        %3668 = vmatpush1.msra.mxu0 0.0
        %3669 = vmatprep.subr.mxu0 0.0
        %3670 = vmatpush1.msra.mxu0 0.0
        %3671 = vmatprep.subr.mxu0 0.0
        %3672 = vmatpush1.msra.mxu0 0.0
        %3673 = vmatprep.mubr.f32.mxu0 %v3586
        %3674 = vmatmul.mubr.f32.gmra.mrb[0].mxu0 %v3481
        %v3675 = vpop.f32.mrb[0].mxu0
        %v3676 = vadd.f32 %v3548, %v3675
        %v3677 = vpop.f32.mrb[0].mxu0
        %v3678 = vadd.f32 %v3548, %v3677
        %3679 = vmatprep.mubr.f32.mxu0 %v3589
        %3680 = vmatmul.mubr.f32.gmra.mrb[0].mxu0 %v3483
        %v3681 = vpop.f32.mrb[0].mxu0
        %v3682 = vadd.f32 %v3553, %v3681
        %v3683 = vpop.f32.mrb[0].mxu0
        %v3684 = vadd.f32 %v3553, %v3683
        %3685 = vmatprep.mubr.f32.mxu0 %v3592
        %3686 = vmatmul.mubr.f32.gmra.mrb[0].mxu0 %v3485
        %v3687 = vpop.f32.mrb[0].mxu0
        %v3688 = vadd.f32 %v3558, %v3687
        %v3689 = vpop.f32.mrb[0].mxu0
        %v3690 = vadd.f32 %v3558, %v3689
        %3691 = vmatprep.mubr.f32.mxu0 %v3595
        %3692 = vmatmul.mubr.f32.gmra.mrb[0].mxu0 %v3487
        %v3693 = vpop.f32.mrb[0].mxu0
        %v3694 = vadd.f32 %v3563, %v3693
        %v3695 = vpop.f32.mrb[0].mxu0
        %v3696 = vadd.f32 %v3563, %v3695
        %3697 = vmatprep.mubr.f32.mxu0 %v3598
        %3698 = vmatmul.mubr.f32.gmra.mrb[0].mxu0 %v3489
        %v3699 = vpop.f32.mrb[0].mxu0
        %v3700 = vadd.f32 %v3568, %v3699
        %v3701 = vpop.f32.mrb[0].mxu0
        %v3702 = vadd.f32 %v3568, %v3701
        %3703 = vmatprep.mubr.f32.mxu0 %v3601
        %3704 = vmatmul.mubr.f32.gmra.mrb[0].mxu0 %v3491
        %v3705 = vpop.f32.mrb[0].mxu0
        %v3706 = vadd.f32 %v3573, %v3705
        %v3707 = vpop.f32.mrb[0].mxu0
        %v3708 = vadd.f32 %v3573, %v3707
        %3709 = vmatprep.mubr.f32.mxu0 %v3604
        %3710 = vmatmul.mubr.f32.gmra.mrb[0].mxu0 %v3493
        %v3711 = vpop.f32.mrb[0].mxu0
        %v3712 = vadd.f32 %v3578, %v3711
        %v3713 = vpop.f32.mrb[0].mxu0
        %v3714 = vadd.f32 %v3578, %v3713
        %3715 = vmatprep.mubr.f32.mxu0 %v3607
        %3716 = vmatmul.mubr.f32.gmra.mrb[0].mxu0 %v3495
        %v3717 = vpop.f32.mrb[0].mxu0
        %v3718 = vadd.f32 %v3583, %v3717
        %v3719 = vpop.f32.mrb[0].mxu0
        %v3720 = vadd.f32 %v3583, %v3719
        %3721 = vdwg.mxu0
        %v3722 = vtanh.pop %v3676
        %v3723 = vtanh.pop %v3678
        %v3724 = vtanh.pop %v3682
        %v3725 = vtanh.pop %v3684
        %v3726 = vtanh.pop %v3688
        %v3727 = vtanh.pop %v3690
        %v3728 = vtanh.pop %v3694
        %v3729 = vtanh.pop %v3696
        %v3730 = vxor.u32 %v3700, 2147483648
        %v3731 = vxor.u32 %v3702, 2147483648
        %v3732 = vxor.u32 %v3706, 2147483648
        %v3733 = vxor.u32 %v3708, 2147483648
        %v3734 = vxor.u32 %v3712, 2147483648
        %v3735 = vxor.u32 %v3714, 2147483648
        %v3736 = vxor.u32 %v3718, 2147483648
        %v3737 = vxor.u32 %v3720, 2147483648
        %v3738 = vmul.f32 %v3730, 1.442695
        %v3739 = vpow.pop %v3738
        %v3740 = vmul.f32 %v3731, 1.442695
        %v3741 = vpow.pop %v3740
        %v3742 = vmul.f32 %v3732, 1.442695
        %v3743 = vpow.pop %v3742
        %v3744 = vmul.f32 %v3733, 1.442695
        %v3745 = vpow.pop %v3744
        %v3746 = vmul.f32 %v3734, 1.442695
        %v3747 = vpow.pop %v3746
        %v3748 = vmul.f32 %v3735, 1.442695
        %v3749 = vpow.pop %v3748
        %v3750 = vmul.f32 %v3736, 1.442695
        %v3751 = vpow.pop %v3750
        %v3752 = vmul.f32 %v3737, 1.442695
        %v3753 = vpow.pop %v3752
        %v3754 = vadd.f32 %v3739, 1.0
        %v3755 = vadd.f32 %v3741, 1.0
        %v3756 = vadd.f32 %v3743, 1.0
        %v3757 = vadd.f32 %v3745, 1.0
        %v3758 = vadd.f32 %v3747, 1.0
        %v3759 = vadd.f32 %v3749, 1.0
        %v3760 = vadd.f32 %v3751, 1.0
        %v3761 = vadd.f32 %v3753, 1.0
        %v3762 = vrcp.pop %v3754
        %v3763 = vmul.f32 1.0, %v3762
        %v3764 = vrcp.pop %v3755
        %v3765 = vmul.f32 1.0, %v3764
        %v3766 = vrcp.pop %v3756
        %v3767 = vmul.f32 1.0, %v3766
        %v3768 = vrcp.pop %v3757
        %v3769 = vmul.f32 1.0, %v3768
        %v3770 = vrcp.pop %v3758
        %v3771 = vmul.f32 1.0, %v3770
        %v3772 = vrcp.pop %v3759
        %v3773 = vmul.f32 1.0, %v3772
        %v3774 = vrcp.pop %v3760
        %v3775 = vmul.f32 1.0, %v3774
        %v3776 = vrcp.pop %v3761
        %v3777 = vmul.f32 1.0, %v3776
        %v3778 = vmul.f32 %v3722, %v3763
        %v3779 = vmul.f32 %v3723, %v3765
        %v3780 = vmul.f32 %v3724, %v3767
        %v3781 = vmul.f32 %v3725, %v3769
        %v3782 = vmul.f32 %v3726, %v3771
        %v3783 = vmul.f32 %v3727, %v3773
        %v3784 = vmul.f32 %v3728, %v3775
        %v3785 = vmul.f32 %v3729, %v3777
        %s3786 = scalar_lea.vmem %s5, 192
        %v3787 = vld [vmem:[%s3786] sm:$0xff]
        %v3788 = vld [vmem:[%s3786 + $0x8] sm:$0xff]
        %v3789 = vld [vmem:[%s3786 + $0x10] sm:$0xff]
        %v3790 = vld [vmem:[%s3786 + $0x18] sm:$0xff]
        %v3791 = vld [vmem:[%s3786 + $0x20] sm:$0xff]
        %v3792 = vld [vmem:[%s3786 + $0x28] sm:$0xff]
        %v3793 = vld [vmem:[%s3786 + $0x30] sm:$0xff]
        %v3794 = vld [vmem:[%s3786 + $0x38] sm:$0xff]
        %s3795 = scalar_lea.vmem %s6, 192
        %v3796 = vld [vmem:[%s3795] sm:$0xff]
        %v3797 = vld [vmem:[%s3795 + $0x8] sm:$0xff]
        %v3798 = vld [vmem:[%s3795 + $0x10] sm:$0xff]
        %v3799 = vld [vmem:[%s3795 + $0x18] sm:$0xff]
        %v3800 = vld [vmem:[%s3795 + $0x20] sm:$0xff]
        %v3801 = vld [vmem:[%s3795 + $0x28] sm:$0xff]
        %v3802 = vld [vmem:[%s3795 + $0x30] sm:$0xff]
        %v3803 = vld [vmem:[%s3795 + $0x38] sm:$0xff]
        %3805 = vset.pattern.permute.xlu0 0
        %3806 = vperm.xlu0 %3805, %v3796
        %v3807 = vpop.permute.xlu0 %3806
        %3809 = vset.pattern.permute.xlu0 0
        %3810 = vperm.xlu0 %3809, %v3797
        %v3811 = vpop.permute.xlu0 %3810
        %3813 = vset.pattern.permute.xlu0 0
        %3814 = vperm.xlu0 %3813, %v3798
        %v3815 = vpop.permute.xlu0 %3814
        %3817 = vset.pattern.permute.xlu0 0
        %3818 = vperm.xlu0 %3817, %v3799
        %v3819 = vpop.permute.xlu0 %3818
        %3821 = vset.pattern.permute.xlu0 0
        %3822 = vperm.xlu0 %3821, %v3800
        %v3823 = vpop.permute.xlu0 %3822
        %3826 = vset.pattern.permute.xlu0 0
        %3827 = vperm.xlu0 %3826, %v3801
        %v3828 = vpop.permute.xlu0 %3827
        %3831 = vset.pattern.permute.xlu0 0
        %3832 = vperm.xlu0 %3831, %v3802
        %v3833 = vpop.permute.xlu0 %3832
        %3836 = vset.pattern.permute.xlu0 0
        %3837 = vperm.xlu0 %3836, %v3803
        %v3838 = vpop.permute.xlu0 %3837
        %v3841 = vsel %vm921, %v3787, 0
        %v3844 = vsel %vm921, %v3788, 0
        %v3847 = vsel %vm921, %v3789, 0
        %v3850 = vsel %vm921, %v3790, 0
        %v3853 = vsel %vm921, %v3791, 0
        %v3856 = vsel %vm921, %v3792, 0
        %v3859 = vsel %vm921, %v3793, 0
        %v3862 = vsel %vm921, %v3794, 0
        %3864 = vmatprep.subr.mxu0 %v3779
        %3865 = vmatpush1.msra.mxu0 %v3778
        %3866 = vmatprep.subr.mxu0 %v3781
        %3867 = vmatpush1.msra.mxu0 %v3780
        %3868 = vmatprep.subr.mxu0 %v3783
        %3869 = vmatpush1.msra.mxu0 %v3782
        %3870 = vmatprep.subr.mxu0 %v3785
        %3871 = vmatpush1.msra.mxu0 %v3784
        %3872 = vmatprep.subr.mxu0 0.0
        %3873 = vmatpush1.msra.mxu0 0.0
        %3874 = vmatprep.subr.mxu0 0.0
        %3875 = vmatpush1.msra.mxu0 0.0
        %3876 = vmatprep.subr.mxu0 0.0
        %3877 = vmatpush1.msra.mxu0 0.0
        %3878 = vmatprep.subr.mxu0 0.0
        %3879 = vmatpush1.msra.mxu0 0.0
        %3880 = vmatprep.subr.mxu0 0.0
        %3881 = vmatpush1.msra.mxu0 0.0
        %3882 = vmatprep.subr.mxu0 0.0
        %3883 = vmatpush1.msra.mxu0 0.0
        %3884 = vmatprep.subr.mxu0 0.0
        %3885 = vmatpush1.msra.mxu0 0.0
        %3886 = vmatprep.subr.mxu0 0.0
        %3887 = vmatpush1.msra.mxu0 0.0
        %3888 = vmatprep.subr.mxu0 0.0
        %3889 = vmatpush1.msra.mxu0 0.0
        %3890 = vmatprep.subr.mxu0 0.0
        %3891 = vmatpush1.msra.mxu0 0.0
        %3892 = vmatprep.subr.mxu0 0.0
        %3893 = vmatpush1.msra.mxu0 0.0
        %3894 = vmatprep.subr.mxu0 0.0
        %3895 = vmatpush1.msra.mxu0 0.0
        %3896 = vmatprep.subr.mxu0 0.0
        %3897 = vmatpush1.msra.mxu0 0.0
        %3898 = vmatprep.subr.mxu0 0.0
        %3899 = vmatpush1.msra.mxu0 0.0
        %3900 = vmatprep.subr.mxu0 0.0
        %3901 = vmatpush1.msra.mxu0 0.0
        %3902 = vmatprep.subr.mxu0 0.0
        %3903 = vmatpush1.msra.mxu0 0.0
        %3904 = vmatprep.subr.mxu0 0.0
        %3905 = vmatpush1.msra.mxu0 0.0
        %3906 = vmatprep.subr.mxu0 0.0
        %3907 = vmatpush1.msra.mxu0 0.0
        %3908 = vmatprep.subr.mxu0 0.0
        %3909 = vmatpush1.msra.mxu0 0.0
        %3910 = vmatprep.subr.mxu0 0.0
        %3911 = vmatpush1.msra.mxu0 0.0
        %3912 = vmatprep.subr.mxu0 0.0
        %3913 = vmatpush1.msra.mxu0 0.0
        %3914 = vmatprep.subr.mxu0 0.0
        %3915 = vmatpush1.msra.mxu0 0.0
        %3916 = vmatprep.subr.mxu0 0.0
        %3917 = vmatpush1.msra.mxu0 0.0
        %3918 = vmatprep.subr.mxu0 0.0
        %3919 = vmatpush1.msra.mxu0 0.0
        %3920 = vmatprep.subr.mxu0 0.0
        %3921 = vmatpush1.msra.mxu0 0.0
        %3922 = vmatprep.subr.mxu0 0.0
        %3923 = vmatpush1.msra.mxu0 0.0
        %3924 = vmatprep.subr.mxu0 0.0
        %3925 = vmatpush1.msra.mxu0 0.0
        %3926 = vmatprep.subr.mxu0 0.0
        %3927 = vmatpush1.msra.mxu0 0.0
        %3928 = vmatprep.mubr.f32.mxu0 0.0
        %3929 = vmatmul.mubr.f32.gmra.mrb[0].mxu0 %v3841
        %v3930 = vpop.f32.mrb[0].mxu0
        %v3931 = vpop.f32.mrb[0].mxu0
        %3932 = vmatprep.mubr.f32.mxu0 0.0
        %3933 = vmatmul.mubr.f32.gmra.mrb[0].mxu0 %v3844
        %v3934 = vpop.f32.mrb[0].mxu0
        %v3935 = vpop.f32.mrb[0].mxu0
        %3936 = vmatprep.mubr.f32.mxu0 0.0
        %3937 = vmatmul.mubr.f32.gmra.mrb[0].mxu0 %v3847
        %v3938 = vpop.f32.mrb[0].mxu0
        %v3939 = vpop.f32.mrb[0].mxu0
        %3940 = vmatprep.mubr.f32.mxu0 0.0
        %3941 = vmatmul.mubr.f32.gmra.mrb[0].mxu0 %v3850
        %v3942 = vpop.f32.mrb[0].mxu0
        %v3943 = vpop.f32.mrb[0].mxu0
        %3944 = vmatprep.mubr.f32.mxu0 0.0
        %3945 = vmatmul.mubr.f32.gmra.mrb[0].mxu0 %v3853
        %v3946 = vpop.f32.mrb[0].mxu0
        %v3947 = vadd.f32 %v3823, %v3946
        %v3948 = vpop.f32.mrb[0].mxu0
        %v3949 = vadd.f32 %v3823, %v3948
        %3950 = vmatprep.mubr.f32.mxu0 0.0
        %3951 = vmatmul.mubr.f32.gmra.mrb[0].mxu0 %v3856
        %v3952 = vpop.f32.mrb[0].mxu0
        %v3953 = vadd.f32 %v3828, %v3952
        %v3954 = vpop.f32.mrb[0].mxu0
        %v3955 = vadd.f32 %v3828, %v3954
        %3956 = vmatprep.mubr.f32.mxu0 0.0
        %3957 = vmatmul.mubr.f32.gmra.mrb[0].mxu0 %v3859
        %v3958 = vpop.f32.mrb[0].mxu0
        %v3959 = vadd.f32 %v3833, %v3958
        %v3960 = vpop.f32.mrb[0].mxu0
        %v3961 = vadd.f32 %v3833, %v3960
        %3962 = vmatprep.mubr.f32.mxu0 0.0
        %3963 = vmatmul.mubr.f32.gmra.mrb[0].mxu0 %v3862
        %v3964 = vpop.f32.mrb[0].mxu0
        %v3965 = vadd.f32 %v3838, %v3964
        %v3966 = vpop.f32.mrb[0].mxu0
        %v3967 = vadd.f32 %v3838, %v3966
        %3968 = vdwg.mxu0
        %v3969 = vadd.f32 %v3138, %v3947
        %v3970 = vadd.f32 %v3140, %v3949
        %v3971 = vadd.f32 %v3144, %v3953
        %v3972 = vadd.f32 %v3146, %v3955
        %v3973 = vadd.f32 %v3150, %v3959
        %v3974 = vadd.f32 %v3152, %v3961
        %v3975 = vadd.f32 %v3156, %v3965
        %v3976 = vadd.f32 %v3158, %v3967
        %s3977 = scalar_lea.vmem %s7, 8
        %v3978 = vld [vmem:[%s3977] sm:$0xff]
        %s3979 = scalar_lea.vmem %s8, 8
        %v3980 = vld [vmem:[%s3979] sm:$0xff]
        %3982 = vset.pattern.permute.xlu0 0
        %3983 = vperm.xlu0 %3982, %v3980
        %v3984 = vpop.permute.xlu0 %3983
        %v3987 = vsel %vm921, %v3978, 0
        %3989 = vmatprep.subr.mxu0 %v3970
        %3990 = vmatpush1.msra.mxu0 %v3969
        %3991 = vmatprep.subr.mxu0 %v3972
        %3992 = vmatpush1.msra.mxu0 %v3971
        %3993 = vmatprep.subr.mxu0 %v3974
        %3994 = vmatpush1.msra.mxu0 %v3973
        %3995 = vmatprep.subr.mxu0 %v3976
        %3996 = vmatpush1.msra.mxu0 %v3975
        %3997 = vmatprep.subr.mxu0 0.0
        %3998 = vmatpush1.msra.mxu0 0.0
        %3999 = vmatprep.subr.mxu0 0.0
        %4000 = vmatpush1.msra.mxu0 0.0
        %4001 = vmatprep.subr.mxu0 0.0
        %4002 = vmatpush1.msra.mxu0 0.0
        %4003 = vmatprep.subr.mxu0 0.0
        %4004 = vmatpush1.msra.mxu0 0.0
        %4005 = vmatprep.subr.mxu0 0.0
        %4006 = vmatpush1.msra.mxu0 0.0
        %4007 = vmatprep.subr.mxu0 0.0
        %4008 = vmatpush1.msra.mxu0 0.0
        %4009 = vmatprep.subr.mxu0 0.0
        %4010 = vmatpush1.msra.mxu0 0.0
        %4011 = vmatprep.subr.mxu0 0.0
        %4012 = vmatpush1.msra.mxu0 0.0
        %4013 = vmatprep.subr.mxu0 0.0
        %4014 = vmatpush1.msra.mxu0 0.0
        %4015 = vmatprep.subr.mxu0 0.0
        %4016 = vmatpush1.msra.mxu0 0.0
        %4017 = vmatprep.subr.mxu0 0.0
        %4018 = vmatpush1.msra.mxu0 0.0
        %4019 = vmatprep.subr.mxu0 0.0
        %4020 = vmatpush1.msra.mxu0 0.0
        %4021 = vmatprep.subr.mxu0 0.0
        %4022 = vmatpush1.msra.mxu0 0.0
        %4023 = vmatprep.subr.mxu0 0.0
        %4024 = vmatpush1.msra.mxu0 0.0
        %4025 = vmatprep.subr.mxu0 0.0
        %4026 = vmatpush1.msra.mxu0 0.0
        %4027 = vmatprep.subr.mxu0 0.0
        %4028 = vmatpush1.msra.mxu0 0.0
        %4029 = vmatprep.subr.mxu0 0.0
        %4030 = vmatpush1.msra.mxu0 0.0
        %4031 = vmatprep.subr.mxu0 0.0
        %4032 = vmatpush1.msra.mxu0 0.0
        %4033 = vmatprep.subr.mxu0 0.0
        %4034 = vmatpush1.msra.mxu0 0.0
        %4035 = vmatprep.subr.mxu0 0.0
        %4036 = vmatpush1.msra.mxu0 0.0
        %4037 = vmatprep.subr.mxu0 0.0
        %4038 = vmatpush1.msra.mxu0 0.0
        %4039 = vmatprep.subr.mxu0 0.0
        %4040 = vmatpush1.msra.mxu0 0.0
        %4041 = vmatprep.subr.mxu0 0.0
        %4042 = vmatpush1.msra.mxu0 0.0
        %4043 = vmatprep.subr.mxu0 0.0
        %4044 = vmatpush1.msra.mxu0 0.0
        %4045 = vmatprep.subr.mxu0 0.0
        %4046 = vmatpush1.msra.mxu0 0.0
        %4047 = vmatprep.subr.mxu0 0.0
        %4048 = vmatpush1.msra.mxu0 0.0
        %4049 = vmatprep.subr.mxu0 0.0
        %4050 = vmatpush1.msra.mxu0 0.0
        %4051 = vmatprep.subr.mxu0 0.0
        %4052 = vmatpush1.msra.mxu0 0.0
        %4053 = vmatprep.mubr.f32.mxu0 0.0
        %4054 = vmatmul.mubr.f32.gmra.mrb[0].mxu0 %v3987
        %v4055 = vpop.f32.mrb[0].mxu0
        %v4056 = vadd.f32 %v3984, %v4055
        %v4057 = vpop.f32.mrb[0].mxu0
        %v4058 = vadd.f32 %v3984, %v4057
        %4059 = vdwg.mxu0
        %v4060 = vadd.f32 %v368, %v4056
        %v4061 = vadd.f32 %v369, %v4058
        %4062 = vst [vmem:[%s340] sm:$0xff] %v4060
        %4063 = vst [vmem:[%s340 + $0x8] sm:$0xff] %v4061
        %4064 = vst [vmem:[%s340 + $0x10] sm:$0xff] %v2214
        %4065 = vst [vmem:[%s340 + $0x18] sm:$0xff] %v2215
        %s4066 = sand.u32 %s230, 1
        %s4067 = scalar_lea.sflag [#allocation5], %s4066
        %s4068 = sand.u32 %s230, 1
        %s4069 = smul.addr %s4068, 32
        %s4070 = scalar_lea.vmem [#allocation4], %s4069
        // Predicated region
        $region57: #{tpu_custom_call.1} parent=55 // pred_check
          %p4071 = pneg %p240
        $region58: #{tpu_custom_call.1} parent=55 // pred_check_branch
          %4073 = sbr.rel (%p4071) target = $region60
        $region59: #{tpu_custom_call.1} parent=55 // pred_region
          %s4075 = ssub.s32 512, 512
          %4076 = vsyncadd %s4067, %s4075
          %s4077 = smul.addr %s23, 4
          %s4078 = smul.addr %s4077, 128
          %s4079 = scalar_lea.hbm %s9, %s4078
          %s4080 = sshll.u32 %s4070, 4
          %s4081 = int_to_ptr.vmem [resolvable:$true] %s4080
          %4086 = dma.vmem_to_hbm [thread:$0]  %s4081, 512, %s4079, %s4067, 256, 256, 16
        $region60: #{tpu_custom_call.1} parent=55 // pred_fallthru
          _
      $region56: #{tpu_custom_call.1} parent=5 // pred_fallthru
        _
      %p4087 = scmp.le.s32.totalorder 2, %s18
      // Predicated region
      $region61: #{tpu_custom_call.1} parent=5 // pred_check
        %p4088 = pneg %p4087
      $region62: #{tpu_custom_call.1} parent=5 // pred_check_branch
        %4090 = sbr.rel (%p4088) target = $region64
      $region63: #{tpu_custom_call.1} parent=5 // pred_region
        %s4091 = ssub.s32 %s18, 2
        // Predicated region
        $region65: #{tpu_custom_call.1} parent=63 // pred_check
          %p4092 = pneg %p246
        $region66: #{tpu_custom_call.1} parent=63 // pred_check_branch
          %4094 = sbr.rel (%p4092) target = $region68
        $region67: #{tpu_custom_call.1} parent=63 // pred_region
          %s4095 = sand.u32 %s231, 1
          %s4096 = scalar_lea.sflag [#allocation5], %s4095
          %s4097 = sand.u32 %s231, 1
          %s4098 = smul.addr %s4097, 32
          %s4099 = scalar_lea.vmem [#allocation4], %s4098
          %4100 = dma.done %s4096, 512
        $region68: #{tpu_custom_call.1} parent=63 // pred_fallthru
          _
      $region64: #{tpu_custom_call.1} parent=5 // pred_fallthru
        _
    $region6: #{tpu_custom_call.1} parent=1 // loop_footer
      %s22 = sadd.s32 1, %s18
    $region7: #{tpu_custom_call.1} parent=1 // loop_footer_branch
      %17 = sbr.rel target = $region3
    $region8: #{tpu_custom_call.1} parent=1 // loop_exit
      _
    %4101 = vsyncpa [#allocation5], 1
    %s4102 = scalar_lea.sflag [#allocation5], 1
    %4103 = vsyncpa %s4102, 1

</llo_original>
